<compile_context>
chip_gen: v7x
topology: tpu7x:2x2x1
jax: 0.10.0
libtpu: 0.0.40
codegen_flags: <defaults>
</compile_context>

<pallas_src>
import math

import jax
import jax.numpy as jnp
from jax import lax
from jax.experimental import pallas as pl
from jax.experimental.pallas import tpu as pltpu


# ----------------------------------------------------------------------------
# Tiled dense kernel: (M, K) @ (K, N) + bias, bf16 MXU operands, f32 accumulate,
# tiled over M and N (both "parallel").
# ----------------------------------------------------------------------------
def _dense_kernel(x_ref, w_ref, b_ref, o_ref):
    x = x_ref[...].astype(jnp.bfloat16)                  # activations -> bf16 for MXU
    acc = jnp.dot(x, w_ref[...], preferred_element_type=jnp.float32) + b_ref[...]
    o_ref[...] = acc.astype(o_ref.dtype)


def dense_tiled(x2d, w_bf16, b_row, out_dtype=jnp.float32):
    """x2d: [M, K] f32; w_bf16: [K, N] bf16 (pre-transposed/cast); b_row: [1, N] f32."""
    M, K = x2d.shape
    N = w_bf16.shape[1]
    tm = min(M, 512)
    tn = min(N, 512)
    grid = (pl.cdiv(M, tm), pl.cdiv(N, tn))
    return pl.pallas_call(
        _dense_kernel,
        out_shape=jax.ShapeDtypeStruct((M, N), out_dtype),
        grid=grid,
        in_specs=[pl.BlockSpec((tm, K), lambda i, j: (i, 0)),
                  pl.BlockSpec((K, tn), lambda i, j: (0, j)),
                  pl.BlockSpec((1, tn), lambda i, j: (0, j))],
        out_specs=pl.BlockSpec((tm, tn), lambda i, j: (i, j)),
        compiler_params=pltpu.CompilerParams(
            dimension_semantics=("parallel", "parallel")),
    )(x2d, w_bf16, b_row)


# ----------------------------------------------------------------------------
# Fused bidirectional LSTM recurrence.  The input projection (x @ W_ih + bias)
# for BOTH directions is precomputed by dense_tiled (stored bf16); only the tiny
# h @ W_hh matmuls stay in the loop.
#
#   gx layout : (S, B, 8H) bf16, lanes [0:4H] = fwd gates (i,f,g,o), [4H:8H] = bwd
#   whh_fT/bT : (H, 4H) bf16 per-direction recurrence weights
#   output    : (S, B, 2H) f32, lanes [0:H] = fwd hidden, [H:2H] = bwd hidden
# ----------------------------------------------------------------------------
def _bilstm_rec_kernel(gx_ref, whhf_ref, whhb_ref, out_ref, hf, hb, cf, cb):
    S = gx_ref.shape[0]
    H = whhf_ref.shape[0]
    G4 = 4 * H

    hf[...] = jnp.zeros_like(hf)
    hb[...] = jnp.zeros_like(hb)
    cf[...] = jnp.zeros_like(cf)
    cb[...] = jnp.zeros_like(cb)

    def cell(gates, c_prev):
        # nonlinearities evaluated once over the whole 4H-wide gate vector
        sig = jax.nn.sigmoid(gates)
        tnh = jnp.tanh(gates)
        # TODO(synk): pad each gate slot to 128 lanes in production (H=32 slices).
        i = sig[:, 0:H]
        f = sig[:, H:2 * H]
        g = tnh[:, 2 * H:3 * H]
        o = sig[:, 3 * H:4 * H]
        c_new = f * c_prev + i * g
        return o * jnp.tanh(c_new), c_new

    def step(t, carry):
        # TODO(synk): pltpu.matmul_push_rhs once + matmul_acc_lhs/pop per step to
        # keep W_hh stationary on the MXU across the serial time loop.
        rec_f = jnp.dot(hf[...].astype(jnp.bfloat16), whhf_ref[...],
                        preferred_element_type=jnp.float32)          # (tb, 4H)
        rec_b = jnp.dot(hb[...].astype(jnp.bfloat16), whhb_ref[...],
                        preferred_element_type=jnp.float32)          # (tb, 4H)

        gates_f = gx_ref[t, :, 0:G4].astype(jnp.float32) + rec_f
        gates_b = gx_ref[S - 1 - t, :, G4:2 * G4].astype(jnp.float32) + rec_b

        h_f, c_f = cell(gates_f, cf[...])
        h_b, c_b = cell(gates_b, cb[...])

        hf[...] = h_f
        cf[...] = c_f
        hb[...] = h_b
        cb[...] = c_b

        # write directly in PyTorch's concatenated [fwd | bwd] per-timestep layout
        out_ref[t, :, 0:H] = h_f
        out_ref[S - 1 - t, :, H:2 * H] = h_b
        return carry

    lax.fori_loop(0, S, step, 0, unroll=S <= 16)


def bilstm_recurrence(gx, whh_fT, whh_bT):
    """gx: [S, B, 8H] bf16 (B multiple of 8); whh_*T: [H, 4H] bf16 -> [S, B, 2H] f32."""
    S, B, G = gx.shape
    H = G // 8
    tb = 8                                              # full sublane tile per block
    # TODO(synk): on v7x use two batch blocks (tb = B//2 rounded to 8) when B >= 16
    # so both TensorCores get work.
    grid = (pl.cdiv(B, tb),)
    return pl.pallas_call(
        _bilstm_rec_kernel,
        out_shape=jax.ShapeDtypeStruct((S, B, 2 * H), jnp.float32),
        grid=grid,
        in_specs=[pl.BlockSpec((S, tb, 8 * H), lambda b: (0, b, 0)),
                  pl.BlockSpec((H, 4 * H), lambda b: (0, 0)),
                  pl.BlockSpec((H, 4 * H), lambda b: (0, 0))],
        out_specs=pl.BlockSpec((S, tb, 2 * H), lambda b: (0, b, 0)),
        scratch_shapes=[pltpu.VMEM((tb, H), jnp.float32),    # h fwd
                        pltpu.VMEM((tb, H), jnp.float32),    # h bwd
                        pltpu.VMEM((tb, H), jnp.float32),    # c fwd
                        pltpu.VMEM((tb, H), jnp.float32)],   # c bwd
        compiler_params=pltpu.CompilerParams(dimension_semantics=("parallel",)),
    )(gx, whh_fT, whh_bT)


# ----------------------------------------------------------------------------
# GlobalPointer core kernel: one batch element per grid step, ALL heads inside.
# RoPE + q-scale via two XLU rolls against pre-folded cos / even-sin / odd-sin
# tables (no iota/select); padding mask folded into q/k rows; additive (pad+tril)
# mask built from a precomputed resident base with one multiply+add.
# ----------------------------------------------------------------------------
def _gp_kernel(proj_ref, coss_ref, sine_ref, sino_ref, base_ref,
               pm_r_ref, pm_c_ref, o_ref):
    S = proj_ref.shape[1]
    N = proj_ref.shape[2]
    heads = o_ref.shape[1]
    D = N // (2 * heads)
    C = 1e12 * (D ** -0.5)                  # mask magnitude, pre-divided by sqrt(D)

    x = proj_ref[0]                                              # (S, N) f32

    # RoPE pairwise rotation: parity and pair sign are pre-folded into the two
    # sin tables (even lanes take -sin*x[j+1], odd lanes take +sin*x[j-1]);
    # the 1/sqrt(D) q-lane scale is folded into all three tables.
    x_nxt = pltpu.roll(x, N - 1, axis=1)                         # x[j+1]
    x_prv = pltpu.roll(x, 1, axis=1)                             # x[j-1]
    xr = x * coss_ref[...] + x_nxt * sine_ref[...] + x_prv * sino_ref[...]

    # zero padded rows of both q and k (query rows AND key columns of the logits)
    xr = xr * pm_r_ref[0]

    # additive mask: base = -(tril + 1) * C precomputed; per-batch pad term here
    mask2d = pm_r_ref[0] * pm_c_ref[0]                           # (S, S)
    add_mask = mask2d * C + base_ref[...]                        # (S, S)

    outs = []
    for h in range(heads):                                       # static unrolled loop
        q = xr[:, h * 2 * D:h * 2 * D + D].astype(jnp.bfloat16)
        k = xr[:, h * 2 * D + D:(h + 1) * 2 * D].astype(jnp.bfloat16)
        logits = lax.dot_general(q, k, (((1,), (1,)), ((), ())),
                                 preferred_element_type=jnp.float32)   # (S, S)
        outs.append(logits + add_mask)
    # single stacked store for all heads
    # TODO(synk): for production S pad S to a 128 multiple for lane-dense stores.
    o_ref[0] = jnp.stack(outs, axis=0)


def global_pointer(proj_bsn, token_ids, heads, inner_dim):
    """proj_bsn: [B, S, heads*2D] f32; token_ids: [B, S]; returns [B, heads, S, S]."""
    B, S, N = proj_bsn.shape
    D = inner_dim
    assert D % 2 == 0, "RoPE pair rotation requires an even inner_dim"
    assert N == heads * 2 * D

    # RoPE tables (repeat-interleaved, matching torch repeat_interleave(2, dim=-1)),
    # tiled across every head's q/k lane block; parity, pair sign and the q-lane
    # 1/sqrt(D) scale are all folded in here (hoisted out of the kernel).
    pos = jnp.arange(S, dtype=jnp.float32)[:, None]
    idx = jnp.arange(D // 2, dtype=jnp.float32)
    theta = jnp.power(10000.0, -2.0 * idx / D)
    ang = pos * theta                                            # (S, D/2)
    cos_d = jnp.repeat(jnp.cos(ang), 2, axis=-1)                 # (S, D)
    sin_d = jnp.repeat(jnp.sin(ang), 2, axis=-1)                 # (S, D)
    even = (jnp.arange(D) % 2) == 0                              # (D,)
    sin_even = jnp.where(even, -sin_d, 0.0)                      # pairs with x[j+1]
    sin_odd = jnp.where(even, 0.0, sin_d)                        # pairs with x[j-1]
    scale = jnp.tile(
        jnp.concatenate([jnp.full((D,), D ** -0.5, jnp.float32),
                         jnp.ones((D,), jnp.float32)]), heads)   # (N,)
    coss = jnp.tile(cos_d, (1, 2 * heads)) * scale               # (S, N)
    sine = jnp.tile(sin_even, (1, 2 * heads)) * scale            # (S, N)
    sino = jnp.tile(sin_odd, (1, 2 * heads)) * scale             # (S, N)

    # precomputed batch-invariant tril/pad mask base: -(tril + 1) * C
    C = 1e12 * (D ** -0.5)
    row = jnp.arange(S)[:, None]
    col = jnp.arange(S)[None, :]
    base = (-(row > col).astype(jnp.float32) - 1.0) * C          # (S, S)

    pm = (token_ids > 0).astype(jnp.float32)                     # (B, S)
    pm_r = pm[:, :, None]                                        # (B, S, 1)
    pm_c = pm[:, None, :]                                        # (B, 1, S)

    return pl.pallas_call(
        _gp_kernel,
        out_shape=jax.ShapeDtypeStruct((B, heads, S, S), jnp.float32),
        grid=(B,),
        in_specs=[
            pl.BlockSpec((1, S, N), lambda b: (b, 0, 0)),
            pl.BlockSpec((S, N), lambda b: (0, 0)),
            pl.BlockSpec((S, N), lambda b: (0, 0)),
            pl.BlockSpec((S, N), lambda b: (0, 0)),
            pl.BlockSpec((S, S), lambda b: (0, 0)),
            pl.BlockSpec((1, S, 1), lambda b: (b, 0, 0)),
            pl.BlockSpec((1, 1, S), lambda b: (b, 0, 0)),
        ],
        out_specs=pl.BlockSpec((1, heads, S, S), lambda b: (b, 0, 0, 0)),
        compiler_params=pltpu.CompilerParams(dimension_semantics=("parallel",)),
    )(proj_bsn, coss, sine, sino, base, pm_r, pm_c)


# ----------------------------------------------------------------------------
# Full forward pass
# ----------------------------------------------------------------------------
def bilstm_globalpointer_forward(token_ids, prep, cfg):
    B, S = token_ids.shape
    H = cfg["hidden_size"]
    heads = cfg["num_gp_class"]
    D = cfg["inner_dim"]

    # pad batch to a full sublane tile; pad rows use token 0 and are independent
    # of the real rows (LSTM is batch-independent), sliced away before the GP stage
    B_pad = ((B + 7) // 8) * 8
    tok_p = jnp.zeros((B_pad, S), token_ids.dtype).at[:B].set(token_ids)

    # embedding lookup, gathered directly into time-major layout
    # TODO(synk): embedding gather kept in plain JAX; a DMA gather kernel is overkill.
    x = prep["embedding"][tok_p.T]                               # (S, B_pad, E)

    for lyr in prep["lstm_layers"]:
        Din = x.shape[-1]
        # hoisted input projection for both directions (bias folded in), bf16 output
        gx = dense_tiled(x.reshape(S * B_pad, Din), lyr["wih_cat"], lyr["bias_cat"],
                         out_dtype=jnp.bfloat16)
        x = bilstm_recurrence(gx.reshape(S, B_pad, 8 * H),
                              lyr["whh_fT"], lyr["whh_bT"])      # (S, B_pad, 2H) f32

    # single remaining relayout (narrow 2H encoder) back to batch-major, dropping
    # the pad rows before the GlobalPointer projection
    # TODO(synk): fold this transpose into the last recurrence's out_specs.
    enc = jnp.transpose(x, (1, 0, 2))[:B].reshape(B * S, 2 * H)
    proj = dense_tiled(enc, prep["gp_wT"], prep["gp_b"]).reshape(B, S, heads * 2 * D)

    return global_pointer(proj, token_ids, heads, D)


# ----------------------------------------------------------------------------
# Parameter init (torch layout) + one-time packing/transposing/casting
# ----------------------------------------------------------------------------
def init_params(key, cfg):
    E = cfg["word_embedding_dim"]
    H = cfg["hidden_size"]
    V = cfg["vocab_size"]
    heads = cfg["num_gp_class"]
    D = cfg["inner_dim"]

    keys = jax.random.split(key, 4 + 8 * cfg["num_bilstm_layers"])
    ki = iter(keys)

    params = {"embedding": 0.1 * jax.random.normal(next(ki), (V, E), jnp.float32)}

    lstm_layers = []
    in_dim = E
    k_lstm = 1.0 / math.sqrt(H)
    for _ in range(cfg["num_bilstm_layers"]):
        def u(k, shape):
            return jax.random.uniform(k, shape, jnp.float32, -k_lstm, k_lstm)
        fwd = (u(next(ki), (4 * H, in_dim)), u(next(ki), (4 * H, H)),
               u(next(ki), (4 * H,)), u(next(ki), (4 * H,)))
        bwd = (u(next(ki), (4 * H, in_dim)), u(next(ki), (4 * H, H)),
               u(next(ki), (4 * H,)), u(next(ki), (4 * H,)))
        lstm_layers.append({"fwd": fwd, "bwd": bwd})
        in_dim = 2 * H
    params["lstm_layers"] = lstm_layers

    k_gp = 1.0 / math.sqrt(2 * H)
    params["gp_w"] = jax.random.uniform(next(ki), (heads * D * 2, 2 * H),
                                        jnp.float32, -k_gp, k_gp)
    params["gp_b"] = jax.random.uniform(next(ki), (heads * D * 2,),
                                        jnp.float32, -k_gp, k_gp)
    return params


def prepare_params(params, cfg):
    """One-time weight packing: transpose, fuse directions, bf16 cast."""
    H = cfg["hidden_size"]
    prep = {"embedding": params["embedding"].astype(jnp.float32)}

    layers = []
    for lyr in params["lstm_layers"]:
        wih_f, whh_f, bih_f, bhh_f = lyr["fwd"]
        wih_b, whh_b, bih_b, bhh_b = lyr["bwd"]
        # input-projection weight for both directions: (Din, 8H), cols [fwd(i,f,g,o)|bwd(i,f,g,o)]
        wih_cat = jnp.concatenate([wih_f.T, wih_b.T], axis=1).astype(jnp.bfloat16)
        bias_cat = jnp.concatenate([bih_f + bhh_f, bih_b + bhh_b]
                                   ).reshape(1, 8 * H).astype(jnp.float32)
        # per-direction recurrence weights (no block-diagonal zero half)
        layers.append(dict(wih_cat=wih_cat, bias_cat=bias_cat,
                           whh_fT=whh_f.T.astype(jnp.bfloat16),
                           whh_bT=whh_b.T.astype(jnp.bfloat16)))
    prep["lstm_layers"] = layers

    prep["gp_wT"] = params["gp_w"].T.astype(jnp.bfloat16)        # (2H, heads*2D)
    prep["gp_b"] = params["gp_b"].reshape(1, -1).astype(jnp.float32)
    return prep


if __name__ == "__main__":
    cfg = dict(
        vocab_size=100,
        word_embedding_dim=32,
        hidden_size=32,
        num_bilstm_layers=2,
        num_gp_class=4,
        inner_dim=64,
        dropout_prob=0.1,        # inference: unused
    )
    B, S = 2, 8

    key = jax.random.PRNGKey(0)
    k_par, k_tok = jax.random.split(key)
    params = init_params(k_par, cfg)
    prep = prepare_params(params, cfg)

    token_ids = jax.random.randint(k_tok, (B, S), 1, cfg["vocab_size"], jnp.int32)
    token_ids = token_ids.at[1, 6:].set(0)   # some padding to exercise the mask

    fwd = jax.jit(lambda tok, p: bilstm_globalpointer_forward(tok, p, cfg))
    logits = jax.block_until_ready(fwd(token_ids, prep))

    assert logits.shape == (B, cfg["num_gp_class"], S, S), logits.shape
    assert bool(jnp.all(jnp.isfinite(logits)))
    print("KERNEL_OK")
</pallas_src>

<mosaic_0001>
module attributes {stable_mosaic.version = 11 : i64} {
  func.func @_dense_kernel(%arg0: i32, %arg1: i32, %arg2: memref<64x64xf32, #tpu.memory_space<vmem>>, %arg3: memref<64x256xbf16, #tpu.memory_space<vmem>>, %arg4: memref<1x256xf32, #tpu.memory_space<vmem>>, %arg5: memref<64x256xbf16, #tpu.memory_space<vmem>>) attributes {dimension_semantics = [#tpu.dimension_semantics<parallel>, #tpu.dimension_semantics<parallel>], iteration_bounds = array<i64: 1, 1>, scalar_prefetch = 0 : i64, scratch_operands = 0 : i64, tpu.core_type = #tpu.core_type<tc>, window_params = [{transform_indices = @transform_0, window_bounds = array<i64: 64, 64>}, {transform_indices = @transform_1, window_bounds = array<i64: 64, 256>}, {transform_indices = @transform_2, window_bounds = array<i64: 1, 256>}, {transform_indices = @transform_3, window_bounds = array<i64: 64, 256>}]} {
    %c0 = arith.constant 0 : index
    %c0_0 = arith.constant 0 : index
    %0 = vector.load %arg2[%c0, %c0_0] : memref<64x64xf32, #tpu.memory_space<vmem>>, vector<64x64xf32>
    %1 = arith.truncf %0 : vector<64x64xf32> to vector<64x64xbf16>
    %c0_1 = arith.constant 0 : index
    %c0_2 = arith.constant 0 : index
    %2 = vector.load %arg3[%c0_1, %c0_2] : memref<64x256xbf16, #tpu.memory_space<vmem>>, vector<64x256xbf16>
    %cst = arith.constant dense<0.000000e+00> : vector<64x256xf32>
    %3 = tpu.matmul %1, %2, %cst {dimension_numbers = #tpu.dot_dimension_numbers<[1], [0], [0], [1], [0, 0, 1, 1], [], []>} : vector<64x64xbf16>, vector<64x256xbf16>, vector<64x256xf32> -> vector<64x256xf32>
    %c0_3 = arith.constant 0 : index
    %c0_4 = arith.constant 0 : index
    %4 = vector.load %arg4[%c0_3, %c0_4] : memref<1x256xf32, #tpu.memory_space<vmem>>, vector<1x256xf32>
    %5 = vector.broadcast %4 : vector<1x256xf32> to vector<64x256xf32>
    %6 = arith.addf %3, %5 : vector<64x256xf32>
    %7 = arith.truncf %6 : vector<64x256xf32> to vector<64x256xbf16>
    %c0_5 = arith.constant 0 : index
    %c0_6 = arith.constant 0 : index
    %8 = vector.load %arg5[%c0_5, %c0_6] : memref<64x256xbf16, #tpu.memory_space<vmem>>, vector<64x256xbf16>
    tpu.vector_store %arg5[%c0_5, %c0_6], %7 {strides = array<i32>} : memref<64x256xbf16, #tpu.memory_space<vmem>>, vector<64x256xbf16>,
    return
  }
  func.func @transform_0(%arg0: i32, %arg1: i32) -> (i32, i32) {
    %c0_i32 = arith.constant 0 : i32
    %c0_i32_0 = arith.constant 0 : i32
    return %arg0, %c0_i32 : i32, i32
  }
  func.func @transform_1(%arg0: i32, %arg1: i32) -> (i32, i32) {
    %c0_i32 = arith.constant 0 : i32
    %c0_i32_0 = arith.constant 0 : i32
    return %c0_i32, %arg1 : i32, i32
  }
  func.func @transform_2(%arg0: i32, %arg1: i32) -> (i32, i32) {
    %c0_i32 = arith.constant 0 : i32
    %c0_i32_0 = arith.constant 0 : i32
    return %c0_i32, %arg1 : i32, i32
  }
  func.func @transform_3(%arg0: i32, %arg1: i32) -> (i32, i32) {
    %c0_i32 = arith.constant 0 : i32
    return %arg0, %arg1 : i32, i32
  }
}

module attributes {stable_mosaic.version = 11 : i64} {
  func.func @_bilstm_rec_kernel(%arg0: i32, %arg1: memref<8x8x256xbf16, #tpu.memory_space<vmem>>, %arg2: memref<32x128xbf16, #tpu.memory_space<vmem>>, %arg3: memref<32x128xbf16, #tpu.memory_space<vmem>>, %arg4: memref<8x8x64xf32, #tpu.memory_space<vmem>>, %arg5: memref<8x32xf32, #tpu.memory_space<vmem>>, %arg6: memref<8x32xf32, #tpu.memory_space<vmem>>, %arg7: memref<8x32xf32, #tpu.memory_space<vmem>>, %arg8: memref<8x32xf32, #tpu.memory_space<vmem>>) attributes {dimension_semantics = [#tpu.dimension_semantics<parallel>], iteration_bounds = array<i64: 1>, scalar_prefetch = 0 : i64, scratch_operands = 4 : i64, tpu.core_type = #tpu.core_type<tc>, window_params = [{transform_indices = @transform_0, window_bounds = array<i64: 8, 8, 256>}, {pipeline_mode = #tpu.pipeline_mode<synchronous>, transform_indices = @transform_1, window_bounds = array<i64: 32, 128>}, {pipeline_mode = #tpu.pipeline_mode<synchronous>, transform_indices = @transform_2, window_bounds = array<i64: 32, 128>}, {transform_indices = @transform_3, window_bounds = array<i64: 8, 8, 64>}]} {
    %cst = arith.constant 0.000000e+00 : f32
    %0 = vector.broadcast %cst : f32 to vector<8x32xf32>
    %c0 = arith.constant 0 : index
    %c0_0 = arith.constant 0 : index
    %1 = vector.load %arg5[%c0, %c0_0] : memref<8x32xf32, #tpu.memory_space<vmem>>, vector<8x32xf32>
    tpu.vector_store %arg5[%c0, %c0_0], %0 {strides = array<i32>} : memref<8x32xf32, #tpu.memory_space<vmem>>, vector<8x32xf32>,
    %cst_1 = arith.constant 0.000000e+00 : f32
    %2 = vector.broadcast %cst_1 : f32 to vector<8x32xf32>
    %c0_2 = arith.constant 0 : index
    %c0_3 = arith.constant 0 : index
    %3 = vector.load %arg6[%c0_2, %c0_3] : memref<8x32xf32, #tpu.memory_space<vmem>>, vector<8x32xf32>
    tpu.vector_store %arg6[%c0_2, %c0_3], %2 {strides = array<i32>} : memref<8x32xf32, #tpu.memory_space<vmem>>, vector<8x32xf32>,
    %cst_4 = arith.constant 0.000000e+00 : f32
    %4 = vector.broadcast %cst_4 : f32 to vector<8x32xf32>
    %c0_5 = arith.constant 0 : index
    %c0_6 = arith.constant 0 : index
    %5 = vector.load %arg7[%c0_5, %c0_6] : memref<8x32xf32, #tpu.memory_space<vmem>>, vector<8x32xf32>
    tpu.vector_store %arg7[%c0_5, %c0_6], %4 {strides = array<i32>} : memref<8x32xf32, #tpu.memory_space<vmem>>, vector<8x32xf32>,
    %cst_7 = arith.constant 0.000000e+00 : f32
    %6 = vector.broadcast %cst_7 : f32 to vector<8x32xf32>
    %c0_8 = arith.constant 0 : index
    %c0_9 = arith.constant 0 : index
    %7 = vector.load %arg8[%c0_8, %c0_9] : memref<8x32xf32, #tpu.memory_space<vmem>>, vector<8x32xf32>
    tpu.vector_store %arg8[%c0_8, %c0_9], %6 {strides = array<i32>} : memref<8x32xf32, #tpu.memory_space<vmem>>, vector<8x32xf32>,
    %c0_i32 = arith.constant 0 : i32
    %c0_10 = arith.constant 0 : index
    %c0_11 = arith.constant 0 : index
    %8 = vector.load %arg5[%c0_10, %c0_11] : memref<8x32xf32, #tpu.memory_space<vmem>>, vector<8x32xf32>
    %9 = arith.truncf %8 : vector<8x32xf32> to vector<8x32xbf16>
    %c0_12 = arith.constant 0 : index
    %c0_13 = arith.constant 0 : index
    %10 = vector.load %arg2[%c0_12, %c0_13] : memref<32x128xbf16, #tpu.memory_space<vmem>>, vector<32x128xbf16>
    %cst_14 = arith.constant dense<0.000000e+00> : vector<8x128xf32>
    %11 = tpu.matmul %9, %10, %cst_14 {dimension_numbers = #tpu.dot_dimension_numbers<[1], [0], [0], [1], [0, 0, 1, 1], [], []>} : vector<8x32xbf16>, vector<32x128xbf16>, vector<8x128xf32> -> vector<8x128xf32>
    %c0_15 = arith.constant 0 : index
    %c0_16 = arith.constant 0 : index
    %12 = vector.load %arg6[%c0_15, %c0_16] : memref<8x32xf32, #tpu.memory_space<vmem>>, vector<8x32xf32>
    %13 = arith.truncf %12 : vector<8x32xf32> to vector<8x32xbf16>
    %c0_17 = arith.constant 0 : index
    %c0_18 = arith.constant 0 : index
    %14 = vector.load %arg3[%c0_17, %c0_18] : memref<32x128xbf16, #tpu.memory_space<vmem>>, vector<32x128xbf16>
    %cst_19 = arith.constant dense<0.000000e+00> : vector<8x128xf32>
    %15 = tpu.matmul %13, %14, %cst_19 {dimension_numbers = #tpu.dot_dimension_numbers<[1], [0], [0], [1], [0, 0, 1, 1], [], []>} : vector<8x32xbf16>, vector<32x128xbf16>, vector<8x128xf32> -> vector<8x128xf32>
    %16 = arith.index_cast %c0_i32 : i32 to index
    %c0_20 = arith.constant 0 : index
    %c0_21 = arith.constant 0 : index
    %17 = vector.load %arg1[%16, %c0_20, %c0_21] : memref<8x8x256xbf16, #tpu.memory_space<vmem>>, vector<1x8x128xbf16>
    %18 = vector.shape_cast %17 : vector<1x8x128xbf16> to vector<8x128xbf16>
    %19 = arith.extf %18 : vector<8x128xbf16> to vector<8x128xf32>
    %20 = arith.addf %19, %11 : vector<8x128xf32>
    %c7_i32 = arith.constant 7 : i32
    %21 = arith.subi %c7_i32, %c0_i32 : i32
    %22 = arith.index_cast %21 : i32 to index
    %c0_22 = arith.constant 0 : index
    %c128 = arith.constant 128 : index
    %23 = vector.load %arg1[%22, %c0_22, %c128] : memref<8x8x256xbf16, #tpu.memory_space<vmem>>, vector<1x8x128xbf16>
    %24 = vector.shape_cast %23 : vector<1x8x128xbf16> to vector<8x128xbf16>
    %25 = arith.extf %24 : vector<8x128xbf16> to vector<8x128xf32>
    %26 = arith.addf %25, %15 : vector<8x128xf32>
    %c0_23 = arith.constant 0 : index
    %c0_24 = arith.constant 0 : index
    %27 = vector.load %arg7[%c0_23, %c0_24] : memref<8x32xf32, #tpu.memory_space<vmem>>, vector<8x32xf32>
    %28 = arith.negf %20 : vector<8x128xf32>
    %29 = math.exp %28 : vector<8x128xf32>
    %cst_25 = arith.constant 1.000000e+00 : f32
    %30 = vector.broadcast %cst_25 : f32 to vector<8x128xf32>
    %31 = arith.addf %30, %29 : vector<8x128xf32>
    %32 = arith.divf %30, %31 : vector<8x128xf32>
    %33 = math.tanh %20 : vector<8x128xf32>
    %34 = vector.extract_strided_slice %32 {offsets = [0, 0], sizes = [8, 32], strides = [1, 1]} : vector<8x128xf32> to vector<8x32xf32>
    %35 = vector.extract_strided_slice %32 {offsets = [0, 32], sizes = [8, 32], strides = [1, 1]} : vector<8x128xf32> to vector<8x32xf32>
    %36 = vector.extract_strided_slice %33 {offsets = [0, 64], sizes = [8, 32], strides = [1, 1]} : vector<8x128xf32> to vector<8x32xf32>
    %37 = vector.extract_strided_slice %32 {offsets = [0, 96], sizes = [8, 32], strides = [1, 1]} : vector<8x128xf32> to vector<8x32xf32>
    %38 = arith.mulf %35, %27 : vector<8x32xf32>
    %39 = arith.mulf %34, %36 : vector<8x32xf32>
    %40 = arith.addf %38, %39 : vector<8x32xf32>
    %41 = math.tanh %40 : vector<8x32xf32>
    %42 = arith.mulf %37, %41 : vector<8x32xf32>
    %c0_26 = arith.constant 0 : index
    %c0_27 = arith.constant 0 : index
    %43 = vector.load %arg8[%c0_26, %c0_27] : memref<8x32xf32, #tpu.memory_space<vmem>>, vector<8x32xf32>
    %44 = arith.negf %26 : vector<8x128xf32>
    %45 = math.exp %44 : vector<8x128xf32>
    %cst_28 = arith.constant 1.000000e+00 : f32
    %46 = vector.broadcast %cst_28 : f32 to vector<8x128xf32>
    %47 = arith.addf %46, %45 : vector<8x128xf32>
    %48 = arith.divf %46, %47 : vector<8x128xf32>
    %49 = math.tanh %26 : vector<8x128xf32>
    %50 = vector.extract_strided_slice %48 {offsets = [0, 0], sizes = [8, 32], strides = [1, 1]} : vector<8x128xf32> to vector<8x32xf32>
    %51 = vector.extract_strided_slice %48 {offsets = [0, 32], sizes = [8, 32], strides = [1, 1]} : vector<8x128xf32> to vector<8x32xf32>
    %52 = vector.extract_strided_slice %49 {offsets = [0, 64], sizes = [8, 32], strides = [1, 1]} : vector<8x128xf32> to vector<8x32xf32>
    %53 = vector.extract_strided_slice %48 {offsets = [0, 96], sizes = [8, 32], strides = [1, 1]} : vector<8x128xf32> to vector<8x32xf32>
    %54 = arith.mulf %51, %43 : vector<8x32xf32>
    %55 = arith.mulf %50, %52 : vector<8x32xf32>
    %56 = arith.addf %54, %55 : vector<8x32xf32>
    %57 = math.tanh %56 : vector<8x32xf32>
    %58 = arith.mulf %53, %57 : vector<8x32xf32>
    %c0_29 = arith.constant 0 : index
    %c0_30 = arith.constant 0 : index
    %59 = vector.load %arg5[%c0_29, %c0_30] : memref<8x32xf32, #tpu.memory_space<vmem>>, vector<8x32xf32>
    tpu.vector_store %arg5[%c0_29, %c0_30], %42 {strides = array<i32>} : memref<8x32xf32, #tpu.memory_space<vmem>>, vector<8x32xf32>,
    %c0_31 = arith.constant 0 : index
    %c0_32 = arith.constant 0 : index
    %60 = vector.load %arg7[%c0_31, %c0_32] : memref<8x32xf32, #tpu.memory_space<vmem>>, vector<8x32xf32>
    tpu.vector_store %arg7[%c0_31, %c0_32], %40 {strides = array<i32>} : memref<8x32xf32, #tpu.memory_space<vmem>>, vector<8x32xf32>,
    %c0_33 = arith.constant 0 : index
    %c0_34 = arith.constant 0 : index
    %61 = vector.load %arg6[%c0_33, %c0_34] : memref<8x32xf32, #tpu.memory_space<vmem>>, vector<8x32xf32>
    tpu.vector_store %arg6[%c0_33, %c0_34], %58 {strides = array<i32>} : memref<8x32xf32, #tpu.memory_space<vmem>>, vector<8x32xf32>,
    %c0_35 = arith.constant 0 : index
    %c0_36 = arith.constant 0 : index
    %62 = vector.load %arg8[%c0_35, %c0_36] : memref<8x32xf32, #tpu.memory_space<vmem>>, vector<8x32xf32>
    tpu.vector_store %arg8[%c0_35, %c0_36], %56 {strides = array<i32>} : memref<8x32xf32, #tpu.memory_space<vmem>>, vector<8x32xf32>,
    %63 = arith.index_cast %c0_i32 : i32 to index
    %c0_37 = arith.constant 0 : index
    %c0_38 = arith.constant 0 : index
    %64 = vector.load %arg4[%63, %c0_37, %c0_38] : memref<8x8x64xf32, #tpu.memory_space<vmem>>, vector<1x8x32xf32>
    %65 = vector.shape_cast %64 : vector<1x8x32xf32> to vector<8x32xf32>
    %66 = vector.shape_cast %42 : vector<8x32xf32> to vector<1x8x32xf32>
    tpu.vector_store %arg4[%63, %c0_37, %c0_38], %66 {strides = array<i32>} : memref<8x8x64xf32, #tpu.memory_space<vmem>>, vector<1x8x32xf32>,
    %c7_i32_39 = arith.constant 7 : i32
    %67 = arith.subi %c7_i32_39, %c0_i32 : i32
    %68 = arith.index_cast %67 : i32 to index
    %c0_40 = arith.constant 0 : index
    %c32 = arith.constant 32 : index
    %69 = vector.load %arg4[%68, %c0_40, %c32] : memref<8x8x64xf32, #tpu.memory_space<vmem>>, vector<1x8x32xf32>
    %70 = vector.shape_cast %69 : vector<1x8x32xf32> to vector<8x32xf32>
    %71 = vector.shape_cast %58 : vector<8x32xf32> to vector<1x8x32xf32>
    tpu.vector_store %arg4[%68, %c0_40, %c32], %71 {strides = array<i32>} : memref<8x8x64xf32, #tpu.memory_space<vmem>>, vector<1x8x32xf32>,
    %c1_i32 = arith.constant 1 : i32
    %c0_41 = arith.constant 0 : index
    %c0_42 = arith.constant 0 : index
    %72 = vector.load %arg5[%c0_41, %c0_42] : memref<8x32xf32, #tpu.memory_space<vmem>>, vector<8x32xf32>
    %73 = arith.truncf %72 : vector<8x32xf32> to vector<8x32xbf16>
    %c0_43 = arith.constant 0 : index
    %c0_44 = arith.constant 0 : index
    %74 = vector.load %arg2[%c0_43, %c0_44] : memref<32x128xbf16, #tpu.memory_space<vmem>>, vector<32x128xbf16>
    %cst_45 = arith.constant dense<0.000000e+00> : vector<8x128xf32>
    %75 = tpu.matmul %73, %74, %cst_45 {dimension_numbers = #tpu.dot_dimension_numbers<[1], [0], [0], [1], [0, 0, 1, 1], [], []>} : vector<8x32xbf16>, vector<32x128xbf16>, vector<8x128xf32> -> vector<8x128xf32>
    %c0_46 = arith.constant 0 : index
    %c0_47 = arith.constant 0 : index
    %76 = vector.load %arg6[%c0_46, %c0_47] : memref<8x32xf32, #tpu.memory_space<vmem>>, vector<8x32xf32>
    %77 = arith.truncf %76 : vector<8x32xf32> to vector<8x32xbf16>
    %c0_48 = arith.constant 0 : index
    %c0_49 = arith.constant 0 : index
    %78 = vector.load %arg3[%c0_48, %c0_49] : memref<32x128xbf16, #tpu.memory_space<vmem>>, vector<32x128xbf16>
    %cst_50 = arith.constant dense<0.000000e+00> : vector<8x128xf32>
    %79 = tpu.matmul %77, %78, %cst_50 {dimension_numbers = #tpu.dot_dimension_numbers<[1], [0], [0], [1], [0, 0, 1, 1], [], []>} : vector<8x32xbf16>, vector<32x128xbf16>, vector<8x128xf32> -> vector<8x128xf32>
    %80 = arith.index_cast %c1_i32 : i32 to index
    %c0_51 = arith.constant 0 : index
    %c0_52 = arith.constant 0 : index
    %81 = vector.load %arg1[%80, %c0_51, %c0_52] : memref<8x8x256xbf16, #tpu.memory_space<vmem>>, vector<1x8x128xbf16>
    %82 = vector.shape_cast %81 : vector<1x8x128xbf16> to vector<8x128xbf16>
    %83 = arith.extf %82 : vector<8x128xbf16> to vector<8x128xf32>
    %84 = arith.addf %83, %75 : vector<8x128xf32>
    %c7_i32_53 = arith.constant 7 : i32
    %85 = arith.subi %c7_i32_53, %c1_i32 : i32
    %86 = arith.index_cast %85 : i32 to index
    %c0_54 = arith.constant 0 : index
    %c128_55 = arith.constant 128 : index
    %87 = vector.load %arg1[%86, %c0_54, %c128_55] : memref<8x8x256xbf16, #tpu.memory_space<vmem>>, vector<1x8x128xbf16>
    %88 = vector.shape_cast %87 : vector<1x8x128xbf16> to vector<8x128xbf16>
    %89 = arith.extf %88 : vector<8x128xbf16> to vector<8x128xf32>
    %90 = arith.addf %89, %79 : vector<8x128xf32>
    %c0_56 = arith.constant 0 : index
    %c0_57 = arith.constant 0 : index
    %91 = vector.load %arg7[%c0_56, %c0_57] : memref<8x32xf32, #tpu.memory_space<vmem>>, vector<8x32xf32>
    %92 = arith.negf %84 : vector<8x128xf32>
    %93 = math.exp %92 : vector<8x128xf32>
    %cst_58 = arith.constant 1.000000e+00 : f32
    %94 = vector.broadcast %cst_58 : f32 to vector<8x128xf32>
    %95 = arith.addf %94, %93 : vector<8x128xf32>
    %96 = arith.divf %94, %95 : vector<8x128xf32>
    %97 = math.tanh %84 : vector<8x128xf32>
    %98 = vector.extract_strided_slice %96 {offsets = [0, 0], sizes = [8, 32], strides = [1, 1]} : vector<8x128xf32> to vector<8x32xf32>
    %99 = vector.extract_strided_slice %96 {offsets = [0, 32], sizes = [8, 32], strides = [1, 1]} : vector<8x128xf32> to vector<8x32xf32>
    %100 = vector.extract_strided_slice %97 {offsets = [0, 64], sizes = [8, 32], strides = [1, 1]} : vector<8x128xf32> to vector<8x32xf32>
    %101 = vector.extract_strided_slice %96 {offsets = [0, 96], sizes = [8, 32], strides = [1, 1]} : vector<8x128xf32> to vector<8x32xf32>
    %102 = arith.mulf %99, %91 : vector<8x32xf32>
    %103 = arith.mulf %98, %100 : vector<8x32xf32>
    %104 = arith.addf %102, %103 : vector<8x32xf32>
    %105 = math.tanh %104 : vector<8x32xf32>
    %106 = arith.mulf %101, %105 : vector<8x32xf32>
    %c0_59 = arith.constant 0 : index
    %c0_60 = arith.constant 0 : index
    %107 = vector.load %arg8[%c0_59, %c0_60] : memref<8x32xf32, #tpu.memory_space<vmem>>, vector<8x32xf32>
    %108 = arith.negf %90 : vector<8x128xf32>
    %109 = math.exp %108 : vector<8x128xf32>
    %cst_61 = arith.constant 1.000000e+00 : f32
    %110 = vector.broadcast %cst_61 : f32 to vector<8x128xf32>
    %111 = arith.addf %110, %109 : vector<8x128xf32>
    %112 = arith.divf %110, %111 : vector<8x128xf32>
    %113 = math.tanh %90 : vector<8x128xf32>
    %114 = vector.extract_strided_slice %112 {offsets = [0, 0], sizes = [8, 32], strides = [1, 1]} : vector<8x128xf32> to vector<8x32xf32>
    %115 = vector.extract_strided_slice %112 {offsets = [0, 32], sizes = [8, 32], strides = [1, 1]} : vector<8x128xf32> to vector<8x32xf32>
    %116 = vector.extract_strided_slice %113 {offsets = [0, 64], sizes = [8, 32], strides = [1, 1]} : vector<8x128xf32> to vector<8x32xf32>
    %117 = vector.extract_strided_slice %112 {offsets = [0, 96], sizes = [8, 32], strides = [1, 1]} : vector<8x128xf32> to vector<8x32xf32>
    %118 = arith.mulf %115, %107 : vector<8x32xf32>
    %119 = arith.mulf %114, %116 : vector<8x32xf32>
    %120 = arith.addf %118, %119 : vector<8x32xf32>
    %121 = math.tanh %120 : vector<8x32xf32>
    %122 = arith.mulf %117, %121 : vector<8x32xf32>
    %c0_62 = arith.constant 0 : index
    %c0_63 = arith.constant 0 : index
    %123 = vector.load %arg5[%c0_62, %c0_63] : memref<8x32xf32, #tpu.memory_space<vmem>>, vector<8x32xf32>
    tpu.vector_store %arg5[%c0_62, %c0_63], %106 {strides = array<i32>} : memref<8x32xf32, #tpu.memory_space<vmem>>, vector<8x32xf32>,
    %c0_64 = arith.constant 0 : index
    %c0_65 = arith.constant 0 : index
    %124 = vector.load %arg7[%c0_64, %c0_65] : memref<8x32xf32, #tpu.memory_space<vmem>>, vector<8x32xf32>
    tpu.vector_store %arg7[%c0_64, %c0_65], %104 {strides = array<i32>} : memref<8x32xf32, #tpu.memory_space<vmem>>, vector<8x32xf32>,
    %c0_66 = arith.constant 0 : index
    %c0_67 = arith.constant 0 : index
    %125 = vector.load %arg6[%c0_66, %c0_67] : memref<8x32xf32, #tpu.memory_space<vmem>>, vector<8x32xf32>
    tpu.vector_store %arg6[%c0_66, %c0_67], %122 {strides = array<i32>} : memref<8x32xf32, #tpu.memory_space<vmem>>, vector<8x32xf32>,
    %c0_68 = arith.constant 0 : index
    %c0_69 = arith.constant 0 : index
    %126 = vector.load %arg8[%c0_68, %c0_69] : memref<8x32xf32, #tpu.memory_space<vmem>>, vector<8x32xf32>
    tpu.vector_store %arg8[%c0_68, %c0_69], %120 {strides = array<i32>} : memref<8x32xf32, #tpu.memory_space<vmem>>, vector<8x32xf32>,
    %127 = arith.index_cast %c1_i32 : i32 to index
    %c0_70 = arith.constant 0 : index
    %c0_71 = arith.constant 0 : index
    %128 = vector.load %arg4[%127, %c0_70, %c0_71] : memref<8x8x64xf32, #tpu.memory_space<vmem>>, vector<1x8x32xf32>
    %129 = vector.shape_cast %128 : vector<1x8x32xf32> to vector<8x32xf32>
    %130 = vector.shape_cast %106 : vector<8x32xf32> to vector<1x8x32xf32>
    tpu.vector_store %arg4[%127, %c0_70, %c0_71], %130 {strides = array<i32>} : memref<8x8x64xf32, #tpu.memory_space<vmem>>, vector<1x8x32xf32>,
    %c7_i32_72 = arith.constant 7 : i32
    %131 = arith.subi %c7_i32_72, %c1_i32 : i32
    %132 = arith.index_cast %131 : i32 to index
    %c0_73 = arith.constant 0 : index
    %c32_74 = arith.constant 32 : index
    %133 = vector.load %arg4[%132, %c0_73, %c32_74] : memref<8x8x64xf32, #tpu.memory_space<vmem>>, vector<1x8x32xf32>
    %134 = vector.shape_cast %133 : vector<1x8x32xf32> to vector<8x32xf32>
    %135 = vector.shape_cast %122 : vector<8x32xf32> to vector<1x8x32xf32>
    tpu.vector_store %arg4[%132, %c0_73, %c32_74], %135 {strides = array<i32>} : memref<8x8x64xf32, #tpu.memory_space<vmem>>, vector<1x8x32xf32>,
    %c2_i32 = arith.constant 2 : i32
    %c0_75 = arith.constant 0 : index
    %c0_76 = arith.constant 0 : index
    %136 = vector.load %arg5[%c0_75, %c0_76] : memref<8x32xf32, #tpu.memory_space<vmem>>, vector<8x32xf32>
    %137 = arith.truncf %136 : vector<8x32xf32> to vector<8x32xbf16>
    %c0_77 = arith.constant 0 : index
    %c0_78 = arith.constant 0 : index
    %138 = vector.load %arg2[%c0_77, %c0_78] : memref<32x128xbf16, #tpu.memory_space<vmem>>, vector<32x128xbf16>
    %cst_79 = arith.constant dense<0.000000e+00> : vector<8x128xf32>
    %139 = tpu.matmul %137, %138, %cst_79 {dimension_numbers = #tpu.dot_dimension_numbers<[1], [0], [0], [1], [0, 0, 1, 1], [], []>} : vector<8x32xbf16>, vector<32x128xbf16>, vector<8x128xf32> -> vector<8x128xf32>
    %c0_80 = arith.constant 0 : index
    %c0_81 = arith.constant 0 : index
    %140 = vector.load %arg6[%c0_80, %c0_81] : memref<8x32xf32, #tpu.memory_space<vmem>>, vector<8x32xf32>
    %141 = arith.truncf %140 : vector<8x32xf32> to vector<8x32xbf16>
    %c0_82 = arith.constant 0 : index
    %c0_83 = arith.constant 0 : index
    %142 = vector.load %arg3[%c0_82, %c0_83] : memref<32x128xbf16, #tpu.memory_space<vmem>>, vector<32x128xbf16>
    %cst_84 = arith.constant dense<0.000000e+00> : vector<8x128xf32>
    %143 = tpu.matmul %141, %142, %cst_84 {dimension_numbers = #tpu.dot_dimension_numbers<[1], [0], [0], [1], [0, 0, 1, 1], [], []>} : vector<8x32xbf16>, vector<32x128xbf16>, vector<8x128xf32> -> vector<8x128xf32>
    %144 = arith.index_cast %c2_i32 : i32 to index
    %c0_85 = arith.constant 0 : index
    %c0_86 = arith.constant 0 : index
    %145 = vector.load %arg1[%144, %c0_85, %c0_86] : memref<8x8x256xbf16, #tpu.memory_space<vmem>>, vector<1x8x128xbf16>
    %146 = vector.shape_cast %145 : vector<1x8x128xbf16> to vector<8x128xbf16>
    %147 = arith.extf %146 : vector<8x128xbf16> to vector<8x128xf32>
    %148 = arith.addf %147, %139 : vector<8x128xf32>
    %c7_i32_87 = arith.constant 7 : i32
    %149 = arith.subi %c7_i32_87, %c2_i32 : i32
    %150 = arith.index_cast %149 : i32 to index
    %c0_88 = arith.constant 0 : index
    %c128_89 = arith.constant 128 : index
    %151 = vector.load %arg1[%150, %c0_88, %c128_89] : memref<8x8x256xbf16, #tpu.memory_space<vmem>>, vector<1x8x128xbf16>
    %152 = vector.shape_cast %151 : vector<1x8x128xbf16> to vector<8x128xbf16>
    %153 = arith.extf %152 : vector<8x128xbf16> to vector<8x128xf32>
    %154 = arith.addf %153, %143 : vector<8x128xf32>
    %c0_90 = arith.constant 0 : index
    %c0_91 = arith.constant 0 : index
    %155 = vector.load %arg7[%c0_90, %c0_91] : memref<8x32xf32, #tpu.memory_space<vmem>>, vector<8x32xf32>
    %156 = arith.negf %148 : vector<8x128xf32>
    %157 = math.exp %156 : vector<8x128xf32>
    %cst_92 = arith.constant 1.000000e+00 : f32
    %158 = vector.broadcast %cst_92 : f32 to vector<8x128xf32>
    %159 = arith.addf %158, %157 : vector<8x128xf32>
    %160 = arith.divf %158, %159 : vector<8x128xf32>
    %161 = math.tanh %148 : vector<8x128xf32>
    %162 = vector.extract_strided_slice %160 {offsets = [0, 0], sizes = [8, 32], strides = [1, 1]} : vector<8x128xf32> to vector<8x32xf32>
    %163 = vector.extract_strided_slice %160 {offsets = [0, 32], sizes = [8, 32], strides = [1, 1]} : vector<8x128xf32> to vector<8x32xf32>
    %164 = vector.extract_strided_slice %161 {offsets = [0, 64], sizes = [8, 32], strides = [1, 1]} : vector<8x128xf32> to vector<8x32xf32>
    %165 = vector.extract_strided_slice %160 {offsets = [0, 96], sizes = [8, 32], strides = [1, 1]} : vector<8x128xf32> to vector<8x32xf32>
    %166 = arith.mulf %163, %155 : vector<8x32xf32>
    %167 = arith.mulf %162, %164 : vector<8x32xf32>
    %168 = arith.addf %166, %167 : vector<8x32xf32>
    %169 = math.tanh %168 : vector<8x32xf32>
    %170 = arith.mulf %165, %169 : vector<8x32xf32>
    %c0_93 = arith.constant 0 : index
    %c0_94 = arith.constant 0 : index
    %171 = vector.load %arg8[%c0_93, %c0_94] : memref<8x32xf32, #tpu.memory_space<vmem>>, vector<8x32xf32>
    %172 = arith.negf %154 : vector<8x128xf32>
    %173 = math.exp %172 : vector<8x128xf32>
    %cst_95 = arith.constant 1.000000e+00 : f32
    %174 = vector.broadcast %cst_95 : f32 to vector<8x128xf32>
    %175 = arith.addf %174, %173 : vector<8x128xf32>
    %176 = arith.divf %174, %175 : vector<8x128xf32>
    %177 = math.tanh %154 : vector<8x128xf32>
    %178 = vector.extract_strided_slice %176 {offsets = [0, 0], sizes = [8, 32], strides = [1, 1]} : vector<8x128xf32> to vector<8x32xf32>
    %179 = vector.extract_strided_slice %176 {offsets = [0, 32], sizes = [8, 32], strides = [1, 1]} : vector<8x128xf32> to vector<8x32xf32>
    %180 = vector.extract_strided_slice %177 {offsets = [0, 64], sizes = [8, 32], strides = [1, 1]} : vector<8x128xf32> to vector<8x32xf32>
    %181 = vector.extract_strided_slice %176 {offsets = [0, 96], sizes = [8, 32], strides = [1, 1]} : vector<8x128xf32> to vector<8x32xf32>
    %182 = arith.mulf %179, %171 : vector<8x32xf32>
    %183 = arith.mulf %178, %180 : vector<8x32xf32>
    %184 = arith.addf %182, %183 : vector<8x32xf32>
    %185 = math.tanh %184 : vector<8x32xf32>
    %186 = arith.mulf %181, %185 : vector<8x32xf32>
    %c0_96 = arith.constant 0 : index
    %c0_97 = arith.constant 0 : index
    %187 = vector.load %arg5[%c0_96, %c0_97] : memref<8x32xf32, #tpu.memory_space<vmem>>, vector<8x32xf32>
    tpu.vector_store %arg5[%c0_96, %c0_97], %170 {strides = array<i32>} : memref<8x32xf32, #tpu.memory_space<vmem>>, vector<8x32xf32>,
    %c0_98 = arith.constant 0 : index
    %c0_99 = arith.constant 0 : index
    %188 = vector.load %arg7[%c0_98, %c0_99] : memref<8x32xf32, #tpu.memory_space<vmem>>, vector<8x32xf32>
    tpu.vector_store %arg7[%c0_98, %c0_99], %168 {strides = array<i32>} : memref<8x32xf32, #tpu.memory_space<vmem>>, vector<8x32xf32>,
    %c0_100 = arith.constant 0 : index
    %c0_101 = arith.constant 0 : index
    %189 = vector.load %arg6[%c0_100, %c0_101] : memref<8x32xf32, #tpu.memory_space<vmem>>, vector<8x32xf32>
    tpu.vector_store %arg6[%c0_100, %c0_101], %186 {strides = array<i32>} : memref<8x32xf32, #tpu.memory_space<vmem>>, vector<8x32xf32>,
    %c0_102 = arith.constant 0 : index
    %c0_103 = arith.constant 0 : index
    %190 = vector.load %arg8[%c0_102, %c0_103] : memref<8x32xf32, #tpu.memory_space<vmem>>, vector<8x32xf32>
    tpu.vector_store %arg8[%c0_102, %c0_103], %184 {strides = array<i32>} : memref<8x32xf32, #tpu.memory_space<vmem>>, vector<8x32xf32>,
    %191 = arith.index_cast %c2_i32 : i32 to index
    %c0_104 = arith.constant 0 : index
    %c0_105 = arith.constant 0 : index
    %192 = vector.load %arg4[%191, %c0_104, %c0_105] : memref<8x8x64xf32, #tpu.memory_space<vmem>>, vector<1x8x32xf32>
    %193 = vector.shape_cast %192 : vector<1x8x32xf32> to vector<8x32xf32>
    %194 = vector.shape_cast %170 : vector<8x32xf32> to vector<1x8x32xf32>
    tpu.vector_store %arg4[%191, %c0_104, %c0_105], %194 {strides = array<i32>} : memref<8x8x64xf32, #tpu.memory_space<vmem>>, vector<1x8x32xf32>,
    %c7_i32_106 = arith.constant 7 : i32
    %195 = arith.subi %c7_i32_106, %c2_i32 : i32
    %196 = arith.index_cast %195 : i32 to index
    %c0_107 = arith.constant 0 : index
    %c32_108 = arith.constant 32 : index
    %197 = vector.load %arg4[%196, %c0_107, %c32_108] : memref<8x8x64xf32, #tpu.memory_space<vmem>>, vector<1x8x32xf32>
    %198 = vector.shape_cast %197 : vector<1x8x32xf32> to vector<8x32xf32>
    %199 = vector.shape_cast %186 : vector<8x32xf32> to vector<1x8x32xf32>
    tpu.vector_store %arg4[%196, %c0_107, %c32_108], %199 {strides = array<i32>} : memref<8x8x64xf32, #tpu.memory_space<vmem>>, vector<1x8x32xf32>,
    %c3_i32 = arith.constant 3 : i32
    %c0_109 = arith.constant 0 : index
    %c0_110 = arith.constant 0 : index
    %200 = vector.load %arg5[%c0_109, %c0_110] : memref<8x32xf32, #tpu.memory_space<vmem>>, vector<8x32xf32>
    %201 = arith.truncf %200 : vector<8x32xf32> to vector<8x32xbf16>
    %c0_111 = arith.constant 0 : index
    %c0_112 = arith.constant 0 : index
    %202 = vector.load %arg2[%c0_111, %c0_112] : memref<32x128xbf16, #tpu.memory_space<vmem>>, vector<32x128xbf16>
    %cst_113 = arith.constant dense<0.000000e+00> : vector<8x128xf32>
    %203 = tpu.matmul %201, %202, %cst_113 {dimension_numbers = #tpu.dot_dimension_numbers<[1], [0], [0], [1], [0, 0, 1, 1], [], []>} : vector<8x32xbf16>, vector<32x128xbf16>, vector<8x128xf32> -> vector<8x128xf32>
    %c0_114 = arith.constant 0 : index
    %c0_115 = arith.constant 0 : index
    %204 = vector.load %arg6[%c0_114, %c0_115] : memref<8x32xf32, #tpu.memory_space<vmem>>, vector<8x32xf32>
    %205 = arith.truncf %204 : vector<8x32xf32> to vector<8x32xbf16>
    %c0_116 = arith.constant 0 : index
    %c0_117 = arith.constant 0 : index
    %206 = vector.load %arg3[%c0_116, %c0_117] : memref<32x128xbf16, #tpu.memory_space<vmem>>, vector<32x128xbf16>
    %cst_118 = arith.constant dense<0.000000e+00> : vector<8x128xf32>
    %207 = tpu.matmul %205, %206, %cst_118 {dimension_numbers = #tpu.dot_dimension_numbers<[1], [0], [0], [1], [0, 0, 1, 1], [], []>} : vector<8x32xbf16>, vector<32x128xbf16>, vector<8x128xf32> -> vector<8x128xf32>
    %208 = arith.index_cast %c3_i32 : i32 to index
    %c0_119 = arith.constant 0 : index
    %c0_120 = arith.constant 0 : index
    %209 = vector.load %arg1[%208, %c0_119, %c0_120] : memref<8x8x256xbf16, #tpu.memory_space<vmem>>, vector<1x8x128xbf16>
    %210 = vector.shape_cast %209 : vector<1x8x128xbf16> to vector<8x128xbf16>
    %211 = arith.extf %210 : vector<8x128xbf16> to vector<8x128xf32>
    %212 = arith.addf %211, %203 : vector<8x128xf32>
    %c7_i32_121 = arith.constant 7 : i32
    %213 = arith.subi %c7_i32_121, %c3_i32 : i32
    %214 = arith.index_cast %213 : i32 to index
    %c0_122 = arith.constant 0 : index
    %c128_123 = arith.constant 128 : index
    %215 = vector.load %arg1[%214, %c0_122, %c128_123] : memref<8x8x256xbf16, #tpu.memory_space<vmem>>, vector<1x8x128xbf16>
    %216 = vector.shape_cast %215 : vector<1x8x128xbf16> to vector<8x128xbf16>
    %217 = arith.extf %216 : vector<8x128xbf16> to vector<8x128xf32>
    %218 = arith.addf %217, %207 : vector<8x128xf32>
    %c0_124 = arith.constant 0 : index
    %c0_125 = arith.constant 0 : index
    %219 = vector.load %arg7[%c0_124, %c0_125] : memref<8x32xf32, #tpu.memory_space<vmem>>, vector<8x32xf32>
    %220 = arith.negf %212 : vector<8x128xf32>
    %221 = math.exp %220 : vector<8x128xf32>
    %cst_126 = arith.constant 1.000000e+00 : f32
    %222 = vector.broadcast %cst_126 : f32 to vector<8x128xf32>
    %223 = arith.addf %222, %221 : vector<8x128xf32>
    %224 = arith.divf %222, %223 : vector<8x128xf32>
    %225 = math.tanh %212 : vector<8x128xf32>
    %226 = vector.extract_strided_slice %224 {offsets = [0, 0], sizes = [8, 32], strides = [1, 1]} : vector<8x128xf32> to vector<8x32xf32>
    %227 = vector.extract_strided_slice %224 {offsets = [0, 32], sizes = [8, 32], strides = [1, 1]} : vector<8x128xf32> to vector<8x32xf32>
    %228 = vector.extract_strided_slice %225 {offsets = [0, 64], sizes = [8, 32], strides = [1, 1]} : vector<8x128xf32> to vector<8x32xf32>
    %229 = vector.extract_strided_slice %224 {offsets = [0, 96], sizes = [8, 32], strides = [1, 1]} : vector<8x128xf32> to vector<8x32xf32>
    %230 = arith.mulf %227, %219 : vector<8x32xf32>
    %231 = arith.mulf %226, %228 : vector<8x32xf32>
    %232 = arith.addf %230, %231 : vector<8x32xf32>
    %233 = math.tanh %232 : vector<8x32xf32>
    %234 = arith.mulf %229, %233 : vector<8x32xf32>
    %c0_127 = arith.constant 0 : index
    %c0_128 = arith.constant 0 : index
    %235 = vector.load %arg8[%c0_127, %c0_128] : memref<8x32xf32, #tpu.memory_space<vmem>>, vector<8x32xf32>
    %236 = arith.negf %218 : vector<8x128xf32>
    %237 = math.exp %236 : vector<8x128xf32>
    %cst_129 = arith.constant 1.000000e+00 : f32
    %238 = vector.broadcast %cst_129 : f32 to vector<8x128xf32>
    %239 = arith.addf %238, %237 : vector<8x128xf32>
    %240 = arith.divf %238, %239 : vector<8x128xf32>
    %241 = math.tanh %218 : vector<8x128xf32>
    %242 = vector.extract_strided_slice %240 {offsets = [0, 0], sizes = [8, 32], strides = [1, 1]} : vector<8x128xf32> to vector<8x32xf32>
    %243 = vector.extract_strided_slice %240 {offsets = [0, 32], sizes = [8, 32], strides = [1, 1]} : vector<8x128xf32> to vector<8x32xf32>
    %244 = vector.extract_strided_slice %241 {offsets = [0, 64], sizes = [8, 32], strides = [1, 1]} : vector<8x128xf32> to vector<8x32xf32>
    %245 = vector.extract_strided_slice %240 {offsets = [0, 96], sizes = [8, 32], strides = [1, 1]} : vector<8x128xf32> to vector<8x32xf32>
    %246 = arith.mulf %243, %235 : vector<8x32xf32>
    %247 = arith.mulf %242, %244 : vector<8x32xf32>
    %248 = arith.addf %246, %247 : vector<8x32xf32>
    %249 = math.tanh %248 : vector<8x32xf32>
    %250 = arith.mulf %245, %249 : vector<8x32xf32>
    %c0_130 = arith.constant 0 : index
    %c0_131 = arith.constant 0 : index
    %251 = vector.load %arg5[%c0_130, %c0_131] : memref<8x32xf32, #tpu.memory_space<vmem>>, vector<8x32xf32>
    tpu.vector_store %arg5[%c0_130, %c0_131], %234 {strides = array<i32>} : memref<8x32xf32, #tpu.memory_space<vmem>>, vector<8x32xf32>,
    %c0_132 = arith.constant 0 : index
    %c0_133 = arith.constant 0 : index
    %252 = vector.load %arg7[%c0_132, %c0_133] : memref<8x32xf32, #tpu.memory_space<vmem>>, vector<8x32xf32>
    tpu.vector_store %arg7[%c0_132, %c0_133], %232 {strides = array<i32>} : memref<8x32xf32, #tpu.memory_space<vmem>>, vector<8x32xf32>,
    %c0_134 = arith.constant 0 : index
    %c0_135 = arith.constant 0 : index
    %253 = vector.load %arg6[%c0_134, %c0_135] : memref<8x32xf32, #tpu.memory_space<vmem>>, vector<8x32xf32>
    tpu.vector_store %arg6[%c0_134, %c0_135], %250 {strides = array<i32>} : memref<8x32xf32, #tpu.memory_space<vmem>>, vector<8x32xf32>,
    %c0_136 = arith.constant 0 : index
    %c0_137 = arith.constant 0 : index
    %254 = vector.load %arg8[%c0_136, %c0_137] : memref<8x32xf32, #tpu.memory_space<vmem>>, vector<8x32xf32>
    tpu.vector_store %arg8[%c0_136, %c0_137], %248 {strides = array<i32>} : memref<8x32xf32, #tpu.memory_space<vmem>>, vector<8x32xf32>,
    %255 = arith.index_cast %c3_i32 : i32 to index
    %c0_138 = arith.constant 0 : index
    %c0_139 = arith.constant 0 : index
    %256 = vector.load %arg4[%255, %c0_138, %c0_139] : memref<8x8x64xf32, #tpu.memory_space<vmem>>, vector<1x8x32xf32>
    %257 = vector.shape_cast %256 : vector<1x8x32xf32> to vector<8x32xf32>
    %258 = vector.shape_cast %234 : vector<8x32xf32> to vector<1x8x32xf32>
    tpu.vector_store %arg4[%255, %c0_138, %c0_139], %258 {strides = array<i32>} : memref<8x8x64xf32, #tpu.memory_space<vmem>>, vector<1x8x32xf32>,
    %c7_i32_140 = arith.constant 7 : i32
    %259 = arith.subi %c7_i32_140, %c3_i32 : i32
    %260 = arith.index_cast %259 : i32 to index
    %c0_141 = arith.constant 0 : index
    %c32_142 = arith.constant 32 : index
    %261 = vector.load %arg4[%260, %c0_141, %c32_142] : memref<8x8x64xf32, #tpu.memory_space<vmem>>, vector<1x8x32xf32>
    %262 = vector.shape_cast %261 : vector<1x8x32xf32> to vector<8x32xf32>
    %263 = vector.shape_cast %250 : vector<8x32xf32> to vector<1x8x32xf32>
    tpu.vector_store %arg4[%260, %c0_141, %c32_142], %263 {strides = array<i32>} : memref<8x8x64xf32, #tpu.memory_space<vmem>>, vector<1x8x32xf32>,
    %c4_i32 = arith.constant 4 : i32
    %c0_143 = arith.constant 0 : index
    %c0_144 = arith.constant 0 : index
    %264 = vector.load %arg5[%c0_143, %c0_144] : memref<8x32xf32, #tpu.memory_space<vmem>>, vector<8x32xf32>
    %265 = arith.truncf %264 : vector<8x32xf32> to vector<8x32xbf16>
    %c0_145 = arith.constant 0 : index
    %c0_146 = arith.constant 0 : index
    %266 = vector.load %arg2[%c0_145, %c0_146] : memref<32x128xbf16, #tpu.memory_space<vmem>>, vector<32x128xbf16>
    %cst_147 = arith.constant dense<0.000000e+00> : vector<8x128xf32>
    %267 = tpu.matmul %265, %266, %cst_147 {dimension_numbers = #tpu.dot_dimension_numbers<[1], [0], [0], [1], [0, 0, 1, 1], [], []>} : vector<8x32xbf16>, vector<32x128xbf16>, vector<8x128xf32> -> vector<8x128xf32>
    %c0_148 = arith.constant 0 : index
    %c0_149 = arith.constant 0 : index
    %268 = vector.load %arg6[%c0_148, %c0_149] : memref<8x32xf32, #tpu.memory_space<vmem>>, vector<8x32xf32>
    %269 = arith.truncf %268 : vector<8x32xf32> to vector<8x32xbf16>
    %c0_150 = arith.constant 0 : index
    %c0_151 = arith.constant 0 : index
    %270 = vector.load %arg3[%c0_150, %c0_151] : memref<32x128xbf16, #tpu.memory_space<vmem>>, vector<32x128xbf16>
    %cst_152 = arith.constant dense<0.000000e+00> : vector<8x128xf32>
    %271 = tpu.matmul %269, %270, %cst_152 {dimension_numbers = #tpu.dot_dimension_numbers<[1], [0], [0], [1], [0, 0, 1, 1], [], []>} : vector<8x32xbf16>, vector<32x128xbf16>, vector<8x128xf32> -> vector<8x128xf32>
    %272 = arith.index_cast %c4_i32 : i32 to index
    %c0_153 = arith.constant 0 : index
    %c0_154 = arith.constant 0 : index
    %273 = vector.load %arg1[%272, %c0_153, %c0_154] : memref<8x8x256xbf16, #tpu.memory_space<vmem>>, vector<1x8x128xbf16>
    %274 = vector.shape_cast %273 : vector<1x8x128xbf16> to vector<8x128xbf16>
    %275 = arith.extf %274 : vector<8x128xbf16> to vector<8x128xf32>
    %276 = arith.addf %275, %267 : vector<8x128xf32>
    %c7_i32_155 = arith.constant 7 : i32
    %277 = arith.subi %c7_i32_155, %c4_i32 : i32
    %278 = arith.index_cast %277 : i32 to index
    %c0_156 = arith.constant 0 : index
    %c128_157 = arith.constant 128 : index
    %279 = vector.load %arg1[%278, %c0_156, %c128_157] : memref<8x8x256xbf16, #tpu.memory_space<vmem>>, vector<1x8x128xbf16>
    %280 = vector.shape_cast %279 : vector<1x8x128xbf16> to vector<8x128xbf16>
    %281 = arith.extf %280 : vector<8x128xbf16> to vector<8x128xf32>
    %282 = arith.addf %281, %271 : vector<8x128xf32>
    %c0_158 = arith.constant 0 : index
    %c0_159 = arith.constant 0 : index
    %283 = vector.load %arg7[%c0_158, %c0_159] : memref<8x32xf32, #tpu.memory_space<vmem>>, vector<8x32xf32>
    %284 = arith.negf %276 : vector<8x128xf32>
    %285 = math.exp %284 : vector<8x128xf32>
    %cst_160 = arith.constant 1.000000e+00 : f32
    %286 = vector.broadcast %cst_160 : f32 to vector<8x128xf32>
    %287 = arith.addf %286, %285 : vector<8x128xf32>
    %288 = arith.divf %286, %287 : vector<8x128xf32>
    %289 = math.tanh %276 : vector<8x128xf32>
    %290 = vector.extract_strided_slice %288 {offsets = [0, 0], sizes = [8, 32], strides = [1, 1]} : vector<8x128xf32> to vector<8x32xf32>
    %291 = vector.extract_strided_slice %288 {offsets = [0, 32], sizes = [8, 32], strides = [1, 1]} : vector<8x128xf32> to vector<8x32xf32>
    %292 = vector.extract_strided_slice %289 {offsets = [0, 64], sizes = [8, 32], strides = [1, 1]} : vector<8x128xf32> to vector<8x32xf32>
    %293 = vector.extract_strided_slice %288 {offsets = [0, 96], sizes = [8, 32], strides = [1, 1]} : vector<8x128xf32> to vector<8x32xf32>
    %294 = arith.mulf %291, %283 : vector<8x32xf32>
    %295 = arith.mulf %290, %292 : vector<8x32xf32>
    %296 = arith.addf %294, %295 : vector<8x32xf32>
    %297 = math.tanh %296 : vector<8x32xf32>
    %298 = arith.mulf %293, %297 : vector<8x32xf32>
    %c0_161 = arith.constant 0 : index
    %c0_162 = arith.constant 0 : index
    %299 = vector.load %arg8[%c0_161, %c0_162] : memref<8x32xf32, #tpu.memory_space<vmem>>, vector<8x32xf32>
    %300 = arith.negf %282 : vector<8x128xf32>
    %301 = math.exp %300 : vector<8x128xf32>
    %cst_163 = arith.constant 1.000000e+00 : f32
    %302 = vector.broadcast %cst_163 : f32 to vector<8x128xf32>
    %303 = arith.addf %302, %301 : vector<8x128xf32>
    %304 = arith.divf %302, %303 : vector<8x128xf32>
    %305 = math.tanh %282 : vector<8x128xf32>
    %306 = vector.extract_strided_slice %304 {offsets = [0, 0], sizes = [8, 32], strides = [1, 1]} : vector<8x128xf32> to vector<8x32xf32>
    %307 = vector.extract_strided_slice %304 {offsets = [0, 32], sizes = [8, 32], strides = [1, 1]} : vector<8x128xf32> to vector<8x32xf32>
    %308 = vector.extract_strided_slice %305 {offsets = [0, 64], sizes = [8, 32], strides = [1, 1]} : vector<8x128xf32> to vector<8x32xf32>
    %309 = vector.extract_strided_slice %304 {offsets = [0, 96], sizes = [8, 32], strides = [1, 1]} : vector<8x128xf32> to vector<8x32xf32>
    %310 = arith.mulf %307, %299 : vector<8x32xf32>
    %311 = arith.mulf %306, %308 : vector<8x32xf32>
    %312 = arith.addf %310, %311 : vector<8x32xf32>
    %313 = math.tanh %312 : vector<8x32xf32>
    %314 = arith.mulf %309, %313 : vector<8x32xf32>
    %c0_164 = arith.constant 0 : index
    %c0_165 = arith.constant 0 : index
    %315 = vector.load %arg5[%c0_164, %c0_165] : memref<8x32xf32, #tpu.memory_space<vmem>>, vector<8x32xf32>
    tpu.vector_store %arg5[%c0_164, %c0_165], %298 {strides = array<i32>} : memref<8x32xf32, #tpu.memory_space<vmem>>, vector<8x32xf32>,
    %c0_166 = arith.constant 0 : index
    %c0_167 = arith.constant 0 : index
    %316 = vector.load %arg7[%c0_166, %c0_167] : memref<8x32xf32, #tpu.memory_space<vmem>>, vector<8x32xf32>
    tpu.vector_store %arg7[%c0_166, %c0_167], %296 {strides = array<i32>} : memref<8x32xf32, #tpu.memory_space<vmem>>, vector<8x32xf32>,
    %c0_168 = arith.constant 0 : index
    %c0_169 = arith.constant 0 : index
    %317 = vector.load %arg6[%c0_168, %c0_169] : memref<8x32xf32, #tpu.memory_space<vmem>>, vector<8x32xf32>
    tpu.vector_store %arg6[%c0_168, %c0_169], %314 {strides = array<i32>} : memref<8x32xf32, #tpu.memory_space<vmem>>, vector<8x32xf32>,
    %c0_170 = arith.constant 0 : index
    %c0_171 = arith.constant 0 : index
    %318 = vector.load %arg8[%c0_170, %c0_171] : memref<8x32xf32, #tpu.memory_space<vmem>>, vector<8x32xf32>
    tpu.vector_store %arg8[%c0_170, %c0_171], %312 {strides = array<i32>} : memref<8x32xf32, #tpu.memory_space<vmem>>, vector<8x32xf32>,
    %319 = arith.index_cast %c4_i32 : i32 to index
    %c0_172 = arith.constant 0 : index
    %c0_173 = arith.constant 0 : index
    %320 = vector.load %arg4[%319, %c0_172, %c0_173] : memref<8x8x64xf32, #tpu.memory_space<vmem>>, vector<1x8x32xf32>
    %321 = vector.shape_cast %320 : vector<1x8x32xf32> to vector<8x32xf32>
    %322 = vector.shape_cast %298 : vector<8x32xf32> to vector<1x8x32xf32>
    tpu.vector_store %arg4[%319, %c0_172, %c0_173], %322 {strides = array<i32>} : memref<8x8x64xf32, #tpu.memory_space<vmem>>, vector<1x8x32xf32>,
    %c7_i32_174 = arith.constant 7 : i32
    %323 = arith.subi %c7_i32_174, %c4_i32 : i32
    %324 = arith.index_cast %323 : i32 to index
    %c0_175 = arith.constant 0 : index
    %c32_176 = arith.constant 32 : index
    %325 = vector.load %arg4[%324, %c0_175, %c32_176] : memref<8x8x64xf32, #tpu.memory_space<vmem>>, vector<1x8x32xf32>
    %326 = vector.shape_cast %325 : vector<1x8x32xf32> to vector<8x32xf32>
    %327 = vector.shape_cast %314 : vector<8x32xf32> to vector<1x8x32xf32>
    tpu.vector_store %arg4[%324, %c0_175, %c32_176], %327 {strides = array<i32>} : memref<8x8x64xf32, #tpu.memory_space<vmem>>, vector<1x8x32xf32>,
    %c5_i32 = arith.constant 5 : i32
    %c0_177 = arith.constant 0 : index
    %c0_178 = arith.constant 0 : index
    %328 = vector.load %arg5[%c0_177, %c0_178] : memref<8x32xf32, #tpu.memory_space<vmem>>, vector<8x32xf32>
    %329 = arith.truncf %328 : vector<8x32xf32> to vector<8x32xbf16>
    %c0_179 = arith.constant 0 : index
    %c0_180 = arith.constant 0 : index
    %330 = vector.load %arg2[%c0_179, %c0_180] : memref<32x128xbf16, #tpu.memory_space<vmem>>, vector<32x128xbf16>
    %cst_181 = arith.constant dense<0.000000e+00> : vector<8x128xf32>
    %331 = tpu.matmul %329, %330, %cst_181 {dimension_numbers = #tpu.dot_dimension_numbers<[1], [0], [0], [1], [0, 0, 1, 1], [], []>} : vector<8x32xbf16>, vector<32x128xbf16>, vector<8x128xf32> -> vector<8x128xf32>
    %c0_182 = arith.constant 0 : index
    %c0_183 = arith.constant 0 : index
    %332 = vector.load %arg6[%c0_182, %c0_183] : memref<8x32xf32, #tpu.memory_space<vmem>>, vector<8x32xf32>
    %333 = arith.truncf %332 : vector<8x32xf32> to vector<8x32xbf16>
    %c0_184 = arith.constant 0 : index
    %c0_185 = arith.constant 0 : index
    %334 = vector.load %arg3[%c0_184, %c0_185] : memref<32x128xbf16, #tpu.memory_space<vmem>>, vector<32x128xbf16>
    %cst_186 = arith.constant dense<0.000000e+00> : vector<8x128xf32>
    %335 = tpu.matmul %333, %334, %cst_186 {dimension_numbers = #tpu.dot_dimension_numbers<[1], [0], [0], [1], [0, 0, 1, 1], [], []>} : vector<8x32xbf16>, vector<32x128xbf16>, vector<8x128xf32> -> vector<8x128xf32>
    %336 = arith.index_cast %c5_i32 : i32 to index
    %c0_187 = arith.constant 0 : index
    %c0_188 = arith.constant 0 : index
    %337 = vector.load %arg1[%336, %c0_187, %c0_188] : memref<8x8x256xbf16, #tpu.memory_space<vmem>>, vector<1x8x128xbf16>
    %338 = vector.shape_cast %337 : vector<1x8x128xbf16> to vector<8x128xbf16>
    %339 = arith.extf %338 : vector<8x128xbf16> to vector<8x128xf32>
    %340 = arith.addf %339, %331 : vector<8x128xf32>
    %c7_i32_189 = arith.constant 7 : i32
    %341 = arith.subi %c7_i32_189, %c5_i32 : i32
    %342 = arith.index_cast %341 : i32 to index
    %c0_190 = arith.constant 0 : index
    %c128_191 = arith.constant 128 : index
    %343 = vector.load %arg1[%342, %c0_190, %c128_191] : memref<8x8x256xbf16, #tpu.memory_space<vmem>>, vector<1x8x128xbf16>
    %344 = vector.shape_cast %343 : vector<1x8x128xbf16> to vector<8x128xbf16>
    %345 = arith.extf %344 : vector<8x128xbf16> to vector<8x128xf32>
    %346 = arith.addf %345, %335 : vector<8x128xf32>
    %c0_192 = arith.constant 0 : index
    %c0_193 = arith.constant 0 : index
    %347 = vector.load %arg7[%c0_192, %c0_193] : memref<8x32xf32, #tpu.memory_space<vmem>>, vector<8x32xf32>
    %348 = arith.negf %340 : vector<8x128xf32>
    %349 = math.exp %348 : vector<8x128xf32>
    %cst_194 = arith.constant 1.000000e+00 : f32
    %350 = vector.broadcast %cst_194 : f32 to vector<8x128xf32>
    %351 = arith.addf %350, %349 : vector<8x128xf32>
    %352 = arith.divf %350, %351 : vector<8x128xf32>
    %353 = math.tanh %340 : vector<8x128xf32>
    %354 = vector.extract_strided_slice %352 {offsets = [0, 0], sizes = [8, 32], strides = [1, 1]} : vector<8x128xf32> to vector<8x32xf32>
    %355 = vector.extract_strided_slice %352 {offsets = [0, 32], sizes = [8, 32], strides = [1, 1]} : vector<8x128xf32> to vector<8x32xf32>
    %356 = vector.extract_strided_slice %353 {offsets = [0, 64], sizes = [8, 32], strides = [1, 1]} : vector<8x128xf32> to vector<8x32xf32>
    %357 = vector.extract_strided_slice %352 {offsets = [0, 96], sizes = [8, 32], strides = [1, 1]} : vector<8x128xf32> to vector<8x32xf32>
    %358 = arith.mulf %355, %347 : vector<8x32xf32>
    %359 = arith.mulf %354, %356 : vector<8x32xf32>
    %360 = arith.addf %358, %359 : vector<8x32xf32>
    %361 = math.tanh %360 : vector<8x32xf32>
    %362 = arith.mulf %357, %361 : vector<8x32xf32>
    %c0_195 = arith.constant 0 : index
    %c0_196 = arith.constant 0 : index
    %363 = vector.load %arg8[%c0_195, %c0_196] : memref<8x32xf32, #tpu.memory_space<vmem>>, vector<8x32xf32>
    %364 = arith.negf %346 : vector<8x128xf32>
    %365 = math.exp %364 : vector<8x128xf32>
    %cst_197 = arith.constant 1.000000e+00 : f32
    %366 = vector.broadcast %cst_197 : f32 to vector<8x128xf32>
    %367 = arith.addf %366, %365 : vector<8x128xf32>
    %368 = arith.divf %366, %367 : vector<8x128xf32>
    %369 = math.tanh %346 : vector<8x128xf32>
    %370 = vector.extract_strided_slice %368 {offsets = [0, 0], sizes = [8, 32], strides = [1, 1]} : vector<8x128xf32> to vector<8x32xf32>
    %371 = vector.extract_strided_slice %368 {offsets = [0, 32], sizes = [8, 32], strides = [1, 1]} : vector<8x128xf32> to vector<8x32xf32>
    %372 = vector.extract_strided_slice %369 {offsets = [0, 64], sizes = [8, 32], strides = [1, 1]} : vector<8x128xf32> to vector<8x32xf32>
    %373 = vector.extract_strided_slice %368 {offsets = [0, 96], sizes = [8, 32], strides = [1, 1]} : vector<8x128xf32> to vector<8x32xf32>
    %374 = arith.mulf %371, %363 : vector<8x32xf32>
    %375 = arith.mulf %370, %372 : vector<8x32xf32>
    %376 = arith.addf %374, %375 : vector<8x32xf32>
    %377 = math.tanh %376 : vector<8x32xf32>
    %378 = arith.mulf %373, %377 : vector<8x32xf32>
    %c0_198 = arith.constant 0 : index
    %c0_199 = arith.constant 0 : index
    %379 = vector.load %arg5[%c0_198, %c0_199] : memref<8x32xf32, #tpu.memory_space<vmem>>, vector<8x32xf32>
    tpu.vector_store %arg5[%c0_198, %c0_199], %362 {strides = array<i32>} : memref<8x32xf32, #tpu.memory_space<vmem>>, vector<8x32xf32>,
    %c0_200 = arith.constant 0 : index
    %c0_201 = arith.constant 0 : index
    %380 = vector.load %arg7[%c0_200, %c0_201] : memref<8x32xf32, #tpu.memory_space<vmem>>, vector<8x32xf32>
    tpu.vector_store %arg7[%c0_200, %c0_201], %360 {strides = array<i32>} : memref<8x32xf32, #tpu.memory_space<vmem>>, vector<8x32xf32>,
    %c0_202 = arith.constant 0 : index
    %c0_203 = arith.constant 0 : index
    %381 = vector.load %arg6[%c0_202, %c0_203] : memref<8x32xf32, #tpu.memory_space<vmem>>, vector<8x32xf32>
    tpu.vector_store %arg6[%c0_202, %c0_203], %378 {strides = array<i32>} : memref<8x32xf32, #tpu.memory_space<vmem>>, vector<8x32xf32>,
    %c0_204 = arith.constant 0 : index
    %c0_205 = arith.constant 0 : index
    %382 = vector.load %arg8[%c0_204, %c0_205] : memref<8x32xf32, #tpu.memory_space<vmem>>, vector<8x32xf32>
    tpu.vector_store %arg8[%c0_204, %c0_205], %376 {strides = array<i32>} : memref<8x32xf32, #tpu.memory_space<vmem>>, vector<8x32xf32>,
    %383 = arith.index_cast %c5_i32 : i32 to index
    %c0_206 = arith.constant 0 : index
    %c0_207 = arith.constant 0 : index
    %384 = vector.load %arg4[%383, %c0_206, %c0_207] : memref<8x8x64xf32, #tpu.memory_space<vmem>>, vector<1x8x32xf32>
    %385 = vector.shape_cast %384 : vector<1x8x32xf32> to vector<8x32xf32>
    %386 = vector.shape_cast %362 : vector<8x32xf32> to vector<1x8x32xf32>
    tpu.vector_store %arg4[%383, %c0_206, %c0_207], %386 {strides = array<i32>} : memref<8x8x64xf32, #tpu.memory_space<vmem>>, vector<1x8x32xf32>,
    %c7_i32_208 = arith.constant 7 : i32
    %387 = arith.subi %c7_i32_208, %c5_i32 : i32
    %388 = arith.index_cast %387 : i32 to index
    %c0_209 = arith.constant 0 : index
    %c32_210 = arith.constant 32 : index
    %389 = vector.load %arg4[%388, %c0_209, %c32_210] : memref<8x8x64xf32, #tpu.memory_space<vmem>>, vector<1x8x32xf32>
    %390 = vector.shape_cast %389 : vector<1x8x32xf32> to vector<8x32xf32>
    %391 = vector.shape_cast %378 : vector<8x32xf32> to vector<1x8x32xf32>
    tpu.vector_store %arg4[%388, %c0_209, %c32_210], %391 {strides = array<i32>} : memref<8x8x64xf32, #tpu.memory_space<vmem>>, vector<1x8x32xf32>,
    %c6_i32 = arith.constant 6 : i32
    %c0_211 = arith.constant 0 : index
    %c0_212 = arith.constant 0 : index
    %392 = vector.load %arg5[%c0_211, %c0_212] : memref<8x32xf32, #tpu.memory_space<vmem>>, vector<8x32xf32>
    %393 = arith.truncf %392 : vector<8x32xf32> to vector<8x32xbf16>
    %c0_213 = arith.constant 0 : index
    %c0_214 = arith.constant 0 : index
    %394 = vector.load %arg2[%c0_213, %c0_214] : memref<32x128xbf16, #tpu.memory_space<vmem>>, vector<32x128xbf16>
    %cst_215 = arith.constant dense<0.000000e+00> : vector<8x128xf32>
    %395 = tpu.matmul %393, %394, %cst_215 {dimension_numbers = #tpu.dot_dimension_numbers<[1], [0], [0], [1], [0, 0, 1, 1], [], []>} : vector<8x32xbf16>, vector<32x128xbf16>, vector<8x128xf32> -> vector<8x128xf32>
    %c0_216 = arith.constant 0 : index
    %c0_217 = arith.constant 0 : index
    %396 = vector.load %arg6[%c0_216, %c0_217] : memref<8x32xf32, #tpu.memory_space<vmem>>, vector<8x32xf32>
    %397 = arith.truncf %396 : vector<8x32xf32> to vector<8x32xbf16>
    %c0_218 = arith.constant 0 : index
    %c0_219 = arith.constant 0 : index
    %398 = vector.load %arg3[%c0_218, %c0_219] : memref<32x128xbf16, #tpu.memory_space<vmem>>, vector<32x128xbf16>
    %cst_220 = arith.constant dense<0.000000e+00> : vector<8x128xf32>
    %399 = tpu.matmul %397, %398, %cst_220 {dimension_numbers = #tpu.dot_dimension_numbers<[1], [0], [0], [1], [0, 0, 1, 1], [], []>} : vector<8x32xbf16>, vector<32x128xbf16>, vector<8x128xf32> -> vector<8x128xf32>
    %400 = arith.index_cast %c6_i32 : i32 to index
    %c0_221 = arith.constant 0 : index
    %c0_222 = arith.constant 0 : index
    %401 = vector.load %arg1[%400, %c0_221, %c0_222] : memref<8x8x256xbf16, #tpu.memory_space<vmem>>, vector<1x8x128xbf16>
    %402 = vector.shape_cast %401 : vector<1x8x128xbf16> to vector<8x128xbf16>
    %403 = arith.extf %402 : vector<8x128xbf16> to vector<8x128xf32>
    %404 = arith.addf %403, %395 : vector<8x128xf32>
    %c7_i32_223 = arith.constant 7 : i32
    %405 = arith.subi %c7_i32_223, %c6_i32 : i32
    %406 = arith.index_cast %405 : i32 to index
    %c0_224 = arith.constant 0 : index
    %c128_225 = arith.constant 128 : index
    %407 = vector.load %arg1[%406, %c0_224, %c128_225] : memref<8x8x256xbf16, #tpu.memory_space<vmem>>, vector<1x8x128xbf16>
    %408 = vector.shape_cast %407 : vector<1x8x128xbf16> to vector<8x128xbf16>
    %409 = arith.extf %408 : vector<8x128xbf16> to vector<8x128xf32>
    %410 = arith.addf %409, %399 : vector<8x128xf32>
    %c0_226 = arith.constant 0 : index
    %c0_227 = arith.constant 0 : index
    %411 = vector.load %arg7[%c0_226, %c0_227] : memref<8x32xf32, #tpu.memory_space<vmem>>, vector<8x32xf32>
    %412 = arith.negf %404 : vector<8x128xf32>
    %413 = math.exp %412 : vector<8x128xf32>
    %cst_228 = arith.constant 1.000000e+00 : f32
    %414 = vector.broadcast %cst_228 : f32 to vector<8x128xf32>
    %415 = arith.addf %414, %413 : vector<8x128xf32>
    %416 = arith.divf %414, %415 : vector<8x128xf32>
    %417 = math.tanh %404 : vector<8x128xf32>
    %418 = vector.extract_strided_slice %416 {offsets = [0, 0], sizes = [8, 32], strides = [1, 1]} : vector<8x128xf32> to vector<8x32xf32>
    %419 = vector.extract_strided_slice %416 {offsets = [0, 32], sizes = [8, 32], strides = [1, 1]} : vector<8x128xf32> to vector<8x32xf32>
    %420 = vector.extract_strided_slice %417 {offsets = [0, 64], sizes = [8, 32], strides = [1, 1]} : vector<8x128xf32> to vector<8x32xf32>
    %421 = vector.extract_strided_slice %416 {offsets = [0, 96], sizes = [8, 32], strides = [1, 1]} : vector<8x128xf32> to vector<8x32xf32>
    %422 = arith.mulf %419, %411 : vector<8x32xf32>
    %423 = arith.mulf %418, %420 : vector<8x32xf32>
    %424 = arith.addf %422, %423 : vector<8x32xf32>
    %425 = math.tanh %424 : vector<8x32xf32>
    %426 = arith.mulf %421, %425 : vector<8x32xf32>
    %c0_229 = arith.constant 0 : index
    %c0_230 = arith.constant 0 : index
    %427 = vector.load %arg8[%c0_229, %c0_230] : memref<8x32xf32, #tpu.memory_space<vmem>>, vector<8x32xf32>
    %428 = arith.negf %410 : vector<8x128xf32>
    %429 = math.exp %428 : vector<8x128xf32>
    %cst_231 = arith.constant 1.000000e+00 : f32
    %430 = vector.broadcast %cst_231 : f32 to vector<8x128xf32>
    %431 = arith.addf %430, %429 : vector<8x128xf32>
    %432 = arith.divf %430, %431 : vector<8x128xf32>
    %433 = math.tanh %410 : vector<8x128xf32>
    %434 = vector.extract_strided_slice %432 {offsets = [0, 0], sizes = [8, 32], strides = [1, 1]} : vector<8x128xf32> to vector<8x32xf32>
    %435 = vector.extract_strided_slice %432 {offsets = [0, 32], sizes = [8, 32], strides = [1, 1]} : vector<8x128xf32> to vector<8x32xf32>
    %436 = vector.extract_strided_slice %433 {offsets = [0, 64], sizes = [8, 32], strides = [1, 1]} : vector<8x128xf32> to vector<8x32xf32>
    %437 = vector.extract_strided_slice %432 {offsets = [0, 96], sizes = [8, 32], strides = [1, 1]} : vector<8x128xf32> to vector<8x32xf32>
    %438 = arith.mulf %435, %427 : vector<8x32xf32>
    %439 = arith.mulf %434, %436 : vector<8x32xf32>
    %440 = arith.addf %438, %439 : vector<8x32xf32>
    %441 = math.tanh %440 : vector<8x32xf32>
    %442 = arith.mulf %437, %441 : vector<8x32xf32>
    %c0_232 = arith.constant 0 : index
    %c0_233 = arith.constant 0 : index
    %443 = vector.load %arg5[%c0_232, %c0_233] : memref<8x32xf32, #tpu.memory_space<vmem>>, vector<8x32xf32>
    tpu.vector_store %arg5[%c0_232, %c0_233], %426 {strides = array<i32>} : memref<8x32xf32, #tpu.memory_space<vmem>>, vector<8x32xf32>,
    %c0_234 = arith.constant 0 : index
    %c0_235 = arith.constant 0 : index
    %444 = vector.load %arg7[%c0_234, %c0_235] : memref<8x32xf32, #tpu.memory_space<vmem>>, vector<8x32xf32>
    tpu.vector_store %arg7[%c0_234, %c0_235], %424 {strides = array<i32>} : memref<8x32xf32, #tpu.memory_space<vmem>>, vector<8x32xf32>,
    %c0_236 = arith.constant 0 : index
    %c0_237 = arith.constant 0 : index
    %445 = vector.load %arg6[%c0_236, %c0_237] : memref<8x32xf32, #tpu.memory_space<vmem>>, vector<8x32xf32>
    tpu.vector_store %arg6[%c0_236, %c0_237], %442 {strides = array<i32>} : memref<8x32xf32, #tpu.memory_space<vmem>>, vector<8x32xf32>,
    %c0_238 = arith.constant 0 : index
    %c0_239 = arith.constant 0 : index
    %446 = vector.load %arg8[%c0_238, %c0_239] : memref<8x32xf32, #tpu.memory_space<vmem>>, vector<8x32xf32>
    tpu.vector_store %arg8[%c0_238, %c0_239], %440 {strides = array<i32>} : memref<8x32xf32, #tpu.memory_space<vmem>>, vector<8x32xf32>,
    %447 = arith.index_cast %c6_i32 : i32 to index
    %c0_240 = arith.constant 0 : index
    %c0_241 = arith.constant 0 : index
    %448 = vector.load %arg4[%447, %c0_240, %c0_241] : memref<8x8x64xf32, #tpu.memory_space<vmem>>, vector<1x8x32xf32>
    %449 = vector.shape_cast %448 : vector<1x8x32xf32> to vector<8x32xf32>
    %450 = vector.shape_cast %426 : vector<8x32xf32> to vector<1x8x32xf32>
    tpu.vector_store %arg4[%447, %c0_240, %c0_241], %450 {strides = array<i32>} : memref<8x8x64xf32, #tpu.memory_space<vmem>>, vector<1x8x32xf32>,
    %c7_i32_242 = arith.constant 7 : i32
    %451 = arith.subi %c7_i32_242, %c6_i32 : i32
    %452 = arith.index_cast %451 : i32 to index
    %c0_243 = arith.constant 0 : index
    %c32_244 = arith.constant 32 : index
    %453 = vector.load %arg4[%452, %c0_243, %c32_244] : memref<8x8x64xf32, #tpu.memory_space<vmem>>, vector<1x8x32xf32>
    %454 = vector.shape_cast %453 : vector<1x8x32xf32> to vector<8x32xf32>
    %455 = vector.shape_cast %442 : vector<8x32xf32> to vector<1x8x32xf32>
    tpu.vector_store %arg4[%452, %c0_243, %c32_244], %455 {strides = array<i32>} : memref<8x8x64xf32, #tpu.memory_space<vmem>>, vector<1x8x32xf32>,
    %c7_i32_245 = arith.constant 7 : i32
    %c0_246 = arith.constant 0 : index
    %c0_247 = arith.constant 0 : index
    %456 = vector.load %arg5[%c0_246, %c0_247] : memref<8x32xf32, #tpu.memory_space<vmem>>, vector<8x32xf32>
    %457 = arith.truncf %456 : vector<8x32xf32> to vector<8x32xbf16>
    %c0_248 = arith.constant 0 : index
    %c0_249 = arith.constant 0 : index
    %458 = vector.load %arg2[%c0_248, %c0_249] : memref<32x128xbf16, #tpu.memory_space<vmem>>, vector<32x128xbf16>
    %cst_250 = arith.constant dense<0.000000e+00> : vector<8x128xf32>
    %459 = tpu.matmul %457, %458, %cst_250 {dimension_numbers = #tpu.dot_dimension_numbers<[1], [0], [0], [1], [0, 0, 1, 1], [], []>} : vector<8x32xbf16>, vector<32x128xbf16>, vector<8x128xf32> -> vector<8x128xf32>
    %c0_251 = arith.constant 0 : index
    %c0_252 = arith.constant 0 : index
    %460 = vector.load %arg6[%c0_251, %c0_252] : memref<8x32xf32, #tpu.memory_space<vmem>>, vector<8x32xf32>
    %461 = arith.truncf %460 : vector<8x32xf32> to vector<8x32xbf16>
    %c0_253 = arith.constant 0 : index
    %c0_254 = arith.constant 0 : index
    %462 = vector.load %arg3[%c0_253, %c0_254] : memref<32x128xbf16, #tpu.memory_space<vmem>>, vector<32x128xbf16>
    %cst_255 = arith.constant dense<0.000000e+00> : vector<8x128xf32>
    %463 = tpu.matmul %461, %462, %cst_255 {dimension_numbers = #tpu.dot_dimension_numbers<[1], [0], [0], [1], [0, 0, 1, 1], [], []>} : vector<8x32xbf16>, vector<32x128xbf16>, vector<8x128xf32> -> vector<8x128xf32>
    %464 = arith.index_cast %c7_i32_245 : i32 to index
    %c0_256 = arith.constant 0 : index
    %c0_257 = arith.constant 0 : index
    %465 = vector.load %arg1[%464, %c0_256, %c0_257] : memref<8x8x256xbf16, #tpu.memory_space<vmem>>, vector<1x8x128xbf16>
    %466 = vector.shape_cast %465 : vector<1x8x128xbf16> to vector<8x128xbf16>
    %467 = arith.extf %466 : vector<8x128xbf16> to vector<8x128xf32>
    %468 = arith.addf %467, %459 : vector<8x128xf32>
    %c7_i32_258 = arith.constant 7 : i32
    %469 = arith.subi %c7_i32_258, %c7_i32_245 : i32
    %470 = arith.index_cast %469 : i32 to index
    %c0_259 = arith.constant 0 : index
    %c128_260 = arith.constant 128 : index
    %471 = vector.load %arg1[%470, %c0_259, %c128_260] : memref<8x8x256xbf16, #tpu.memory_space<vmem>>, vector<1x8x128xbf16>
    %472 = vector.shape_cast %471 : vector<1x8x128xbf16> to vector<8x128xbf16>
    %473 = arith.extf %472 : vector<8x128xbf16> to vector<8x128xf32>
    %474 = arith.addf %473, %463 : vector<8x128xf32>
    %c0_261 = arith.constant 0 : index
    %c0_262 = arith.constant 0 : index
    %475 = vector.load %arg7[%c0_261, %c0_262] : memref<8x32xf32, #tpu.memory_space<vmem>>, vector<8x32xf32>
    %476 = arith.negf %468 : vector<8x128xf32>
    %477 = math.exp %476 : vector<8x128xf32>
    %cst_263 = arith.constant 1.000000e+00 : f32
    %478 = vector.broadcast %cst_263 : f32 to vector<8x128xf32>
    %479 = arith.addf %478, %477 : vector<8x128xf32>
    %480 = arith.divf %478, %479 : vector<8x128xf32>
    %481 = math.tanh %468 : vector<8x128xf32>
    %482 = vector.extract_strided_slice %480 {offsets = [0, 0], sizes = [8, 32], strides = [1, 1]} : vector<8x128xf32> to vector<8x32xf32>
    %483 = vector.extract_strided_slice %480 {offsets = [0, 32], sizes = [8, 32], strides = [1, 1]} : vector<8x128xf32> to vector<8x32xf32>
    %484 = vector.extract_strided_slice %481 {offsets = [0, 64], sizes = [8, 32], strides = [1, 1]} : vector<8x128xf32> to vector<8x32xf32>
    %485 = vector.extract_strided_slice %480 {offsets = [0, 96], sizes = [8, 32], strides = [1, 1]} : vector<8x128xf32> to vector<8x32xf32>
    %486 = arith.mulf %483, %475 : vector<8x32xf32>
    %487 = arith.mulf %482, %484 : vector<8x32xf32>
    %488 = arith.addf %486, %487 : vector<8x32xf32>
    %489 = math.tanh %488 : vector<8x32xf32>
    %490 = arith.mulf %485, %489 : vector<8x32xf32>
    %c0_264 = arith.constant 0 : index
    %c0_265 = arith.constant 0 : index
    %491 = vector.load %arg8[%c0_264, %c0_265] : memref<8x32xf32, #tpu.memory_space<vmem>>, vector<8x32xf32>
    %492 = arith.negf %474 : vector<8x128xf32>
    %493 = math.exp %492 : vector<8x128xf32>
    %cst_266 = arith.constant 1.000000e+00 : f32
    %494 = vector.broadcast %cst_266 : f32 to vector<8x128xf32>
    %495 = arith.addf %494, %493 : vector<8x128xf32>
    %496 = arith.divf %494, %495 : vector<8x128xf32>
    %497 = math.tanh %474 : vector<8x128xf32>
    %498 = vector.extract_strided_slice %496 {offsets = [0, 0], sizes = [8, 32], strides = [1, 1]} : vector<8x128xf32> to vector<8x32xf32>
    %499 = vector.extract_strided_slice %496 {offsets = [0, 32], sizes = [8, 32], strides = [1, 1]} : vector<8x128xf32> to vector<8x32xf32>
    %500 = vector.extract_strided_slice %497 {offsets = [0, 64], sizes = [8, 32], strides = [1, 1]} : vector<8x128xf32> to vector<8x32xf32>
    %501 = vector.extract_strided_slice %496 {offsets = [0, 96], sizes = [8, 32], strides = [1, 1]} : vector<8x128xf32> to vector<8x32xf32>
    %502 = arith.mulf %499, %491 : vector<8x32xf32>
    %503 = arith.mulf %498, %500 : vector<8x32xf32>
    %504 = arith.addf %502, %503 : vector<8x32xf32>
    %505 = math.tanh %504 : vector<8x32xf32>
    %506 = arith.mulf %501, %505 : vector<8x32xf32>
    %c0_267 = arith.constant 0 : index
    %c0_268 = arith.constant 0 : index
    %507 = vector.load %arg5[%c0_267, %c0_268] : memref<8x32xf32, #tpu.memory_space<vmem>>, vector<8x32xf32>
    tpu.vector_store %arg5[%c0_267, %c0_268], %490 {strides = array<i32>} : memref<8x32xf32, #tpu.memory_space<vmem>>, vector<8x32xf32>,
    %c0_269 = arith.constant 0 : index
    %c0_270 = arith.constant 0 : index
    %508 = vector.load %arg7[%c0_269, %c0_270] : memref<8x32xf32, #tpu.memory_space<vmem>>, vector<8x32xf32>
    tpu.vector_store %arg7[%c0_269, %c0_270], %488 {strides = array<i32>} : memref<8x32xf32, #tpu.memory_space<vmem>>, vector<8x32xf32>,
    %c0_271 = arith.constant 0 : index
    %c0_272 = arith.constant 0 : index
    %509 = vector.load %arg6[%c0_271, %c0_272] : memref<8x32xf32, #tpu.memory_space<vmem>>, vector<8x32xf32>
    tpu.vector_store %arg6[%c0_271, %c0_272], %506 {strides = array<i32>} : memref<8x32xf32, #tpu.memory_space<vmem>>, vector<8x32xf32>,
    %c0_273 = arith.constant 0 : index
    %c0_274 = arith.constant 0 : index
    %510 = vector.load %arg8[%c0_273, %c0_274] : memref<8x32xf32, #tpu.memory_space<vmem>>, vector<8x32xf32>
    tpu.vector_store %arg8[%c0_273, %c0_274], %504 {strides = array<i32>} : memref<8x32xf32, #tpu.memory_space<vmem>>, vector<8x32xf32>,
    %511 = arith.index_cast %c7_i32_245 : i32 to index
    %c0_275 = arith.constant 0 : index
    %c0_276 = arith.constant 0 : index
    %512 = vector.load %arg4[%511, %c0_275, %c0_276] : memref<8x8x64xf32, #tpu.memory_space<vmem>>, vector<1x8x32xf32>
    %513 = vector.shape_cast %512 : vector<1x8x32xf32> to vector<8x32xf32>
    %514 = vector.shape_cast %490 : vector<8x32xf32> to vector<1x8x32xf32>
    tpu.vector_store %arg4[%511, %c0_275, %c0_276], %514 {strides = array<i32>} : memref<8x8x64xf32, #tpu.memory_space<vmem>>, vector<1x8x32xf32>,
    %c7_i32_277 = arith.constant 7 : i32
    %515 = arith.subi %c7_i32_277, %c7_i32_245 : i32
    %516 = arith.index_cast %515 : i32 to index
    %c0_278 = arith.constant 0 : index
    %c32_279 = arith.constant 32 : index
    %517 = vector.load %arg4[%516, %c0_278, %c32_279] : memref<8x8x64xf32, #tpu.memory_space<vmem>>, vector<1x8x32xf32>
    %518 = vector.shape_cast %517 : vector<1x8x32xf32> to vector<8x32xf32>
    %519 = vector.shape_cast %506 : vector<8x32xf32> to vector<1x8x32xf32>
    tpu.vector_store %arg4[%516, %c0_278, %c32_279], %519 {strides = array<i32>} : memref<8x8x64xf32, #tpu.memory_space<vmem>>, vector<1x8x32xf32>,
    %c8_i32 = arith.constant 8 : i32
    return
  }
  func.func @transform_0(%arg0: i32) -> (i32, i32, i32) {
    %c0_i32 = arith.constant 0 : i32
    %c0_i32_0 = arith.constant 0 : i32
    %c0_i32_1 = arith.constant 0 : i32
    return %c0_i32, %arg0, %c0_i32_0 : i32, i32, i32
  }
  func.func @transform_1(%arg0: i32) -> (i32, i32) {
    %c0_i32 = arith.constant 0 : i32
    %c0_i32_0 = arith.constant 0 : i32
    %c0_i32_1 = arith.constant 0 : i32
    return %c0_i32, %c0_i32_0 : i32, i32
  }
  func.func @transform_2(%arg0: i32) -> (i32, i32) {
    %c0_i32 = arith.constant 0 : i32
    %c0_i32_0 = arith.constant 0 : i32
    %c0_i32_1 = arith.constant 0 : i32
    return %c0_i32, %c0_i32_0 : i32, i32
  }
  func.func @transform_3(%arg0: i32) -> (i32, i32, i32) {
    %c0_i32 = arith.constant 0 : i32
    %c0_i32_0 = arith.constant 0 : i32
    %c0_i32_1 = arith.constant 0 : i32
    return %c0_i32, %arg0, %c0_i32_0 : i32, i32, i32
  }
}

module attributes {stable_mosaic.version = 11 : i64} {
  func.func @_dense_kernel(%arg0: i32, %arg1: i32, %arg2: memref<64x32xf32, #tpu.memory_space<vmem>>, %arg3: memref<32x256xbf16, #tpu.memory_space<vmem>>, %arg4: memref<1x256xf32, #tpu.memory_space<vmem>>, %arg5: memref<64x256xbf16, #tpu.memory_space<vmem>>) attributes {dimension_semantics = [#tpu.dimension_semantics<parallel>, #tpu.dimension_semantics<parallel>], iteration_bounds = array<i64: 1, 1>, scalar_prefetch = 0 : i64, scratch_operands = 0 : i64, tpu.core_type = #tpu.core_type<tc>, window_params = [{transform_indices = @transform_0, window_bounds = array<i64: 64, 32>}, {transform_indices = @transform_1, window_bounds = array<i64: 32, 256>}, {transform_indices = @transform_2, window_bounds = array<i64: 1, 256>}, {transform_indices = @transform_3, window_bounds = array<i64: 64, 256>}]} {
    %c0 = arith.constant 0 : index
    %c0_0 = arith.constant 0 : index
    %0 = vector.load %arg2[%c0, %c0_0] : memref<64x32xf32, #tpu.memory_space<vmem>>, vector<64x32xf32>
    %1 = arith.truncf %0 : vector<64x32xf32> to vector<64x32xbf16>
    %c0_1 = arith.constant 0 : index
    %c0_2 = arith.constant 0 : index
    %2 = vector.load %arg3[%c0_1, %c0_2] : memref<32x256xbf16, #tpu.memory_space<vmem>>, vector<32x256xbf16>
    %cst = arith.constant dense<0.000000e+00> : vector<64x256xf32>
    %3 = tpu.matmul %1, %2, %cst {dimension_numbers = #tpu.dot_dimension_numbers<[1], [0], [0], [1], [0, 0, 1, 1], [], []>} : vector<64x32xbf16>, vector<32x256xbf16>, vector<64x256xf32> -> vector<64x256xf32>
    %c0_3 = arith.constant 0 : index
    %c0_4 = arith.constant 0 : index
    %4 = vector.load %arg4[%c0_3, %c0_4] : memref<1x256xf32, #tpu.memory_space<vmem>>, vector<1x256xf32>
    %5 = vector.broadcast %4 : vector<1x256xf32> to vector<64x256xf32>
    %6 = arith.addf %3, %5 : vector<64x256xf32>
    %7 = arith.truncf %6 : vector<64x256xf32> to vector<64x256xbf16>
    %c0_5 = arith.constant 0 : index
    %c0_6 = arith.constant 0 : index
    %8 = vector.load %arg5[%c0_5, %c0_6] : memref<64x256xbf16, #tpu.memory_space<vmem>>, vector<64x256xbf16>
    tpu.vector_store %arg5[%c0_5, %c0_6], %7 {strides = array<i32>} : memref<64x256xbf16, #tpu.memory_space<vmem>>, vector<64x256xbf16>,
    return
  }
  func.func @transform_0(%arg0: i32, %arg1: i32) -> (i32, i32) {
    %c0_i32 = arith.constant 0 : i32
    %c0_i32_0 = arith.constant 0 : i32
    return %arg0, %c0_i32 : i32, i32
  }
  func.func @transform_1(%arg0: i32, %arg1: i32) -> (i32, i32) {
    %c0_i32 = arith.constant 0 : i32
    %c0_i32_0 = arith.constant 0 : i32
    return %c0_i32, %arg1 : i32, i32
  }
  func.func @transform_2(%arg0: i32, %arg1: i32) -> (i32, i32) {
    %c0_i32 = arith.constant 0 : i32
    %c0_i32_0 = arith.constant 0 : i32
    return %c0_i32, %arg1 : i32, i32
  }
  func.func @transform_3(%arg0: i32, %arg1: i32) -> (i32, i32) {
    %c0_i32 = arith.constant 0 : i32
    return %arg0, %arg1 : i32, i32
  }
}

module attributes {stable_mosaic.version = 11 : i64} {
  func.func @_dense_kernel(%arg0: i32, %arg1: i32, %arg2: memref<16x64xf32, #tpu.memory_space<vmem>>, %arg3: memref<64x512xbf16, #tpu.memory_space<vmem>>, %arg4: memref<1x512xf32, #tpu.memory_space<vmem>>, %arg5: memref<16x512xf32, #tpu.memory_space<vmem>>) attributes {dimension_semantics = [#tpu.dimension_semantics<parallel>, #tpu.dimension_semantics<parallel>], iteration_bounds = array<i64: 1, 1>, scalar_prefetch = 0 : i64, scratch_operands = 0 : i64, tpu.core_type = #tpu.core_type<tc>, window_params = [{transform_indices = @transform_0, window_bounds = array<i64: 16, 64>}, {transform_indices = @transform_1, window_bounds = array<i64: 64, 512>}, {transform_indices = @transform_2, window_bounds = array<i64: 1, 512>}, {transform_indices = @transform_3, window_bounds = array<i64: 16, 512>}]} {
    %c0 = arith.constant 0 : index
    %c0_0 = arith.constant 0 : index
    %0 = vector.load %arg2[%c0, %c0_0] : memref<16x64xf32, #tpu.memory_space<vmem>>, vector<16x64xf32>
    %1 = arith.truncf %0 : vector<16x64xf32> to vector<16x64xbf16>
    %c0_1 = arith.constant 0 : index
    %c0_2 = arith.constant 0 : index
    %2 = vector.load %arg3[%c0_1, %c0_2] : memref<64x512xbf16, #tpu.memory_space<vmem>>, vector<64x512xbf16>
    %cst = arith.constant dense<0.000000e+00> : vector<16x512xf32>
    %3 = tpu.matmul %1, %2, %cst {dimension_numbers = #tpu.dot_dimension_numbers<[1], [0], [0], [1], [0, 0, 1, 1], [], []>} : vector<16x64xbf16>, vector<64x512xbf16>, vector<16x512xf32> -> vector<16x512xf32>
    %c0_3 = arith.constant 0 : index
    %c0_4 = arith.constant 0 : index
    %4 = vector.load %arg4[%c0_3, %c0_4] : memref<1x512xf32, #tpu.memory_space<vmem>>, vector<1x512xf32>
    %5 = vector.broadcast %4 : vector<1x512xf32> to vector<16x512xf32>
    %6 = arith.addf %3, %5 : vector<16x512xf32>
    %c0_5 = arith.constant 0 : index
    %c0_6 = arith.constant 0 : index
    %7 = vector.load %arg5[%c0_5, %c0_6] : memref<16x512xf32, #tpu.memory_space<vmem>>, vector<16x512xf32>
    tpu.vector_store %arg5[%c0_5, %c0_6], %6 {strides = array<i32>} : memref<16x512xf32, #tpu.memory_space<vmem>>, vector<16x512xf32>,
    return
  }
  func.func @transform_0(%arg0: i32, %arg1: i32) -> (i32, i32) {
    %c0_i32 = arith.constant 0 : i32
    %c0_i32_0 = arith.constant 0 : i32
    return %arg0, %c0_i32 : i32, i32
  }
  func.func @transform_1(%arg0: i32, %arg1: i32) -> (i32, i32) {
    %c0_i32 = arith.constant 0 : i32
    %c0_i32_0 = arith.constant 0 : i32
    return %c0_i32, %arg1 : i32, i32
  }
  func.func @transform_2(%arg0: i32, %arg1: i32) -> (i32, i32) {
    %c0_i32 = arith.constant 0 : i32
    %c0_i32_0 = arith.constant 0 : i32
    return %c0_i32, %arg1 : i32, i32
  }
  func.func @transform_3(%arg0: i32, %arg1: i32) -> (i32, i32) {
    %c0_i32 = arith.constant 0 : i32
    return %arg0, %arg1 : i32, i32
  }
}

module attributes {stable_mosaic.version = 11 : i64} {
  func.func @_gp_kernel(%arg0: i32, %arg1: memref<1x8x512xf32, #tpu.memory_space<vmem>>, %arg2: memref<8x512xf32, #tpu.memory_space<vmem>>, %arg3: memref<8x512xf32, #tpu.memory_space<vmem>>, %arg4: memref<8x512xf32, #tpu.memory_space<vmem>>, %arg5: memref<8x8xf32, #tpu.memory_space<vmem>>, %arg6: memref<1x8x1xf32, #tpu.memory_space<vmem>>, %arg7: memref<1x1x8xf32, #tpu.memory_space<vmem>>, %arg8: memref<1x4x8x8xf32, #tpu.memory_space<vmem>>) attributes {dimension_semantics = [#tpu.dimension_semantics<parallel>], iteration_bounds = array<i64: 2>, scalar_prefetch = 0 : i64, scratch_operands = 0 : i64, tpu.core_type = #tpu.core_type<tc>, window_params = [{transform_indices = @transform_0, window_bounds = array<i64: 1, 8, 512>}, {pipeline_mode = #tpu.pipeline_mode<synchronous>, transform_indices = @transform_1, window_bounds = array<i64: 8, 512>}, {pipeline_mode = #tpu.pipeline_mode<synchronous>, transform_indices = @transform_2, window_bounds = array<i64: 8, 512>}, {pipeline_mode = #tpu.pipeline_mode<synchronous>, transform_indices = @transform_3, window_bounds = array<i64: 8, 512>}, {pipeline_mode = #tpu.pipeline_mode<synchronous>, transform_indices = @transform_4, window_bounds = array<i64: 8, 8>}, {transform_indices = @transform_5, window_bounds = array<i64: 1, 8, 1>}, {transform_indices = @transform_6, window_bounds = array<i64: 1, 1, 8>}, {transform_indices = @transform_7, window_bounds = array<i64: 1, 4, 8, 8>}]} {
    %c0 = arith.constant 0 : index
    %c0_0 = arith.constant 0 : index
    %c0_1 = arith.constant 0 : index
    %0 = vector.load %arg1[%c0, %c0_0, %c0_1] : memref<1x8x512xf32, #tpu.memory_space<vmem>>, vector<1x8x512xf32>
    %1 = vector.shape_cast %0 : vector<1x8x512xf32> to vector<8x512xf32>
    %c511_i32 = arith.constant 511 : i32
    %2 = tpu.dynamic_rotate %1 by %c511_i32 dim 1 : vector<8x512xf32>, i32 -> vector<8x512xf32>
    %c1_i32 = arith.constant 1 : i32
    %3 = tpu.dynamic_rotate %1 by %c1_i32 dim 1 : vector<8x512xf32>, i32 -> vector<8x512xf32>
    %c0_2 = arith.constant 0 : index
    %c0_3 = arith.constant 0 : index
    %4 = vector.load %arg2[%c0_2, %c0_3] : memref<8x512xf32, #tpu.memory_space<vmem>>, vector<8x512xf32>
    %5 = arith.mulf %1, %4 : vector<8x512xf32>
    %c0_4 = arith.constant 0 : index
    %c0_5 = arith.constant 0 : index
    %6 = vector.load %arg3[%c0_4, %c0_5] : memref<8x512xf32, #tpu.memory_space<vmem>>, vector<8x512xf32>
    %7 = arith.mulf %2, %6 : vector<8x512xf32>
    %8 = arith.addf %5, %7 : vector<8x512xf32>
    %c0_6 = arith.constant 0 : index
    %c0_7 = arith.constant 0 : index
    %9 = vector.load %arg4[%c0_6, %c0_7] : memref<8x512xf32, #tpu.memory_space<vmem>>, vector<8x512xf32>
    %10 = arith.mulf %3, %9 : vector<8x512xf32>
    %11 = arith.addf %8, %10 : vector<8x512xf32>
    %c0_8 = arith.constant 0 : index
    %c0_9 = arith.constant 0 : index
    %c0_10 = arith.constant 0 : index
    %12 = vector.load %arg6[%c0_8, %c0_9, %c0_10] : memref<1x8x1xf32, #tpu.memory_space<vmem>>, vector<1x8x1xf32>
    %13 = vector.shape_cast %12 : vector<1x8x1xf32> to vector<8x1xf32>
    %14 = vector.broadcast %13 : vector<8x1xf32> to vector<8x512xf32>
    %15 = arith.mulf %11, %14 : vector<8x512xf32>
    %c0_11 = arith.constant 0 : index
    %c0_12 = arith.constant 0 : index
    %c0_13 = arith.constant 0 : index
    %16 = vector.load %arg6[%c0_11, %c0_12, %c0_13] : memref<1x8x1xf32, #tpu.memory_space<vmem>>, vector<1x8x1xf32>
    %17 = vector.shape_cast %16 : vector<1x8x1xf32> to vector<8x1xf32>
    %c0_14 = arith.constant 0 : index
    %c0_15 = arith.constant 0 : index
    %c0_16 = arith.constant 0 : index
    %18 = vector.load %arg7[%c0_14, %c0_15, %c0_16] : memref<1x1x8xf32, #tpu.memory_space<vmem>>, vector<1x1x8xf32>
    %19 = vector.shape_cast %18 : vector<1x1x8xf32> to vector<1x8xf32>
    %20 = vector.broadcast %17 : vector<8x1xf32> to vector<8x8xf32>
    %21 = vector.broadcast %19 : vector<1x8xf32> to vector<8x8xf32>
    %22 = arith.mulf %20, %21 : vector<8x8xf32>
    %cst = arith.constant 1.250000e+11 : f32
    %23 = vector.broadcast %cst : f32 to vector<8x8xf32>
    %24 = arith.mulf %22, %23 : vector<8x8xf32>
    %c0_17 = arith.constant 0 : index
    %c0_18 = arith.constant 0 : index
    %25 = vector.load %arg5[%c0_17, %c0_18] : memref<8x8xf32, #tpu.memory_space<vmem>>, vector<8x8xf32>
    %26 = arith.addf %24, %25 : vector<8x8xf32>
    %27 = vector.extract_strided_slice %15 {offsets = [0, 0], sizes = [8, 64], strides = [1, 1]} : vector<8x512xf32> to vector<8x64xf32>
    %28 = arith.truncf %27 : vector<8x64xf32> to vector<8x64xbf16>
    %29 = vector.extract_strided_slice %15 {offsets = [0, 64], sizes = [8, 64], strides = [1, 1]} : vector<8x512xf32> to vector<8x64xf32>
    %30 = arith.truncf %29 : vector<8x64xf32> to vector<8x64xbf16>
    %cst_19 = arith.constant dense<0.000000e+00> : vector<8x8xf32>
    %31 = tpu.matmul %28, %30, %cst_19 {dimension_numbers = #tpu.dot_dimension_numbers<[1], [1], [0], [0], [0, 0, 1, 0], [], []>} : vector<8x64xbf16>, vector<8x64xbf16>, vector<8x8xf32> -> vector<8x8xf32>
    %32 = arith.addf %31, %26 : vector<8x8xf32>
    %33 = vector.extract_strided_slice %15 {offsets = [0, 128], sizes = [8, 64], strides = [1, 1]} : vector<8x512xf32> to vector<8x64xf32>
    %34 = arith.truncf %33 : vector<8x64xf32> to vector<8x64xbf16>
    %35 = vector.extract_strided_slice %15 {offsets = [0, 192], sizes = [8, 64], strides = [1, 1]} : vector<8x512xf32> to vector<8x64xf32>
    %36 = arith.truncf %35 : vector<8x64xf32> to vector<8x64xbf16>
    %cst_20 = arith.constant dense<0.000000e+00> : vector<8x8xf32>
    %37 = tpu.matmul %34, %36, %cst_20 {dimension_numbers = #tpu.dot_dimension_numbers<[1], [1], [0], [0], [0, 0, 1, 0], [], []>} : vector<8x64xbf16>, vector<8x64xbf16>, vector<8x8xf32> -> vector<8x8xf32>
    %38 = arith.addf %37, %26 : vector<8x8xf32>
    %39 = vector.extract_strided_slice %15 {offsets = [0, 256], sizes = [8, 64], strides = [1, 1]} : vector<8x512xf32> to vector<8x64xf32>
    %40 = arith.truncf %39 : vector<8x64xf32> to vector<8x64xbf16>
    %41 = vector.extract_strided_slice %15 {offsets = [0, 320], sizes = [8, 64], strides = [1, 1]} : vector<8x512xf32> to vector<8x64xf32>
    %42 = arith.truncf %41 : vector<8x64xf32> to vector<8x64xbf16>
    %cst_21 = arith.constant dense<0.000000e+00> : vector<8x8xf32>
    %43 = tpu.matmul %40, %42, %cst_21 {dimension_numbers = #tpu.dot_dimension_numbers<[1], [1], [0], [0], [0, 0, 1, 0], [], []>} : vector<8x64xbf16>, vector<8x64xbf16>, vector<8x8xf32> -> vector<8x8xf32>
    %44 = arith.addf %43, %26 : vector<8x8xf32>
    %45 = vector.extract_strided_slice %15 {offsets = [0, 384], sizes = [8, 64], strides = [1, 1]} : vector<8x512xf32> to vector<8x64xf32>
    %46 = arith.truncf %45 : vector<8x64xf32> to vector<8x64xbf16>
    %47 = vector.extract_strided_slice %15 {offsets = [0, 448], sizes = [8, 64], strides = [1, 1]} : vector<8x512xf32> to vector<8x64xf32>
    %48 = arith.truncf %47 : vector<8x64xf32> to vector<8x64xbf16>
    %cst_22 = arith.constant dense<0.000000e+00> : vector<8x8xf32>
    %49 = tpu.matmul %46, %48, %cst_22 {dimension_numbers = #tpu.dot_dimension_numbers<[1], [1], [0], [0], [0, 0, 1, 0], [], []>} : vector<8x64xbf16>, vector<8x64xbf16>, vector<8x8xf32> -> vector<8x8xf32>
    %50 = arith.addf %49, %26 : vector<8x8xf32>
    %51 = vector.shape_cast %32 : vector<8x8xf32> to vector<1x8x8xf32>
    %52 = vector.shape_cast %38 : vector<8x8xf32> to vector<1x8x8xf32>
    %53 = vector.shape_cast %44 : vector<8x8xf32> to vector<1x8x8xf32>
    %54 = vector.shape_cast %50 : vector<8x8xf32> to vector<1x8x8xf32>
    %55 = tpu.concatenate %51, %52, %53, %54 in 0 : vector<1x8x8xf32>, vector<1x8x8xf32>, vector<1x8x8xf32>, vector<1x8x8xf32> -> vector<4x8x8xf32>
    %c0_23 = arith.constant 0 : index
    %c0_24 = arith.constant 0 : index
    %c0_25 = arith.constant 0 : index
    %c0_26 = arith.constant 0 : index
    %56 = vector.load %arg8[%c0_23, %c0_24, %c0_25, %c0_26] : memref<1x4x8x8xf32, #tpu.memory_space<vmem>>, vector<1x4x8x8xf32>
    %57 = vector.shape_cast %56 : vector<1x4x8x8xf32> to vector<4x8x8xf32>
    %58 = vector.shape_cast %55 : vector<4x8x8xf32> to vector<1x4x8x8xf32>
    tpu.vector_store %arg8[%c0_23, %c0_24, %c0_25, %c0_26], %58 {strides = array<i32>} : memref<1x4x8x8xf32, #tpu.memory_space<vmem>>, vector<1x4x8x8xf32>,
    return
  }
  func.func @transform_0(%arg0: i32) -> (i32, i32, i32) {
    %c0_i32 = arith.constant 0 : i32
    %c0_i32_0 = arith.constant 0 : i32
    %c0_i32_1 = arith.constant 0 : i32
    return %arg0, %c0_i32, %c0_i32_0 : i32, i32, i32
  }
  func.func @transform_1(%arg0: i32) -> (i32, i32) {
    %c0_i32 = arith.constant 0 : i32
    %c0_i32_0 = arith.constant 0 : i32
    %c0_i32_1 = arith.constant 0 : i32
    return %c0_i32, %c0_i32_0 : i32, i32
  }
  func.func @transform_2(%arg0: i32) -> (i32, i32) {
    %c0_i32 = arith.constant 0 : i32
    %c0_i32_0 = arith.constant 0 : i32
    %c0_i32_1 = arith.constant 0 : i32
    return %c0_i32, %c0_i32_0 : i32, i32
  }
  func.func @transform_3(%arg0: i32) -> (i32, i32) {
    %c0_i32 = arith.constant 0 : i32
    %c0_i32_0 = arith.constant 0 : i32
    %c0_i32_1 = arith.constant 0 : i32
    return %c0_i32, %c0_i32_0 : i32, i32
  }
  func.func @transform_4(%arg0: i32) -> (i32, i32) {
    %c0_i32 = arith.constant 0 : i32
    %c0_i32_0 = arith.constant 0 : i32
    %c0_i32_1 = arith.constant 0 : i32
    return %c0_i32, %c0_i32_0 : i32, i32
  }
  func.func @transform_5(%arg0: i32) -> (i32, i32, i32) {
    %c0_i32 = arith.constant 0 : i32
    %c0_i32_0 = arith.constant 0 : i32
    %c0_i32_1 = arith.constant 0 : i32
    return %arg0, %c0_i32, %c0_i32_0 : i32, i32, i32
  }
  func.func @transform_6(%arg0: i32) -> (i32, i32, i32) {
    %c0_i32 = arith.constant 0 : i32
    %c0_i32_0 = arith.constant 0 : i32
    %c0_i32_1 = arith.constant 0 : i32
    return %arg0, %c0_i32, %c0_i32_0 : i32, i32, i32
  }
  func.func @transform_7(%arg0: i32) -> (i32, i32, i32, i32) {
    %c0_i32 = arith.constant 0 : i32
    %c0_i32_0 = arith.constant 0 : i32
    %c0_i32_1 = arith.constant 0 : i32
    %c0_i32_2 = arith.constant 0 : i32
    return %arg0, %c0_i32, %c0_i32_0, %c0_i32_1 : i32, i32, i32, i32
  }
}

</mosaic_0001>

<llo_original>
// kernel: _lambda_.8
$region0: #{_lambda_.8}
  #allocation0 [shape = 'u32[]', space=smem, size = 0x4, offset = 0x4, fixed_abs, tag = 'smem constant byte address 0x4 - core index']
  #allocation1 [shape = 'u32[144,128]{1,0:T(1,128)}', space=vmem, size = 0x12000, scoped, tag = 'internal scratch']
  %s0 = inlined_call_operand.vmem [shape: f32[64,64], index: 0, kind: input, shape index: {}]
  %s1 = inlined_call_operand.vmem [shape: bf16[64,256], index: 1, kind: input, shape index: {}]
  %s2 = inlined_call_operand.vmem [shape: f32[1,256], index: 2, kind: input, shape index: {}]
  %s3 = inlined_call_operand.vmem [shape: bf16[64,256], index: 3, kind: output, shape index: {}]
  %s4 = sld [smem:[#allocation0]]
  $region22: #{_lambda_.8} parent=0
    _
  %s6 = ssub.s32 1, %s4
  %s7 = scalar_select 0, %s6, %s4
  // Predicated region
  $region2: #{_lambda_.8} parent=0 // pred_check
    _
  $region3: #{_lambda_.8} parent=0 // pred_check_branch
    %9 = sbr.rel (0) target = $region5
  $region4: #{_lambda_.8} parent=0 // pred_region
    _
  $region5: #{_lambda_.8} parent=0 // pred_fallthru
    _
  // Predicated region
  $region6: #{_lambda_.8} parent=0 // pred_check
    _
  $region7: #{_lambda_.8} parent=0 // pred_check_branch
    %11 = sbr.rel (0) target = $region9
  $region8: #{_lambda_.8} parent=0 // pred_region
    _
  $region9: #{_lambda_.8} parent=0 // pred_fallthru
    _
  // Predicated region
  $region10: #{_lambda_.8} parent=0 // pred_check
    _
  $region11: #{_lambda_.8} parent=0 // pred_check_branch
    %13 = sbr.rel (0) target = $region13
  $region12: #{_lambda_.8} parent=0 // pred_region
    _
  $region13: #{_lambda_.8} parent=0 // pred_fallthru
    _
  %v15 = vld [vmem:[%s0] sm:$0xff]
  %v16 = vld [vmem:[%s0 + $0x8] sm:$0xff]
  %v17 = vld [vmem:[%s0 + $0x10] sm:$0xff]
  %v18 = vld [vmem:[%s0 + $0x18] sm:$0xff]
  %v19 = vld [vmem:[%s0 + $0x20] sm:$0xff]
  %v20 = vld [vmem:[%s0 + $0x28] sm:$0xff]
  %v21 = vld [vmem:[%s0 + $0x30] sm:$0xff]
  %v22 = vld [vmem:[%s0 + $0x38] sm:$0xff]
  %v23 = vpack.c.bf16 %v16, %v15
  %v24 = vpack.c.bf16 %v18, %v17
  %v25 = vpack.c.bf16 %v20, %v19
  %v26 = vpack.c.bf16 %v22, %v21
  %v27 = vld [vmem:[%s1] sm:$0xff]
  %v28 = vld [vmem:[%s1 + $0x8] sm:$0xff]
  %v29 = vld [vmem:[%s1 + $0x10] sm:$0xff]
  %v30 = vld [vmem:[%s1 + $0x18] sm:$0xff]
  %v31 = vld [vmem:[%s1 + $0x20] sm:$0xff]
  %v32 = vld [vmem:[%s1 + $0x28] sm:$0xff]
  %v33 = vld [vmem:[%s1 + $0x30] sm:$0xff]
  %v34 = vld [vmem:[%s1 + $0x38] sm:$0xff]
  %v35 = vld [vmem:[%s2] sm:$0x3]
  %v37 = vlaneseq
  %v38 = vshrl.u32 %v37, 7
  %v39 = vsub.s32 0, %v38
  %v40 = vrot.slane %v35, %v39
  %v41 = vlaneseq
  %v42 = vshrl.u32 %v41, 7
  %v43 = vsub.s32 1, %v42
  %v44 = vrot.slane %v35, %v43
  %v55 = vunpack.c.l.b16 %v27
  %v56 = vunpack.c.h.b16 %v27
  %v57 = vunpack.c.l.b16 %v28
  %v58 = vunpack.c.h.b16 %v28
  %v59 = vunpack.c.l.b16 %v29
  %v60 = vunpack.c.h.b16 %v29
  %v61 = vunpack.c.l.b16 %v30
  %v62 = vunpack.c.h.b16 %v30
  %v63 = vunpack.c.l.b16 %v31
  %v64 = vunpack.c.h.b16 %v31
  %v65 = vunpack.c.l.b16 %v32
  %v66 = vunpack.c.h.b16 %v32
  %v67 = vunpack.c.l.b16 %v33
  %v68 = vunpack.c.h.b16 %v33
  %v69 = vunpack.c.l.b16 %v34
  %v70 = vunpack.c.h.b16 %v34
  %v71 = vpack.c.b16 %v57, %v55
  %v72 = vpack.c.b16 %v58, %v56
  %v73 = vpack.c.b16 %v61, %v59
  %v74 = vpack.c.b16 %v62, %v60
  %v75 = vpack.c.b16 %v65, %v63
  %v76 = vpack.c.b16 %v66, %v64
  %v77 = vpack.c.b16 %v69, %v67
  %v78 = vpack.c.b16 %v70, %v68
  %vm87 = vcmask 523264
  %v89 = vsel %vm87, %v23, 0
  %v92 = vsel %vm87, %v24, 0
  %v95 = vsel %vm87, %v25, 0
  %v98 = vsel %vm87, %v26, 0
  %100 = vmatprep.subr.bf16.mxu0 %v72
  %101 = vmatpush1.bf16.msra.mxu0 %v71
  %102 = vmatprep.subr.bf16.mxu0 %v74
  %103 = vmatpush1.bf16.msra.mxu0 %v73
  %104 = vmatprep.subr.bf16.mxu0 %v76
  %105 = vmatpush1.bf16.msra.mxu0 %v75
  %106 = vmatprep.subr.bf16.mxu0 %v78
  %107 = vmatpush1.bf16.msra.mxu0 %v77
  %108 = vmatprep.subr.bf16.mxu0 0
  %109 = vmatpush1.bf16.msra.mxu0 0
  %110 = vmatprep.subr.bf16.mxu0 0
  %111 = vmatpush1.bf16.msra.mxu0 0
  %112 = vmatprep.subr.bf16.mxu0 0
  %113 = vmatpush1.bf16.msra.mxu0 0
  %114 = vmatprep.subr.bf16.mxu0 0
  %115 = vmatpush1.bf16.msra.mxu0 0
  %116 = vmatprep.subr.bf16.mxu0 0
  %117 = vmatpush1.bf16.msra.mxu0 0
  %118 = vmatprep.subr.bf16.mxu0 0
  %119 = vmatpush1.bf16.msra.mxu0 0
  %120 = vmatprep.subr.bf16.mxu0 0
  %121 = vmatpush1.bf16.msra.mxu0 0
  %122 = vmatprep.subr.bf16.mxu0 0
  %123 = vmatpush1.bf16.msra.mxu0 0
  %124 = vmatprep.subr.bf16.mxu0 0
  %125 = vmatpush1.bf16.msra.mxu0 0
  %126 = vmatprep.subr.bf16.mxu0 0
  %127 = vmatpush1.bf16.msra.mxu0 0
  %128 = vmatprep.subr.bf16.mxu0 0
  %129 = vmatpush1.bf16.msra.mxu0 0
  %130 = vmatprep.subr.bf16.mxu0 0
  %131 = vmatpush1.bf16.msra.mxu0 0
  %132 = vmatprep.mubr.bf16.mxu0 0
  %133 = vmatmul.mubr.bf16.gmra.mrb[0].mxu0 %v89
  %v134 = vpop.f32.mrb[0].mxu0
  %v135 = vadd.f32 %v40, %v134
  %v136 = vpop.f32.mrb[0].mxu0
  %v137 = vadd.f32 %v44, %v136
  %v138 = vpop.f32.mrb[0].mxu0
  %v139 = vadd.f32 %v40, %v138
  %v140 = vpop.f32.mrb[0].mxu0
  %v141 = vadd.f32 %v44, %v140
  %142 = vmatprep.mubr.bf16.mxu0 0
  %143 = vmatmul.mubr.bf16.gmra.mrb[0].mxu0 %v92
  %v144 = vpop.f32.mrb[0].mxu0
  %v145 = vadd.f32 %v40, %v144
  %v146 = vpop.f32.mrb[0].mxu0
  %v147 = vadd.f32 %v44, %v146
  %v148 = vpop.f32.mrb[0].mxu0
  %v149 = vadd.f32 %v40, %v148
  %v150 = vpop.f32.mrb[0].mxu0
  %v151 = vadd.f32 %v44, %v150
  %152 = vmatprep.mubr.bf16.mxu0 0
  %153 = vmatmul.mubr.bf16.gmra.mrb[0].mxu0 %v95
  %v154 = vpop.f32.mrb[0].mxu0
  %v155 = vadd.f32 %v40, %v154
  %v156 = vpop.f32.mrb[0].mxu0
  %v157 = vadd.f32 %v44, %v156
  %v158 = vpop.f32.mrb[0].mxu0
  %v159 = vadd.f32 %v40, %v158
  %v160 = vpop.f32.mrb[0].mxu0
  %v161 = vadd.f32 %v44, %v160
  %162 = vmatprep.mubr.bf16.mxu0 0
  %163 = vmatmul.mubr.bf16.gmra.mrb[0].mxu0 %v98
  %v164 = vpop.f32.mrb[0].mxu0
  %v165 = vadd.f32 %v40, %v164
  %v166 = vpop.f32.mrb[0].mxu0
  %v167 = vadd.f32 %v44, %v166
  %v168 = vpop.f32.mrb[0].mxu0
  %v169 = vadd.f32 %v40, %v168
  %v170 = vpop.f32.mrb[0].mxu0
  %v171 = vadd.f32 %v44, %v170
  %172 = vdwg.mxu0
  %v173 = vpack.c.bf16 %v139, %v135
  %v174 = vpack.c.bf16 %v141, %v137
  %v175 = vpack.c.bf16 %v149, %v145
  %v176 = vpack.c.bf16 %v151, %v147
  %v177 = vpack.c.bf16 %v159, %v155
  %v178 = vpack.c.bf16 %v161, %v157
  %v179 = vpack.c.bf16 %v169, %v165
  %v180 = vpack.c.bf16 %v171, %v167
  %v189 = vunpack.c.l.b16 %v173
  %v190 = vunpack.c.l.b16 %v174
  %v191 = vunpack.c.h.b16 %v173
  %v192 = vunpack.c.h.b16 %v174
  %v193 = vunpack.c.l.b16 %v175
  %v194 = vunpack.c.l.b16 %v176
  %v195 = vunpack.c.h.b16 %v175
  %v196 = vunpack.c.h.b16 %v176
  %v197 = vunpack.c.l.b16 %v177
  %v198 = vunpack.c.l.b16 %v178
  %v199 = vunpack.c.h.b16 %v177
  %v200 = vunpack.c.h.b16 %v178
  %v201 = vunpack.c.l.b16 %v179
  %v202 = vunpack.c.l.b16 %v180
  %v203 = vunpack.c.h.b16 %v179
  %v204 = vunpack.c.h.b16 %v180
  %v205 = vpack.c.b16 %v190, %v189
  %v206 = vpack.c.b16 %v192, %v191
  %v207 = vpack.c.b16 %v194, %v193
  %v208 = vpack.c.b16 %v196, %v195
  %v209 = vpack.c.b16 %v198, %v197
  %v210 = vpack.c.b16 %v200, %v199
  %v211 = vpack.c.b16 %v202, %v201
  %v212 = vpack.c.b16 %v204, %v203
  %221 = vst [vmem:[%s3] sm:$0xff] %v205
  %222 = vst [vmem:[%s3 + $0x8] sm:$0xff] %v206
  %223 = vst [vmem:[%s3 + $0x10] sm:$0xff] %v207
  %224 = vst [vmem:[%s3 + $0x18] sm:$0xff] %v208
  %225 = vst [vmem:[%s3 + $0x20] sm:$0xff] %v209
  %226 = vst [vmem:[%s3 + $0x28] sm:$0xff] %v210
  %227 = vst [vmem:[%s3 + $0x30] sm:$0xff] %v211
  %228 = vst [vmem:[%s3 + $0x38] sm:$0xff] %v212
  // Predicated region
  $region14: #{_lambda_.8} parent=0 // pred_check
    _
  $region15: #{_lambda_.8} parent=0 // pred_check_branch
    %230 = sbr.rel (0) target = $region17
  $region16: #{_lambda_.8} parent=0 // pred_region
    _
  $region17: #{_lambda_.8} parent=0 // pred_fallthru
    _
  // Predicated region
  $region18: #{_lambda_.8} parent=0 // pred_check
    _
  $region19: #{_lambda_.8} parent=0 // pred_check_branch
    %232 = sbr.rel (0) target = $region21
  $region20: #{_lambda_.8} parent=0 // pred_region
    _
  $region21: #{_lambda_.8} parent=0 // pred_fallthru
    _

// kernel: _lambda_.6
$region0: #{_lambda_.6}
  #allocation0 [shape = 'u32[]', space=smem, size = 0x4, offset = 0x4, fixed_abs, tag = 'smem constant byte address 0x4 - core index']
  #allocation1 [shape = 'u32[144,128]{1,0:T(1,128)}', space=vmem, size = 0x12000, scoped, tag = 'internal scratch']
  %s0 = inlined_call_operand.vmem [shape: f32[64,32], index: 0, kind: input, shape index: {}]
  %s1 = inlined_call_operand.vmem [shape: bf16[32,256], index: 1, kind: input, shape index: {}]
  %s2 = inlined_call_operand.vmem [shape: f32[1,256], index: 2, kind: input, shape index: {}]
  %s3 = inlined_call_operand.vmem [shape: bf16[64,256], index: 3, kind: output, shape index: {}]
  %s4 = sld [smem:[#allocation0]]
  $region22: #{_lambda_.6} parent=0
    _
  %s6 = ssub.s32 1, %s4
  %s7 = scalar_select 0, %s6, %s4
  // Predicated region
  $region2: #{_lambda_.6} parent=0 // pred_check
    _
  $region3: #{_lambda_.6} parent=0 // pred_check_branch
    %9 = sbr.rel (0) target = $region5
  $region4: #{_lambda_.6} parent=0 // pred_region
    _
  $region5: #{_lambda_.6} parent=0 // pred_fallthru
    _
  // Predicated region
  $region6: #{_lambda_.6} parent=0 // pred_check
    _
  $region7: #{_lambda_.6} parent=0 // pred_check_branch
    %11 = sbr.rel (0) target = $region9
  $region8: #{_lambda_.6} parent=0 // pred_region
    _
  $region9: #{_lambda_.6} parent=0 // pred_fallthru
    _
  // Predicated region
  $region10: #{_lambda_.6} parent=0 // pred_check
    _
  $region11: #{_lambda_.6} parent=0 // pred_check_branch
    %13 = sbr.rel (0) target = $region13
  $region12: #{_lambda_.6} parent=0 // pred_region
    _
  $region13: #{_lambda_.6} parent=0 // pred_fallthru
    _
  %v15 = vld [vmem:[%s0] sm:$0xff]
  %v16 = vld [vmem:[%s0 + $0x8] sm:$0xff]
  %v17 = vld [vmem:[%s0 + $0x10] sm:$0xff]
  %v18 = vld [vmem:[%s0 + $0x18] sm:$0xff]
  %v19 = vld [vmem:[%s0 + $0x20] sm:$0xff]
  %v20 = vld [vmem:[%s0 + $0x28] sm:$0xff]
  %v21 = vld [vmem:[%s0 + $0x30] sm:$0xff]
  %v22 = vld [vmem:[%s0 + $0x38] sm:$0xff]
  %v23 = vpack.c.bf16 %v16, %v15
  %v24 = vpack.c.bf16 %v18, %v17
  %v25 = vpack.c.bf16 %v20, %v19
  %v26 = vpack.c.bf16 %v22, %v21
  %v27 = vld [vmem:[%s1] sm:$0xff]
  %v28 = vld [vmem:[%s1 + $0x8] sm:$0xff]
  %v29 = vld [vmem:[%s1 + $0x10] sm:$0xff]
  %v30 = vld [vmem:[%s1 + $0x18] sm:$0xff]
  %v31 = vld [vmem:[%s2] sm:$0x3]
  %v33 = vlaneseq
  %v34 = vshrl.u32 %v33, 7
  %v35 = vsub.s32 0, %v34
  %v36 = vrot.slane %v31, %v35
  %v37 = vlaneseq
  %v38 = vshrl.u32 %v37, 7
  %v39 = vsub.s32 1, %v38
  %v40 = vrot.slane %v31, %v39
  %v47 = vunpack.c.l.b16 %v27
  %v48 = vunpack.c.h.b16 %v27
  %v49 = vunpack.c.l.b16 %v28
  %v50 = vunpack.c.h.b16 %v28
  %v51 = vunpack.c.l.b16 %v29
  %v52 = vunpack.c.h.b16 %v29
  %v53 = vunpack.c.l.b16 %v30
  %v54 = vunpack.c.h.b16 %v30
  %v55 = vpack.c.b16 %v49, %v47
  %v56 = vpack.c.b16 %v50, %v48
  %v57 = vpack.c.b16 %v53, %v51
  %v58 = vpack.c.b16 %v54, %v52
  %vm63 = vcmask 261120
  %v65 = vsel %vm63, %v23, 0
  %v68 = vsel %vm63, %v24, 0
  %v71 = vsel %vm63, %v25, 0
  %v74 = vsel %vm63, %v26, 0
  %76 = vmatprep.subr.bf16.mxu0 %v56
  %77 = vmatpush1.bf16.msra.mxu0 %v55
  %78 = vmatprep.subr.bf16.mxu0 %v58
  %79 = vmatpush1.bf16.msra.mxu0 %v57
  %80 = vmatprep.subr.bf16.mxu0 0
  %81 = vmatpush1.bf16.msra.mxu0 0
  %82 = vmatprep.subr.bf16.mxu0 0
  %83 = vmatpush1.bf16.msra.mxu0 0
  %84 = vmatprep.subr.bf16.mxu0 0
  %85 = vmatpush1.bf16.msra.mxu0 0
  %86 = vmatprep.subr.bf16.mxu0 0
  %87 = vmatpush1.bf16.msra.mxu0 0
  %88 = vmatprep.subr.bf16.mxu0 0
  %89 = vmatpush1.bf16.msra.mxu0 0
  %90 = vmatprep.subr.bf16.mxu0 0
  %91 = vmatpush1.bf16.msra.mxu0 0
  %92 = vmatprep.subr.bf16.mxu0 0
  %93 = vmatpush1.bf16.msra.mxu0 0
  %94 = vmatprep.subr.bf16.mxu0 0
  %95 = vmatpush1.bf16.msra.mxu0 0
  %96 = vmatprep.subr.bf16.mxu0 0
  %97 = vmatpush1.bf16.msra.mxu0 0
  %98 = vmatprep.subr.bf16.mxu0 0
  %99 = vmatpush1.bf16.msra.mxu0 0
  %100 = vmatprep.subr.bf16.mxu0 0
  %101 = vmatpush1.bf16.msra.mxu0 0
  %102 = vmatprep.subr.bf16.mxu0 0
  %103 = vmatpush1.bf16.msra.mxu0 0
  %104 = vmatprep.subr.bf16.mxu0 0
  %105 = vmatpush1.bf16.msra.mxu0 0
  %106 = vmatprep.subr.bf16.mxu0 0
  %107 = vmatpush1.bf16.msra.mxu0 0
  %108 = vmatprep.mubr.bf16.mxu0 0
  %109 = vmatmul.mubr.bf16.gmra.mrb[0].mxu0 %v65
  %v110 = vpop.f32.mrb[0].mxu0
  %v111 = vadd.f32 %v36, %v110
  %v112 = vpop.f32.mrb[0].mxu0
  %v113 = vadd.f32 %v40, %v112
  %v114 = vpop.f32.mrb[0].mxu0
  %v115 = vadd.f32 %v36, %v114
  %v116 = vpop.f32.mrb[0].mxu0
  %v117 = vadd.f32 %v40, %v116
  %118 = vmatprep.mubr.bf16.mxu0 0
  %119 = vmatmul.mubr.bf16.gmra.mrb[0].mxu0 %v68
  %v120 = vpop.f32.mrb[0].mxu0
  %v121 = vadd.f32 %v36, %v120
  %v122 = vpop.f32.mrb[0].mxu0
  %v123 = vadd.f32 %v40, %v122
  %v124 = vpop.f32.mrb[0].mxu0
  %v125 = vadd.f32 %v36, %v124
  %v126 = vpop.f32.mrb[0].mxu0
  %v127 = vadd.f32 %v40, %v126
  %128 = vmatprep.mubr.bf16.mxu0 0
  %129 = vmatmul.mubr.bf16.gmra.mrb[0].mxu0 %v71
  %v130 = vpop.f32.mrb[0].mxu0
  %v131 = vadd.f32 %v36, %v130
  %v132 = vpop.f32.mrb[0].mxu0
  %v133 = vadd.f32 %v40, %v132
  %v134 = vpop.f32.mrb[0].mxu0
  %v135 = vadd.f32 %v36, %v134
  %v136 = vpop.f32.mrb[0].mxu0
  %v137 = vadd.f32 %v40, %v136
  %138 = vmatprep.mubr.bf16.mxu0 0
  %139 = vmatmul.mubr.bf16.gmra.mrb[0].mxu0 %v74
  %v140 = vpop.f32.mrb[0].mxu0
  %v141 = vadd.f32 %v36, %v140
  %v142 = vpop.f32.mrb[0].mxu0
  %v143 = vadd.f32 %v40, %v142
  %v144 = vpop.f32.mrb[0].mxu0
  %v145 = vadd.f32 %v36, %v144
  %v146 = vpop.f32.mrb[0].mxu0
  %v147 = vadd.f32 %v40, %v146
  %148 = vdwg.mxu0
  %v149 = vpack.c.bf16 %v115, %v111
  %v150 = vpack.c.bf16 %v117, %v113
  %v151 = vpack.c.bf16 %v125, %v121
  %v152 = vpack.c.bf16 %v127, %v123
  %v153 = vpack.c.bf16 %v135, %v131
  %v154 = vpack.c.bf16 %v137, %v133
  %v155 = vpack.c.bf16 %v145, %v141
  %v156 = vpack.c.bf16 %v147, %v143
  %v165 = vunpack.c.l.b16 %v149
  %v166 = vunpack.c.l.b16 %v150
  %v167 = vunpack.c.h.b16 %v149
  %v168 = vunpack.c.h.b16 %v150
  %v169 = vunpack.c.l.b16 %v151
  %v170 = vunpack.c.l.b16 %v152
  %v171 = vunpack.c.h.b16 %v151
  %v172 = vunpack.c.h.b16 %v152
  %v173 = vunpack.c.l.b16 %v153
  %v174 = vunpack.c.l.b16 %v154
  %v175 = vunpack.c.h.b16 %v153
  %v176 = vunpack.c.h.b16 %v154
  %v177 = vunpack.c.l.b16 %v155
  %v178 = vunpack.c.l.b16 %v156
  %v179 = vunpack.c.h.b16 %v155
  %v180 = vunpack.c.h.b16 %v156
  %v181 = vpack.c.b16 %v166, %v165
  %v182 = vpack.c.b16 %v168, %v167
  %v183 = vpack.c.b16 %v170, %v169
  %v184 = vpack.c.b16 %v172, %v171
  %v185 = vpack.c.b16 %v174, %v173
  %v186 = vpack.c.b16 %v176, %v175
  %v187 = vpack.c.b16 %v178, %v177
  %v188 = vpack.c.b16 %v180, %v179
  %197 = vst [vmem:[%s3] sm:$0xff] %v181
  %198 = vst [vmem:[%s3 + $0x8] sm:$0xff] %v182
  %199 = vst [vmem:[%s3 + $0x10] sm:$0xff] %v183
  %200 = vst [vmem:[%s3 + $0x18] sm:$0xff] %v184
  %201 = vst [vmem:[%s3 + $0x20] sm:$0xff] %v185
  %202 = vst [vmem:[%s3 + $0x28] sm:$0xff] %v186
  %203 = vst [vmem:[%s3 + $0x30] sm:$0xff] %v187
  %204 = vst [vmem:[%s3 + $0x38] sm:$0xff] %v188
  // Predicated region
  $region14: #{_lambda_.6} parent=0 // pred_check
    _
  $region15: #{_lambda_.6} parent=0 // pred_check_branch
    %206 = sbr.rel (0) target = $region17
  $region16: #{_lambda_.6} parent=0 // pred_region
    _
  $region17: #{_lambda_.6} parent=0 // pred_fallthru
    _
  // Predicated region
  $region18: #{_lambda_.6} parent=0 // pred_check
    _
  $region19: #{_lambda_.6} parent=0 // pred_check_branch
    %208 = sbr.rel (0) target = $region21
  $region20: #{_lambda_.6} parent=0 // pred_region
    _
  $region21: #{_lambda_.6} parent=0 // pred_fallthru
    _

// kernel: _lambda_.10
$region0: #{_lambda_.10}
  #allocation0 [shape = 'u32[]', space=smem, size = 0x4, offset = 0x4, fixed_abs, tag = 'smem constant byte address 0x4 - core index']
  #allocation1 [shape = 'u32[144,128]{1,0:T(1,128)}', space=vmem, size = 0x12000, scoped, tag = 'internal scratch']
  %s0 = inlined_call_operand.vmem [shape: f32[16,64], index: 0, kind: input, shape index: {}]
  %s1 = inlined_call_operand.vmem [shape: bf16[64,512], index: 1, kind: input, shape index: {}]
  %s2 = inlined_call_operand.vmem [shape: f32[1,512], index: 2, kind: input, shape index: {}]
  %s3 = inlined_call_operand.vmem [shape: f32[16,512], index: 3, kind: output, shape index: {}]
  %s4 = sld [smem:[#allocation0]]
  $region22: #{_lambda_.10} parent=0
    _
  %s6 = ssub.s32 1, %s4
  %s7 = scalar_select 0, %s6, %s4
  // Predicated region
  $region2: #{_lambda_.10} parent=0 // pred_check
    _
  $region3: #{_lambda_.10} parent=0 // pred_check_branch
    %9 = sbr.rel (0) target = $region5
  $region4: #{_lambda_.10} parent=0 // pred_region
    _
  $region5: #{_lambda_.10} parent=0 // pred_fallthru
    _
  // Predicated region
  $region6: #{_lambda_.10} parent=0 // pred_check
    _
  $region7: #{_lambda_.10} parent=0 // pred_check_branch
    %11 = sbr.rel (0) target = $region9
  $region8: #{_lambda_.10} parent=0 // pred_region
    _
  $region9: #{_lambda_.10} parent=0 // pred_fallthru
    _
  // Predicated region
  $region10: #{_lambda_.10} parent=0 // pred_check
    _
  $region11: #{_lambda_.10} parent=0 // pred_check_branch
    %13 = sbr.rel (0) target = $region13
  $region12: #{_lambda_.10} parent=0 // pred_region
    _
  $region13: #{_lambda_.10} parent=0 // pred_fallthru
    _
  %v15 = vld [vmem:[%s0] sm:$0xff]
  %v16 = vld [vmem:[%s0 + $0x8] sm:$0xff]
  %v17 = vpack.c.bf16 %v16, %v15
  %v18 = vld [vmem:[%s1] sm:$0xff]
  %v19 = vld [vmem:[%s1 + $0x8] sm:$0xff]
  %v20 = vld [vmem:[%s1 + $0x10] sm:$0xff]
  %v21 = vld [vmem:[%s1 + $0x18] sm:$0xff]
  %v22 = vld [vmem:[%s1 + $0x20] sm:$0xff]
  %v23 = vld [vmem:[%s1 + $0x28] sm:$0xff]
  %v24 = vld [vmem:[%s1 + $0x30] sm:$0xff]
  %v25 = vld [vmem:[%s1 + $0x38] sm:$0xff]
  %v26 = vld [vmem:[%s1 + $0x40] sm:$0xff]
  %v27 = vld [vmem:[%s1 + $0x48] sm:$0xff]
  %v28 = vld [vmem:[%s1 + $0x50] sm:$0xff]
  %v29 = vld [vmem:[%s1 + $0x58] sm:$0xff]
  %v30 = vld [vmem:[%s1 + $0x60] sm:$0xff]
  %v31 = vld [vmem:[%s1 + $0x68] sm:$0xff]
  %v32 = vld [vmem:[%s1 + $0x70] sm:$0xff]
  %v33 = vld [vmem:[%s1 + $0x78] sm:$0xff]
  %v34 = vld [vmem:[%s2] sm:$0xf]
  %v36 = vlaneseq
  %v37 = vshrl.u32 %v36, 7
  %v38 = vsub.s32 0, %v37
  %v39 = vrot.slane %v34, %v38
  %v40 = vlaneseq
  %v41 = vshrl.u32 %v40, 7
  %v42 = vsub.s32 1, %v41
  %v43 = vrot.slane %v34, %v42
  %v44 = vlaneseq
  %v45 = vshrl.u32 %v44, 7
  %v46 = vsub.s32 2, %v45
  %v47 = vrot.slane %v34, %v46
  %v48 = vlaneseq
  %v49 = vshrl.u32 %v48, 7
  %v50 = vsub.s32 3, %v49
  %v51 = vrot.slane %v34, %v50
  %v72 = vunpack.c.l.b16 %v18
  %v73 = vunpack.c.h.b16 %v18
  %v74 = vunpack.c.l.b16 %v19
  %v75 = vunpack.c.h.b16 %v19
  %v76 = vunpack.c.l.b16 %v20
  %v77 = vunpack.c.h.b16 %v20
  %v78 = vunpack.c.l.b16 %v21
  %v79 = vunpack.c.h.b16 %v21
  %v80 = vunpack.c.l.b16 %v22
  %v81 = vunpack.c.h.b16 %v22
  %v82 = vunpack.c.l.b16 %v23
  %v83 = vunpack.c.h.b16 %v23
  %v84 = vunpack.c.l.b16 %v24
  %v85 = vunpack.c.h.b16 %v24
  %v86 = vunpack.c.l.b16 %v25
  %v87 = vunpack.c.h.b16 %v25
  %v88 = vunpack.c.l.b16 %v26
  %v89 = vunpack.c.h.b16 %v26
  %v90 = vunpack.c.l.b16 %v27
  %v91 = vunpack.c.h.b16 %v27
  %v92 = vunpack.c.l.b16 %v28
  %v93 = vunpack.c.h.b16 %v28
  %v94 = vunpack.c.l.b16 %v29
  %v95 = vunpack.c.h.b16 %v29
  %v96 = vunpack.c.l.b16 %v30
  %v97 = vunpack.c.h.b16 %v30
  %v98 = vunpack.c.l.b16 %v31
  %v99 = vunpack.c.h.b16 %v31
  %v100 = vunpack.c.l.b16 %v32
  %v101 = vunpack.c.h.b16 %v32
  %v102 = vunpack.c.l.b16 %v33
  %v103 = vunpack.c.h.b16 %v33
  %v104 = vpack.c.b16 %v76, %v72
  %v105 = vpack.c.b16 %v77, %v73
  %v106 = vpack.c.b16 %v78, %v74
  %v107 = vpack.c.b16 %v79, %v75
  %v108 = vpack.c.b16 %v84, %v80
  %v109 = vpack.c.b16 %v85, %v81
  %v110 = vpack.c.b16 %v86, %v82
  %v111 = vpack.c.b16 %v87, %v83
  %v112 = vpack.c.b16 %v92, %v88
  %v113 = vpack.c.b16 %v93, %v89
  %v114 = vpack.c.b16 %v94, %v90
  %v115 = vpack.c.b16 %v95, %v91
  %v116 = vpack.c.b16 %v100, %v96
  %v117 = vpack.c.b16 %v101, %v97
  %v118 = vpack.c.b16 %v102, %v98
  %v119 = vpack.c.b16 %v103, %v99
  %vm136 = vcmask 523264
  %v138 = vsel %vm136, %v17, 0
  %140 = vmatprep.subr.bf16.mxu0 %v105
  %141 = vmatpush1.bf16.msra.mxu0 %v104
  %142 = vmatprep.subr.bf16.mxu0 %v109
  %143 = vmatpush1.bf16.msra.mxu0 %v108
  %144 = vmatprep.subr.bf16.mxu0 %v113
  %145 = vmatpush1.bf16.msra.mxu0 %v112
  %146 = vmatprep.subr.bf16.mxu0 %v117
  %147 = vmatpush1.bf16.msra.mxu0 %v116
  %148 = vmatprep.subr.bf16.mxu0 0
  %149 = vmatpush1.bf16.msra.mxu0 0
  %150 = vmatprep.subr.bf16.mxu0 0
  %151 = vmatpush1.bf16.msra.mxu0 0
  %152 = vmatprep.subr.bf16.mxu0 0
  %153 = vmatpush1.bf16.msra.mxu0 0
  %154 = vmatprep.subr.bf16.mxu0 0
  %155 = vmatpush1.bf16.msra.mxu0 0
  %156 = vmatprep.subr.bf16.mxu0 0
  %157 = vmatpush1.bf16.msra.mxu0 0
  %158 = vmatprep.subr.bf16.mxu0 0
  %159 = vmatpush1.bf16.msra.mxu0 0
  %160 = vmatprep.subr.bf16.mxu0 0
  %161 = vmatpush1.bf16.msra.mxu0 0
  %162 = vmatprep.subr.bf16.mxu0 0
  %163 = vmatpush1.bf16.msra.mxu0 0
  %164 = vmatprep.subr.bf16.mxu0 0
  %165 = vmatpush1.bf16.msra.mxu0 0
  %166 = vmatprep.subr.bf16.mxu0 0
  %167 = vmatpush1.bf16.msra.mxu0 0
  %168 = vmatprep.subr.bf16.mxu0 0
  %169 = vmatpush1.bf16.msra.mxu0 0
  %170 = vmatprep.subr.bf16.mxu0 0
  %171 = vmatpush1.bf16.msra.mxu0 0
  %172 = vmatprep.mubr.bf16.mxu0 0
  %173 = vmatmul.mubr.bf16.gmra.mrb[0].mxu0 %v138
  %v174 = vpop.f32.mrb[0].mxu0
  %v175 = vadd.f32 %v39, %v174
  %v176 = vpop.f32.mrb[0].mxu0
  %v177 = vadd.f32 %v43, %v176
  %v178 = vpop.f32.mrb[0].mxu0
  %v179 = vadd.f32 %v39, %v178
  %v180 = vpop.f32.mrb[0].mxu0
  %v181 = vadd.f32 %v43, %v180
  %182 = vdwg.mxu0
  %183 = vmatprep.subr.bf16.mxu0 %v107
  %184 = vmatpush1.bf16.msra.mxu0 %v106
  %185 = vmatprep.subr.bf16.mxu0 %v111
  %186 = vmatpush1.bf16.msra.mxu0 %v110
  %187 = vmatprep.subr.bf16.mxu0 %v115
  %188 = vmatpush1.bf16.msra.mxu0 %v114
  %189 = vmatprep.subr.bf16.mxu0 %v119
  %190 = vmatpush1.bf16.msra.mxu0 %v118
  %191 = vmatprep.subr.bf16.mxu0 0
  %192 = vmatpush1.bf16.msra.mxu0 0
  %193 = vmatprep.subr.bf16.mxu0 0
  %194 = vmatpush1.bf16.msra.mxu0 0
  %195 = vmatprep.subr.bf16.mxu0 0
  %196 = vmatpush1.bf16.msra.mxu0 0
  %197 = vmatprep.subr.bf16.mxu0 0
  %198 = vmatpush1.bf16.msra.mxu0 0
  %199 = vmatprep.subr.bf16.mxu0 0
  %200 = vmatpush1.bf16.msra.mxu0 0
  %201 = vmatprep.subr.bf16.mxu0 0
  %202 = vmatpush1.bf16.msra.mxu0 0
  %203 = vmatprep.subr.bf16.mxu0 0
  %204 = vmatpush1.bf16.msra.mxu0 0
  %205 = vmatprep.subr.bf16.mxu0 0
  %206 = vmatpush1.bf16.msra.mxu0 0
  %207 = vmatprep.subr.bf16.mxu0 0
  %208 = vmatpush1.bf16.msra.mxu0 0
  %209 = vmatprep.subr.bf16.mxu0 0
  %210 = vmatpush1.bf16.msra.mxu0 0
  %211 = vmatprep.subr.bf16.mxu0 0
  %212 = vmatpush1.bf16.msra.mxu0 0
  %213 = vmatprep.subr.bf16.mxu0 0
  %214 = vmatpush1.bf16.msra.mxu0 0
  %215 = vmatprep.mubr.bf16.mxu0 0
  %216 = vmatmul.mubr.bf16.gmra.mrb[0].mxu0 %v138
  %v217 = vpop.f32.mrb[0].mxu0
  %v218 = vadd.f32 %v47, %v217
  %v219 = vpop.f32.mrb[0].mxu0
  %v220 = vadd.f32 %v51, %v219
  %v221 = vpop.f32.mrb[0].mxu0
  %v222 = vadd.f32 %v47, %v221
  %v223 = vpop.f32.mrb[0].mxu0
  %v224 = vadd.f32 %v51, %v223
  %225 = vdwg.mxu0
  %226 = vst [vmem:[%s3] sm:$0xff] %v175
  %227 = vst [vmem:[%s3 + $0x8] sm:$0xff] %v177
  %228 = vst [vmem:[%s3 + $0x10] sm:$0xff] %v218
  %229 = vst [vmem:[%s3 + $0x18] sm:$0xff] %v220
  %230 = vst [vmem:[%s3 + $0x20] sm:$0xff] %v179
  %231 = vst [vmem:[%s3 + $0x28] sm:$0xff] %v181
  %232 = vst [vmem:[%s3 + $0x30] sm:$0xff] %v222
  %233 = vst [vmem:[%s3 + $0x38] sm:$0xff] %v224
  // Predicated region
  $region14: #{_lambda_.10} parent=0 // pred_check
    _
  $region15: #{_lambda_.10} parent=0 // pred_check_branch
    %235 = sbr.rel (0) target = $region17
  $region16: #{_lambda_.10} parent=0 // pred_region
    _
  $region17: #{_lambda_.10} parent=0 // pred_fallthru
    _
  // Predicated region
  $region18: #{_lambda_.10} parent=0 // pred_check
    _
  $region19: #{_lambda_.10} parent=0 // pred_check_branch
    %237 = sbr.rel (0) target = $region21
  $region20: #{_lambda_.10} parent=0 // pred_region
    _
  $region21: #{_lambda_.10} parent=0 // pred_fallthru
    _

// kernel: tile.38
$region0: #{tile.38}
  %s0 = inlined_call_operand.vmem [shape: f32[8,8,64], index: 0, kind: input, shape index: {}]
  %s1 = inlined_call_operand.vmem [shape: f32[8,512], index: 1, kind: output, shape index: {}]
  %v2 = vld [vmem:[%s0] ss:$2 sm:$0xff]
  %vm3 = vcmask 523264
  %4 = vst.msk [vmem:[%s1] ss:$8 sm:$0xf] %vm3, %v2
  %s5 = scalar_lea.vmem %s1, 4294967265
  %6 = vst.msk [vmem:[%s5] ss:$8 sm:$0xf0] %vm3, %v2
  %s7 = scalar_lea.vmem %s0, 16
  %v8 = vld [vmem:[%s7] ss:$2 sm:$0xff]
  %vm9 = vcmask 523264
  %s10 = scalar_lea.vmem %s1, 2
  %11 = vst.msk [vmem:[%s10] ss:$8 sm:$0xf] %vm9, %v8
  %s12 = scalar_lea.vmem %s1, 4294967267
  %13 = vst.msk [vmem:[%s12] ss:$8 sm:$0xf0] %vm9, %v8
  %s14 = scalar_lea.vmem %s0, 32
  %v15 = vld [vmem:[%s14] ss:$2 sm:$0xff]
  %vm16 = vcmask 523264
  %s17 = scalar_lea.vmem %s1, 4
  %18 = vst.msk [vmem:[%s17] ss:$8 sm:$0xf] %vm16, %v15
  %s19 = scalar_lea.vmem %s1, 4294967269
  %20 = vst.msk [vmem:[%s19] ss:$8 sm:$0xf0] %vm16, %v15
  %s21 = scalar_lea.vmem %s0, 48
  %v22 = vld [vmem:[%s21] ss:$2 sm:$0xff]
  %vm23 = vcmask 523264
  %s24 = scalar_lea.vmem %s1, 6
  %25 = vst.msk [vmem:[%s24] ss:$8 sm:$0xf] %vm23, %v22
  %s26 = scalar_lea.vmem %s1, 4294967271
  %27 = vst.msk [vmem:[%s26] ss:$8 sm:$0xf0] %vm23, %v22
  %s28 = scalar_lea.vmem %s0, 1
  %v29 = vld [vmem:[%s28] ss:$8 sm:$0xf]
  %s30 = scalar_lea.vmem %s0, 1
  %v31 = vld [vmem:[%s30] ss:$8 sm:$0xf0]
  %vm32 = vcmask 1047556
  %v33 = vsel %vm32, %v31, %v29
  %34 = vrot.lane.b32.xlu0 %v33, 64
  %v35 = vpop.permute.xlu0 %34
  %vm36 = vcmask 1048064
  %37 = vst.msk [vmem:[%s1] sm:$0xff] %vm36, %v35
  %s38 = scalar_lea.vmem %s0, 3
  %v39 = vld [vmem:[%s38] ss:$8 sm:$0xf]
  %s40 = scalar_lea.vmem %s0, 3
  %v41 = vld [vmem:[%s40] ss:$8 sm:$0xf0]
  %vm42 = vcmask 1047556
  %v43 = vsel %vm42, %v41, %v39
  %44 = vrot.lane.b32.xlu0 %v43, 64
  %v45 = vpop.permute.xlu0 %44
  %vm46 = vcmask 1048064
  %s47 = scalar_lea.vmem %s1, 8
  %48 = vst.msk [vmem:[%s47] sm:$0xff] %vm46, %v45
  %s49 = scalar_lea.vmem %s0, 5
  %v50 = vld [vmem:[%s49] ss:$8 sm:$0xf]
  %s51 = scalar_lea.vmem %s0, 5
  %v52 = vld [vmem:[%s51] ss:$8 sm:$0xf0]
  %vm53 = vcmask 1047556
  %v54 = vsel %vm53, %v52, %v50
  %55 = vrot.lane.b32.xlu0 %v54, 64
  %v56 = vpop.permute.xlu0 %55
  %vm57 = vcmask 1048064
  %s58 = scalar_lea.vmem %s1, 16
  %59 = vst.msk [vmem:[%s58] sm:$0xff] %vm57, %v56
  %s60 = scalar_lea.vmem %s0, 7
  %v61 = vld [vmem:[%s60] ss:$8 sm:$0xf]
  %s62 = scalar_lea.vmem %s0, 7
  %v63 = vld [vmem:[%s62] ss:$8 sm:$0xf0]
  %vm64 = vcmask 1047556
  %v65 = vsel %vm64, %v63, %v61
  %66 = vrot.lane.b32.xlu0 %v65, 64
  %v67 = vpop.permute.xlu0 %66
  %vm68 = vcmask 1048064
  %s69 = scalar_lea.vmem %s1, 24
  %70 = vst.msk [vmem:[%s69] sm:$0xff] %vm68, %v67

// kernel: _lambda_.7
$region0: #{_lambda_.7}
  #allocation0 [shape = 'u32[]', space=smem, size = 0x4, offset = 0x4, fixed_abs, tag = 'smem constant byte address 0x4 - core index']
  #allocation1 [shape = 'u32[144,128]{1,0:T(1,128)}', space=vmem, size = 0x12000, scoped, tag = 'internal scratch']
  #allocation2 [shape = 'f32[8,32]{1,0:T(8,128)}', space=vmem, size = 0x1000, scoped, tag = 'scratch operand']
  #allocation3 [shape = 'f32[8,32]{1,0:T(8,128)}', space=vmem, size = 0x1000, scoped, tag = 'scratch operand']
  #allocation4 [shape = 'f32[8,32]{1,0:T(8,128)}', space=vmem, size = 0x1000, scoped, tag = 'scratch operand']
  #allocation5 [shape = 'f32[8,32]{1,0:T(8,128)}', space=vmem, size = 0x1000, scoped, tag = 'scratch operand']
  %s0 = inlined_call_operand.vmem [shape: bf16[8,8,256], index: 0, kind: input, shape index: {}]
  %s1 = inlined_call_operand.vmem [shape: bf16[32,128], index: 1, kind: input, shape index: {}]
  %s2 = inlined_call_operand.vmem [shape: bf16[32,128], index: 2, kind: input, shape index: {}]
  %s3 = inlined_call_operand.vmem [shape: f32[8,8,64], index: 3, kind: output, shape index: {}]
  %s4 = sld [smem:[#allocation0]]
  $region22: #{_lambda_.7} parent=0
    _
  %s6 = ssub.s32 1, %s4
  %s7 = scalar_select 0, %s6, %s4
  // Predicated region
  $region2: #{_lambda_.7} parent=0 // pred_check
    _
  $region3: #{_lambda_.7} parent=0 // pred_check_branch
    %9 = sbr.rel (0) target = $region5
  $region4: #{_lambda_.7} parent=0 // pred_region
    _
  $region5: #{_lambda_.7} parent=0 // pred_fallthru
    _
  // Predicated region
  $region6: #{_lambda_.7} parent=0 // pred_check
    _
  $region7: #{_lambda_.7} parent=0 // pred_check_branch
    %11 = sbr.rel (0) target = $region9
  $region8: #{_lambda_.7} parent=0 // pred_region
    _
  $region9: #{_lambda_.7} parent=0 // pred_fallthru
    _
  // Predicated region
  $region10: #{_lambda_.7} parent=0 // pred_check
    _
  $region11: #{_lambda_.7} parent=0 // pred_check_branch
    %13 = sbr.rel (0) target = $region13
  $region12: #{_lambda_.7} parent=0 // pred_region
    _
  $region13: #{_lambda_.7} parent=0 // pred_fallthru
    _
  %vm15 = vcmask 261120
  %16 = vst.msk [vmem:[#allocation2] sm:$0xff] %vm15, 0.0
  %17 = vst.msk [vmem:[#allocation3] sm:$0xff] %vm15, 0.0
  %18 = vst.msk [vmem:[#allocation4] sm:$0xff] %vm15, 0.0
  %19 = vst.msk [vmem:[#allocation5] sm:$0xff] %vm15, 0.0
  %v20 = vld [vmem:[#allocation2] sm:$0xff]
  %v21 = vpack.c.bf16 %v20, %v20
  %v22 = vld [vmem:[%s1] sm:$0xf]
  %v23 = vld [vmem:[%s1 + $0x4] sm:$0xf]
  %v24 = vld [vmem:[%s1 + $0x8] sm:$0xf]
  %v25 = vld [vmem:[%s1 + $0xc] sm:$0xf]
  %v30 = vunpack.c.l.b16 %v22
  %v31 = vunpack.c.l.b16 %v23
  %v32 = vunpack.c.l.b16 %v24
  %v33 = vunpack.c.l.b16 %v25
  %v34 = vpack.c.b16 %v31, %v30
  %v35 = vpack.c.b16 %v33, %v32
  %v39 = vsel %vm15, %v21, 0
  %41 = vmatprep.subr.bf16.mxu0 0
  %42 = vmatpush1.bf16.msra.mxu0 %v34
  %43 = vmatprep.subr.bf16.mxu0 0
  %44 = vmatpush1.bf16.msra.mxu0 %v35
  %45 = vmatprep.subr.bf16.mxu0 0
  %46 = vmatpush1.bf16.msra.mxu0 0
  %47 = vmatprep.subr.bf16.mxu0 0
  %48 = vmatpush1.bf16.msra.mxu0 0
  %49 = vmatprep.subr.bf16.mxu0 0
  %50 = vmatpush1.bf16.msra.mxu0 0
  %51 = vmatprep.subr.bf16.mxu0 0
  %52 = vmatpush1.bf16.msra.mxu0 0
  %53 = vmatprep.subr.bf16.mxu0 0
  %54 = vmatpush1.bf16.msra.mxu0 0
  %55 = vmatprep.subr.bf16.mxu0 0
  %56 = vmatpush1.bf16.msra.mxu0 0
  %57 = vmatprep.subr.bf16.mxu0 0
  %58 = vmatpush1.bf16.msra.mxu0 0
  %59 = vmatprep.subr.bf16.mxu0 0
  %60 = vmatpush1.bf16.msra.mxu0 0
  %61 = vmatprep.subr.bf16.mxu0 0
  %62 = vmatpush1.bf16.msra.mxu0 0
  %63 = vmatprep.subr.bf16.mxu0 0
  %64 = vmatpush1.bf16.msra.mxu0 0
  %65 = vmatprep.subr.bf16.mxu0 0
  %66 = vmatpush1.bf16.msra.mxu0 0
  %67 = vmatprep.subr.bf16.mxu0 0
  %68 = vmatpush1.bf16.msra.mxu0 0
  %69 = vmatprep.subr.bf16.mxu0 0
  %70 = vmatpush1.bf16.msra.mxu0 0
  %71 = vmatprep.subr.bf16.mxu0 0
  %72 = vmatpush1.bf16.msra.mxu0 0
  %73 = vmatprep.mubr.bf16.mxu0 0
  %74 = vmatmul.mubr.bf16.gmra.mrb[0].mxu0 %v39
  %v75 = vpop.f32.mrb[0].mxu0
  %v76 = vadd.f32 0.0, %v75
  %v77 = vpop.f32.mrb[0].mxu0
  %v78 = vpop.f32.mrb[0].mxu0
  %v79 = vpop.f32.mrb[0].mxu0
  %80 = vdwg.mxu0
  %v81 = vld [vmem:[#allocation3] sm:$0xff]
  %v82 = vpack.c.bf16 %v81, %v81
  %v83 = vld [vmem:[%s2] sm:$0xf]
  %v84 = vld [vmem:[%s2 + $0x4] sm:$0xf]
  %v85 = vld [vmem:[%s2 + $0x8] sm:$0xf]
  %v86 = vld [vmem:[%s2 + $0xc] sm:$0xf]
  %v91 = vunpack.c.l.b16 %v83
  %v92 = vunpack.c.l.b16 %v84
  %v93 = vunpack.c.l.b16 %v85
  %v94 = vunpack.c.l.b16 %v86
  %v95 = vpack.c.b16 %v92, %v91
  %v96 = vpack.c.b16 %v94, %v93
  %v100 = vsel %vm15, %v82, 0
  %102 = vmatprep.subr.bf16.mxu0 0
  %103 = vmatpush1.bf16.msra.mxu0 %v95
  %104 = vmatprep.subr.bf16.mxu0 0
  %105 = vmatpush1.bf16.msra.mxu0 %v96
  %106 = vmatprep.subr.bf16.mxu0 0
  %107 = vmatpush1.bf16.msra.mxu0 0
  %108 = vmatprep.subr.bf16.mxu0 0
  %109 = vmatpush1.bf16.msra.mxu0 0
  %110 = vmatprep.subr.bf16.mxu0 0
  %111 = vmatpush1.bf16.msra.mxu0 0
  %112 = vmatprep.subr.bf16.mxu0 0
  %113 = vmatpush1.bf16.msra.mxu0 0
  %114 = vmatprep.subr.bf16.mxu0 0
  %115 = vmatpush1.bf16.msra.mxu0 0
  %116 = vmatprep.subr.bf16.mxu0 0
  %117 = vmatpush1.bf16.msra.mxu0 0
  %118 = vmatprep.subr.bf16.mxu0 0
  %119 = vmatpush1.bf16.msra.mxu0 0
  %120 = vmatprep.subr.bf16.mxu0 0
  %121 = vmatpush1.bf16.msra.mxu0 0
  %122 = vmatprep.subr.bf16.mxu0 0
  %123 = vmatpush1.bf16.msra.mxu0 0
  %124 = vmatprep.subr.bf16.mxu0 0
  %125 = vmatpush1.bf16.msra.mxu0 0
  %126 = vmatprep.subr.bf16.mxu0 0
  %127 = vmatpush1.bf16.msra.mxu0 0
  %128 = vmatprep.subr.bf16.mxu0 0
  %129 = vmatpush1.bf16.msra.mxu0 0
  %130 = vmatprep.subr.bf16.mxu0 0
  %131 = vmatpush1.bf16.msra.mxu0 0
  %132 = vmatprep.subr.bf16.mxu0 0
  %133 = vmatpush1.bf16.msra.mxu0 0
  %134 = vmatprep.mubr.bf16.mxu0 0
  %135 = vmatmul.mubr.bf16.gmra.mrb[0].mxu0 %v100
  %v136 = vpop.f32.mrb[0].mxu0
  %v137 = vadd.f32 0.0, %v136
  %v138 = vpop.f32.mrb[0].mxu0
  %v139 = vpop.f32.mrb[0].mxu0
  %v140 = vpop.f32.mrb[0].mxu0
  %141 = vdwg.mxu0
  %v142 = vld [vmem:[%s0] sm:$0xf]
  %v143 = vunpack.c.l.bf16 %v142
  %v144 = vadd.f32 %v143, %v76
  %s145 = scalar_lea.vmem %s0, 56
  %v146 = vld [vmem:[%s145 + $0x4] sm:$0xf]
  %v147 = vunpack.c.l.bf16 %v146
  %v148 = vadd.f32 %v147, %v137
  %v149 = vld [vmem:[#allocation4] sm:$0xff]
  %v150 = vxor.u32 %v144, 2147483648
  %v151 = vmul.f32 %v150, 1.442695
  %v152 = vpow.pop %v151
  %v153 = vadd.f32 %v152, 1.0
  %v154 = vrcp.pop %v153
  %v155 = vmul.f32 1.0, %v154
  %v156 = vtanh.pop %v144
  %158 = vrot.lane.b32.xlu0 %v149, 32
  %v159 = vpop.permute.xlu0 %158
  %v161 = vmul.f32 %v155, %v159
  %163 = vrot.lane.b32.xlu0 %v156, 64
  %v164 = vpop.permute.xlu0 %163
  %v166 = vmul.f32 %v155, %v164
  %168 = vrot.lane.b32.xlu0 %v166, 32
  %v169 = vpop.permute.xlu0 %168
  %v171 = vadd.f32 %v161, %v169
  %v172 = vtanh.pop %v171
  %174 = vrot.lane.b32.xlu0 %v172, 64
  %v175 = vpop.permute.xlu0 %174
  %v177 = vmul.f32 %v155, %v175
  %v178 = vld [vmem:[#allocation5] sm:$0xff]
  %v179 = vxor.u32 %v148, 2147483648
  %v180 = vmul.f32 %v179, 1.442695
  %v181 = vpow.pop %v180
  %v182 = vadd.f32 %v181, 1.0
  %v183 = vrcp.pop %v182
  %v184 = vmul.f32 1.0, %v183
  %v185 = vtanh.pop %v148
  %187 = vrot.lane.b32.xlu0 %v178, 32
  %v188 = vpop.permute.xlu0 %187
  %v190 = vmul.f32 %v184, %v188
  %192 = vrot.lane.b32.xlu0 %v185, 64
  %v193 = vpop.permute.xlu0 %192
  %v195 = vmul.f32 %v184, %v193
  %197 = vrot.lane.b32.xlu0 %v195, 32
  %v198 = vpop.permute.xlu0 %197
  %v200 = vadd.f32 %v190, %v198
  %v201 = vtanh.pop %v200
  %203 = vrot.lane.b32.xlu0 %v201, 64
  %v204 = vpop.permute.xlu0 %203
  %v206 = vmul.f32 %v184, %v204
  %208 = vrot.lane.b32.xlu0 %v177, 32
  %v209 = vpop.permute.xlu0 %208
  %211 = vst.msk [vmem:[#allocation2] sm:$0xff] %vm15, %v209
  %213 = vrot.lane.b32.xlu0 %v171, 96
  %v214 = vpop.permute.xlu0 %213
  %216 = vst.msk [vmem:[#allocation4] sm:$0xff] %vm15, %v214
  %218 = vrot.lane.b32.xlu0 %v206, 32
  %v219 = vpop.permute.xlu0 %218
  %221 = vst.msk [vmem:[#allocation3] sm:$0xff] %vm15, %v219
  %223 = vrot.lane.b32.xlu0 %v200, 96
  %v224 = vpop.permute.xlu0 %223
  %226 = vst.msk [vmem:[#allocation5] sm:$0xff] %vm15, %v224
  %227 = vst.msk [vmem:[%s3] sm:$0xff] %vm15, %v209
  %228 = vrot.lane.b32.xlu0 %v206, 64
  %v229 = vpop.permute.xlu0 %228
  %s231 = scalar_lea.vmem %s3, 56
  %vm232 = vcmask 523520
  %233 = vst.msk [vmem:[%s231] sm:$0xff] %vm232, %v229
  %v234 = vld [vmem:[#allocation2] sm:$0xff]
  %v235 = vpack.c.bf16 %v234, %v234
  %v236 = vld [vmem:[%s1] sm:$0xf]
  %v237 = vld [vmem:[%s1 + $0x4] sm:$0xf]
  %v238 = vld [vmem:[%s1 + $0x8] sm:$0xf]
  %v239 = vld [vmem:[%s1 + $0xc] sm:$0xf]
  %v244 = vunpack.c.l.b16 %v236
  %v245 = vunpack.c.l.b16 %v237
  %v246 = vunpack.c.l.b16 %v238
  %v247 = vunpack.c.l.b16 %v239
  %v248 = vpack.c.b16 %v245, %v244
  %v249 = vpack.c.b16 %v247, %v246
  %v253 = vsel %vm15, %v235, 0
  %255 = vmatprep.subr.bf16.mxu0 0
  %256 = vmatpush1.bf16.msra.mxu0 %v248
  %257 = vmatprep.subr.bf16.mxu0 0
  %258 = vmatpush1.bf16.msra.mxu0 %v249
  %259 = vmatprep.subr.bf16.mxu0 0
  %260 = vmatpush1.bf16.msra.mxu0 0
  %261 = vmatprep.subr.bf16.mxu0 0
  %262 = vmatpush1.bf16.msra.mxu0 0
  %263 = vmatprep.subr.bf16.mxu0 0
  %264 = vmatpush1.bf16.msra.mxu0 0
  %265 = vmatprep.subr.bf16.mxu0 0
  %266 = vmatpush1.bf16.msra.mxu0 0
  %267 = vmatprep.subr.bf16.mxu0 0
  %268 = vmatpush1.bf16.msra.mxu0 0
  %269 = vmatprep.subr.bf16.mxu0 0
  %270 = vmatpush1.bf16.msra.mxu0 0
  %271 = vmatprep.subr.bf16.mxu0 0
  %272 = vmatpush1.bf16.msra.mxu0 0
  %273 = vmatprep.subr.bf16.mxu0 0
  %274 = vmatpush1.bf16.msra.mxu0 0
  %275 = vmatprep.subr.bf16.mxu0 0
  %276 = vmatpush1.bf16.msra.mxu0 0
  %277 = vmatprep.subr.bf16.mxu0 0
  %278 = vmatpush1.bf16.msra.mxu0 0
  %279 = vmatprep.subr.bf16.mxu0 0
  %280 = vmatpush1.bf16.msra.mxu0 0
  %281 = vmatprep.subr.bf16.mxu0 0
  %282 = vmatpush1.bf16.msra.mxu0 0
  %283 = vmatprep.subr.bf16.mxu0 0
  %284 = vmatpush1.bf16.msra.mxu0 0
  %285 = vmatprep.subr.bf16.mxu0 0
  %286 = vmatpush1.bf16.msra.mxu0 0
  %287 = vmatprep.mubr.bf16.mxu0 0
  %288 = vmatmul.mubr.bf16.gmra.mrb[0].mxu0 %v253
  %v289 = vpop.f32.mrb[0].mxu0
  %v290 = vadd.f32 0.0, %v289
  %v291 = vpop.f32.mrb[0].mxu0
  %v292 = vpop.f32.mrb[0].mxu0
  %v293 = vpop.f32.mrb[0].mxu0
  %294 = vdwg.mxu0
  %v295 = vld [vmem:[#allocation3] sm:$0xff]
  %v296 = vpack.c.bf16 %v295, %v295
  %v297 = vld [vmem:[%s2] sm:$0xf]
  %v298 = vld [vmem:[%s2 + $0x4] sm:$0xf]
  %v299 = vld [vmem:[%s2 + $0x8] sm:$0xf]
  %v300 = vld [vmem:[%s2 + $0xc] sm:$0xf]
  %v305 = vunpack.c.l.b16 %v297
  %v306 = vunpack.c.l.b16 %v298
  %v307 = vunpack.c.l.b16 %v299
  %v308 = vunpack.c.l.b16 %v300
  %v309 = vpack.c.b16 %v306, %v305
  %v310 = vpack.c.b16 %v308, %v307
  %v314 = vsel %vm15, %v296, 0
  %316 = vmatprep.subr.bf16.mxu0 0
  %317 = vmatpush1.bf16.msra.mxu0 %v309
  %318 = vmatprep.subr.bf16.mxu0 0
  %319 = vmatpush1.bf16.msra.mxu0 %v310
  %320 = vmatprep.subr.bf16.mxu0 0
  %321 = vmatpush1.bf16.msra.mxu0 0
  %322 = vmatprep.subr.bf16.mxu0 0
  %323 = vmatpush1.bf16.msra.mxu0 0
  %324 = vmatprep.subr.bf16.mxu0 0
  %325 = vmatpush1.bf16.msra.mxu0 0
  %326 = vmatprep.subr.bf16.mxu0 0
  %327 = vmatpush1.bf16.msra.mxu0 0
  %328 = vmatprep.subr.bf16.mxu0 0
  %329 = vmatpush1.bf16.msra.mxu0 0
  %330 = vmatprep.subr.bf16.mxu0 0
  %331 = vmatpush1.bf16.msra.mxu0 0
  %332 = vmatprep.subr.bf16.mxu0 0
  %333 = vmatpush1.bf16.msra.mxu0 0
  %334 = vmatprep.subr.bf16.mxu0 0
  %335 = vmatpush1.bf16.msra.mxu0 0
  %336 = vmatprep.subr.bf16.mxu0 0
  %337 = vmatpush1.bf16.msra.mxu0 0
  %338 = vmatprep.subr.bf16.mxu0 0
  %339 = vmatpush1.bf16.msra.mxu0 0
  %340 = vmatprep.subr.bf16.mxu0 0
  %341 = vmatpush1.bf16.msra.mxu0 0
  %342 = vmatprep.subr.bf16.mxu0 0
  %343 = vmatpush1.bf16.msra.mxu0 0
  %344 = vmatprep.subr.bf16.mxu0 0
  %345 = vmatpush1.bf16.msra.mxu0 0
  %346 = vmatprep.subr.bf16.mxu0 0
  %347 = vmatpush1.bf16.msra.mxu0 0
  %348 = vmatprep.mubr.bf16.mxu0 0
  %349 = vmatmul.mubr.bf16.gmra.mrb[0].mxu0 %v314
  %v350 = vpop.f32.mrb[0].mxu0
  %v351 = vadd.f32 0.0, %v350
  %v352 = vpop.f32.mrb[0].mxu0
  %v353 = vpop.f32.mrb[0].mxu0
  %v354 = vpop.f32.mrb[0].mxu0
  %355 = vdwg.mxu0
  %s356 = scalar_lea.vmem %s0, 8
  %v357 = vld [vmem:[%s356] sm:$0xf]
  %v358 = vunpack.c.l.bf16 %v357
  %v359 = vadd.f32 %v358, %v290
  %s360 = scalar_lea.vmem %s0, 48
  %v361 = vld [vmem:[%s360 + $0x4] sm:$0xf]
  %v362 = vunpack.c.l.bf16 %v361
  %v363 = vadd.f32 %v362, %v351
  %v364 = vld [vmem:[#allocation4] sm:$0xff]
  %v365 = vxor.u32 %v359, 2147483648
  %v366 = vmul.f32 %v365, 1.442695
  %v367 = vpow.pop %v366
  %v368 = vadd.f32 %v367, 1.0
  %v369 = vrcp.pop %v368
  %v370 = vmul.f32 1.0, %v369
  %v371 = vtanh.pop %v359
  %373 = vrot.lane.b32.xlu0 %v364, 32
  %v374 = vpop.permute.xlu0 %373
  %v376 = vmul.f32 %v370, %v374
  %378 = vrot.lane.b32.xlu0 %v371, 64
  %v379 = vpop.permute.xlu0 %378
  %v381 = vmul.f32 %v370, %v379
  %383 = vrot.lane.b32.xlu0 %v381, 32
  %v384 = vpop.permute.xlu0 %383
  %v386 = vadd.f32 %v376, %v384
  %v387 = vtanh.pop %v386
  %389 = vrot.lane.b32.xlu0 %v387, 64
  %v390 = vpop.permute.xlu0 %389
  %v392 = vmul.f32 %v370, %v390
  %v393 = vld [vmem:[#allocation5] sm:$0xff]
  %v394 = vxor.u32 %v363, 2147483648
  %v395 = vmul.f32 %v394, 1.442695
  %v396 = vpow.pop %v395
  %v397 = vadd.f32 %v396, 1.0
  %v398 = vrcp.pop %v397
  %v399 = vmul.f32 1.0, %v398
  %v400 = vtanh.pop %v363
  %402 = vrot.lane.b32.xlu0 %v393, 32
  %v403 = vpop.permute.xlu0 %402
  %v405 = vmul.f32 %v399, %v403
  %407 = vrot.lane.b32.xlu0 %v400, 64
  %v408 = vpop.permute.xlu0 %407
  %v410 = vmul.f32 %v399, %v408
  %412 = vrot.lane.b32.xlu0 %v410, 32
  %v413 = vpop.permute.xlu0 %412
  %v415 = vadd.f32 %v405, %v413
  %v416 = vtanh.pop %v415
  %418 = vrot.lane.b32.xlu0 %v416, 64
  %v419 = vpop.permute.xlu0 %418
  %v421 = vmul.f32 %v399, %v419
  %423 = vrot.lane.b32.xlu0 %v392, 32
  %v424 = vpop.permute.xlu0 %423
  %426 = vst.msk [vmem:[#allocation2] sm:$0xff] %vm15, %v424
  %428 = vrot.lane.b32.xlu0 %v386, 96
  %v429 = vpop.permute.xlu0 %428
  %431 = vst.msk [vmem:[#allocation4] sm:$0xff] %vm15, %v429
  %433 = vrot.lane.b32.xlu0 %v421, 32
  %v434 = vpop.permute.xlu0 %433
  %436 = vst.msk [vmem:[#allocation3] sm:$0xff] %vm15, %v434
  %438 = vrot.lane.b32.xlu0 %v415, 96
  %v439 = vpop.permute.xlu0 %438
  %441 = vst.msk [vmem:[#allocation5] sm:$0xff] %vm15, %v439
  %s442 = scalar_lea.vmem %s3, 8
  %443 = vst.msk [vmem:[%s442] sm:$0xff] %vm15, %v424
  %444 = vrot.lane.b32.xlu0 %v421, 64
  %v445 = vpop.permute.xlu0 %444
  %s447 = scalar_lea.vmem %s3, 48
  %448 = vst.msk [vmem:[%s447] sm:$0xff] %vm232, %v445
  %v449 = vld [vmem:[#allocation2] sm:$0xff]
  %v450 = vpack.c.bf16 %v449, %v449
  %v451 = vld [vmem:[%s1] sm:$0xf]
  %v452 = vld [vmem:[%s1 + $0x4] sm:$0xf]
  %v453 = vld [vmem:[%s1 + $0x8] sm:$0xf]
  %v454 = vld [vmem:[%s1 + $0xc] sm:$0xf]
  %v459 = vunpack.c.l.b16 %v451
  %v460 = vunpack.c.l.b16 %v452
  %v461 = vunpack.c.l.b16 %v453
  %v462 = vunpack.c.l.b16 %v454
  %v463 = vpack.c.b16 %v460, %v459
  %v464 = vpack.c.b16 %v462, %v461
  %v468 = vsel %vm15, %v450, 0
  %470 = vmatprep.subr.bf16.mxu0 0
  %471 = vmatpush1.bf16.msra.mxu0 %v463
  %472 = vmatprep.subr.bf16.mxu0 0
  %473 = vmatpush1.bf16.msra.mxu0 %v464
  %474 = vmatprep.subr.bf16.mxu0 0
  %475 = vmatpush1.bf16.msra.mxu0 0
  %476 = vmatprep.subr.bf16.mxu0 0
  %477 = vmatpush1.bf16.msra.mxu0 0
  %478 = vmatprep.subr.bf16.mxu0 0
  %479 = vmatpush1.bf16.msra.mxu0 0
  %480 = vmatprep.subr.bf16.mxu0 0
  %481 = vmatpush1.bf16.msra.mxu0 0
  %482 = vmatprep.subr.bf16.mxu0 0
  %483 = vmatpush1.bf16.msra.mxu0 0
  %484 = vmatprep.subr.bf16.mxu0 0
  %485 = vmatpush1.bf16.msra.mxu0 0
  %486 = vmatprep.subr.bf16.mxu0 0
  %487 = vmatpush1.bf16.msra.mxu0 0
  %488 = vmatprep.subr.bf16.mxu0 0
  %489 = vmatpush1.bf16.msra.mxu0 0
  %490 = vmatprep.subr.bf16.mxu0 0
  %491 = vmatpush1.bf16.msra.mxu0 0
  %492 = vmatprep.subr.bf16.mxu0 0
  %493 = vmatpush1.bf16.msra.mxu0 0
  %494 = vmatprep.subr.bf16.mxu0 0
  %495 = vmatpush1.bf16.msra.mxu0 0
  %496 = vmatprep.subr.bf16.mxu0 0
  %497 = vmatpush1.bf16.msra.mxu0 0
  %498 = vmatprep.subr.bf16.mxu0 0
  %499 = vmatpush1.bf16.msra.mxu0 0
  %500 = vmatprep.subr.bf16.mxu0 0
  %501 = vmatpush1.bf16.msra.mxu0 0
  %502 = vmatprep.mubr.bf16.mxu0 0
  %503 = vmatmul.mubr.bf16.gmra.mrb[0].mxu0 %v468
  %v504 = vpop.f32.mrb[0].mxu0
  %v505 = vadd.f32 0.0, %v504
  %v506 = vpop.f32.mrb[0].mxu0
  %v507 = vpop.f32.mrb[0].mxu0
  %v508 = vpop.f32.mrb[0].mxu0
  %509 = vdwg.mxu0
  %v510 = vld [vmem:[#allocation3] sm:$0xff]
  %v511 = vpack.c.bf16 %v510, %v510
  %v512 = vld [vmem:[%s2] sm:$0xf]
  %v513 = vld [vmem:[%s2 + $0x4] sm:$0xf]
  %v514 = vld [vmem:[%s2 + $0x8] sm:$0xf]
  %v515 = vld [vmem:[%s2 + $0xc] sm:$0xf]
  %v520 = vunpack.c.l.b16 %v512
  %v521 = vunpack.c.l.b16 %v513
  %v522 = vunpack.c.l.b16 %v514
  %v523 = vunpack.c.l.b16 %v515
  %v524 = vpack.c.b16 %v521, %v520
  %v525 = vpack.c.b16 %v523, %v522
  %v529 = vsel %vm15, %v511, 0
  %531 = vmatprep.subr.bf16.mxu0 0
  %532 = vmatpush1.bf16.msra.mxu0 %v524
  %533 = vmatprep.subr.bf16.mxu0 0
  %534 = vmatpush1.bf16.msra.mxu0 %v525
  %535 = vmatprep.subr.bf16.mxu0 0
  %536 = vmatpush1.bf16.msra.mxu0 0
  %537 = vmatprep.subr.bf16.mxu0 0
  %538 = vmatpush1.bf16.msra.mxu0 0
  %539 = vmatprep.subr.bf16.mxu0 0
  %540 = vmatpush1.bf16.msra.mxu0 0
  %541 = vmatprep.subr.bf16.mxu0 0
  %542 = vmatpush1.bf16.msra.mxu0 0
  %543 = vmatprep.subr.bf16.mxu0 0
  %544 = vmatpush1.bf16.msra.mxu0 0
  %545 = vmatprep.subr.bf16.mxu0 0
  %546 = vmatpush1.bf16.msra.mxu0 0
  %547 = vmatprep.subr.bf16.mxu0 0
  %548 = vmatpush1.bf16.msra.mxu0 0
  %549 = vmatprep.subr.bf16.mxu0 0
  %550 = vmatpush1.bf16.msra.mxu0 0
  %551 = vmatprep.subr.bf16.mxu0 0
  %552 = vmatpush1.bf16.msra.mxu0 0
  %553 = vmatprep.subr.bf16.mxu0 0
  %554 = vmatpush1.bf16.msra.mxu0 0
  %555 = vmatprep.subr.bf16.mxu0 0
  %556 = vmatpush1.bf16.msra.mxu0 0
  %557 = vmatprep.subr.bf16.mxu0 0
  %558 = vmatpush1.bf16.msra.mxu0 0
  %559 = vmatprep.subr.bf16.mxu0 0
  %560 = vmatpush1.bf16.msra.mxu0 0
  %561 = vmatprep.subr.bf16.mxu0 0
  %562 = vmatpush1.bf16.msra.mxu0 0
  %563 = vmatprep.mubr.bf16.mxu0 0
  %564 = vmatmul.mubr.bf16.gmra.mrb[0].mxu0 %v529
  %v565 = vpop.f32.mrb[0].mxu0
  %v566 = vadd.f32 0.0, %v565
  %v567 = vpop.f32.mrb[0].mxu0
  %v568 = vpop.f32.mrb[0].mxu0
  %v569 = vpop.f32.mrb[0].mxu0
  %570 = vdwg.mxu0
  %s571 = scalar_lea.vmem %s0, 16
  %v572 = vld [vmem:[%s571] sm:$0xf]
  %v573 = vunpack.c.l.bf16 %v572
  %v574 = vadd.f32 %v573, %v505
  %s575 = scalar_lea.vmem %s0, 40
  %v576 = vld [vmem:[%s575 + $0x4] sm:$0xf]
  %v577 = vunpack.c.l.bf16 %v576
  %v578 = vadd.f32 %v577, %v566
  %v579 = vld [vmem:[#allocation4] sm:$0xff]
  %v580 = vxor.u32 %v574, 2147483648
  %v581 = vmul.f32 %v580, 1.442695
  %v582 = vpow.pop %v581
  %v583 = vadd.f32 %v582, 1.0
  %v584 = vrcp.pop %v583
  %v585 = vmul.f32 1.0, %v584
  %v586 = vtanh.pop %v574
  %588 = vrot.lane.b32.xlu0 %v579, 32
  %v589 = vpop.permute.xlu0 %588
  %v591 = vmul.f32 %v585, %v589
  %593 = vrot.lane.b32.xlu0 %v586, 64
  %v594 = vpop.permute.xlu0 %593
  %v596 = vmul.f32 %v585, %v594
  %598 = vrot.lane.b32.xlu0 %v596, 32
  %v599 = vpop.permute.xlu0 %598
  %v601 = vadd.f32 %v591, %v599
  %v602 = vtanh.pop %v601
  %604 = vrot.lane.b32.xlu0 %v602, 64
  %v605 = vpop.permute.xlu0 %604
  %v607 = vmul.f32 %v585, %v605
  %v608 = vld [vmem:[#allocation5] sm:$0xff]
  %v609 = vxor.u32 %v578, 2147483648
  %v610 = vmul.f32 %v609, 1.442695
  %v611 = vpow.pop %v610
  %v612 = vadd.f32 %v611, 1.0
  %v613 = vrcp.pop %v612
  %v614 = vmul.f32 1.0, %v613
  %v615 = vtanh.pop %v578
  %617 = vrot.lane.b32.xlu0 %v608, 32
  %v618 = vpop.permute.xlu0 %617
  %v620 = vmul.f32 %v614, %v618
  %622 = vrot.lane.b32.xlu0 %v615, 64
  %v623 = vpop.permute.xlu0 %622
  %v625 = vmul.f32 %v614, %v623
  %627 = vrot.lane.b32.xlu0 %v625, 32
  %v628 = vpop.permute.xlu0 %627
  %v630 = vadd.f32 %v620, %v628
  %v631 = vtanh.pop %v630
  %633 = vrot.lane.b32.xlu0 %v631, 64
  %v634 = vpop.permute.xlu0 %633
  %v636 = vmul.f32 %v614, %v634
  %638 = vrot.lane.b32.xlu0 %v607, 32
  %v639 = vpop.permute.xlu0 %638
  %641 = vst.msk [vmem:[#allocation2] sm:$0xff] %vm15, %v639
  %643 = vrot.lane.b32.xlu0 %v601, 96
  %v644 = vpop.permute.xlu0 %643
  %646 = vst.msk [vmem:[#allocation4] sm:$0xff] %vm15, %v644
  %648 = vrot.lane.b32.xlu0 %v636, 32
  %v649 = vpop.permute.xlu0 %648
  %651 = vst.msk [vmem:[#allocation3] sm:$0xff] %vm15, %v649
  %653 = vrot.lane.b32.xlu0 %v630, 96
  %v654 = vpop.permute.xlu0 %653
  %656 = vst.msk [vmem:[#allocation5] sm:$0xff] %vm15, %v654
  %s657 = scalar_lea.vmem %s3, 16
  %658 = vst.msk [vmem:[%s657] sm:$0xff] %vm15, %v639
  %659 = vrot.lane.b32.xlu0 %v636, 64
  %v660 = vpop.permute.xlu0 %659
  %s662 = scalar_lea.vmem %s3, 40
  %663 = vst.msk [vmem:[%s662] sm:$0xff] %vm232, %v660
  %v664 = vld [vmem:[#allocation2] sm:$0xff]
  %v665 = vpack.c.bf16 %v664, %v664
  %v666 = vld [vmem:[%s1] sm:$0xf]
  %v667 = vld [vmem:[%s1 + $0x4] sm:$0xf]
  %v668 = vld [vmem:[%s1 + $0x8] sm:$0xf]
  %v669 = vld [vmem:[%s1 + $0xc] sm:$0xf]
  %v674 = vunpack.c.l.b16 %v666
  %v675 = vunpack.c.l.b16 %v667
  %v676 = vunpack.c.l.b16 %v668
  %v677 = vunpack.c.l.b16 %v669
  %v678 = vpack.c.b16 %v675, %v674
  %v679 = vpack.c.b16 %v677, %v676
  %v683 = vsel %vm15, %v665, 0
  %685 = vmatprep.subr.bf16.mxu0 0
  %686 = vmatpush1.bf16.msra.mxu0 %v678
  %687 = vmatprep.subr.bf16.mxu0 0
  %688 = vmatpush1.bf16.msra.mxu0 %v679
  %689 = vmatprep.subr.bf16.mxu0 0
  %690 = vmatpush1.bf16.msra.mxu0 0
  %691 = vmatprep.subr.bf16.mxu0 0
  %692 = vmatpush1.bf16.msra.mxu0 0
  %693 = vmatprep.subr.bf16.mxu0 0
  %694 = vmatpush1.bf16.msra.mxu0 0
  %695 = vmatprep.subr.bf16.mxu0 0
  %696 = vmatpush1.bf16.msra.mxu0 0
  %697 = vmatprep.subr.bf16.mxu0 0
  %698 = vmatpush1.bf16.msra.mxu0 0
  %699 = vmatprep.subr.bf16.mxu0 0
  %700 = vmatpush1.bf16.msra.mxu0 0
  %701 = vmatprep.subr.bf16.mxu0 0
  %702 = vmatpush1.bf16.msra.mxu0 0
  %703 = vmatprep.subr.bf16.mxu0 0
  %704 = vmatpush1.bf16.msra.mxu0 0
  %705 = vmatprep.subr.bf16.mxu0 0
  %706 = vmatpush1.bf16.msra.mxu0 0
  %707 = vmatprep.subr.bf16.mxu0 0
  %708 = vmatpush1.bf16.msra.mxu0 0
  %709 = vmatprep.subr.bf16.mxu0 0
  %710 = vmatpush1.bf16.msra.mxu0 0
  %711 = vmatprep.subr.bf16.mxu0 0
  %712 = vmatpush1.bf16.msra.mxu0 0
  %713 = vmatprep.subr.bf16.mxu0 0
  %714 = vmatpush1.bf16.msra.mxu0 0
  %715 = vmatprep.subr.bf16.mxu0 0
  %716 = vmatpush1.bf16.msra.mxu0 0
  %717 = vmatprep.mubr.bf16.mxu0 0
  %718 = vmatmul.mubr.bf16.gmra.mrb[0].mxu0 %v683
  %v719 = vpop.f32.mrb[0].mxu0
  %v720 = vadd.f32 0.0, %v719
  %v721 = vpop.f32.mrb[0].mxu0
  %v722 = vpop.f32.mrb[0].mxu0
  %v723 = vpop.f32.mrb[0].mxu0
  %724 = vdwg.mxu0
  %v725 = vld [vmem:[#allocation3] sm:$0xff]
  %v726 = vpack.c.bf16 %v725, %v725
  %v727 = vld [vmem:[%s2] sm:$0xf]
  %v728 = vld [vmem:[%s2 + $0x4] sm:$0xf]
  %v729 = vld [vmem:[%s2 + $0x8] sm:$0xf]
  %v730 = vld [vmem:[%s2 + $0xc] sm:$0xf]
  %v735 = vunpack.c.l.b16 %v727
  %v736 = vunpack.c.l.b16 %v728
  %v737 = vunpack.c.l.b16 %v729
  %v738 = vunpack.c.l.b16 %v730
  %v739 = vpack.c.b16 %v736, %v735
  %v740 = vpack.c.b16 %v738, %v737
  %v744 = vsel %vm15, %v726, 0
  %746 = vmatprep.subr.bf16.mxu0 0
  %747 = vmatpush1.bf16.msra.mxu0 %v739
  %748 = vmatprep.subr.bf16.mxu0 0
  %749 = vmatpush1.bf16.msra.mxu0 %v740
  %750 = vmatprep.subr.bf16.mxu0 0
  %751 = vmatpush1.bf16.msra.mxu0 0
  %752 = vmatprep.subr.bf16.mxu0 0
  %753 = vmatpush1.bf16.msra.mxu0 0
  %754 = vmatprep.subr.bf16.mxu0 0
  %755 = vmatpush1.bf16.msra.mxu0 0
  %756 = vmatprep.subr.bf16.mxu0 0
  %757 = vmatpush1.bf16.msra.mxu0 0
  %758 = vmatprep.subr.bf16.mxu0 0
  %759 = vmatpush1.bf16.msra.mxu0 0
  %760 = vmatprep.subr.bf16.mxu0 0
  %761 = vmatpush1.bf16.msra.mxu0 0
  %762 = vmatprep.subr.bf16.mxu0 0
  %763 = vmatpush1.bf16.msra.mxu0 0
  %764 = vmatprep.subr.bf16.mxu0 0
  %765 = vmatpush1.bf16.msra.mxu0 0
  %766 = vmatprep.subr.bf16.mxu0 0
  %767 = vmatpush1.bf16.msra.mxu0 0
  %768 = vmatprep.subr.bf16.mxu0 0
  %769 = vmatpush1.bf16.msra.mxu0 0
  %770 = vmatprep.subr.bf16.mxu0 0
  %771 = vmatpush1.bf16.msra.mxu0 0
  %772 = vmatprep.subr.bf16.mxu0 0
  %773 = vmatpush1.bf16.msra.mxu0 0
  %774 = vmatprep.subr.bf16.mxu0 0
  %775 = vmatpush1.bf16.msra.mxu0 0
  %776 = vmatprep.subr.bf16.mxu0 0
  %777 = vmatpush1.bf16.msra.mxu0 0
  %778 = vmatprep.mubr.bf16.mxu0 0
  %779 = vmatmul.mubr.bf16.gmra.mrb[0].mxu0 %v744
  %v780 = vpop.f32.mrb[0].mxu0
  %v781 = vadd.f32 0.0, %v780
  %v782 = vpop.f32.mrb[0].mxu0
  %v783 = vpop.f32.mrb[0].mxu0
  %v784 = vpop.f32.mrb[0].mxu0
  %785 = vdwg.mxu0
  %s786 = scalar_lea.vmem %s0, 24
  %v787 = vld [vmem:[%s786] sm:$0xf]
  %v788 = vunpack.c.l.bf16 %v787
  %v789 = vadd.f32 %v788, %v720
  %s790 = scalar_lea.vmem %s0, 32
  %v791 = vld [vmem:[%s790 + $0x4] sm:$0xf]
  %v792 = vunpack.c.l.bf16 %v791
  %v793 = vadd.f32 %v792, %v781
  %v794 = vld [vmem:[#allocation4] sm:$0xff]
  %v795 = vxor.u32 %v789, 2147483648
  %v796 = vmul.f32 %v795, 1.442695
  %v797 = vpow.pop %v796
  %v798 = vadd.f32 %v797, 1.0
  %v799 = vrcp.pop %v798
  %v800 = vmul.f32 1.0, %v799
  %v801 = vtanh.pop %v789
  %803 = vrot.lane.b32.xlu0 %v794, 32
  %v804 = vpop.permute.xlu0 %803
  %v806 = vmul.f32 %v800, %v804
  %808 = vrot.lane.b32.xlu0 %v801, 64
  %v809 = vpop.permute.xlu0 %808
  %v811 = vmul.f32 %v800, %v809
  %813 = vrot.lane.b32.xlu0 %v811, 32
  %v814 = vpop.permute.xlu0 %813
  %v816 = vadd.f32 %v806, %v814
  %v817 = vtanh.pop %v816
  %819 = vrot.lane.b32.xlu0 %v817, 64
  %v820 = vpop.permute.xlu0 %819
  %v822 = vmul.f32 %v800, %v820
  %v823 = vld [vmem:[#allocation5] sm:$0xff]
  %v824 = vxor.u32 %v793, 2147483648
  %v825 = vmul.f32 %v824, 1.442695
  %v826 = vpow.pop %v825
  %v827 = vadd.f32 %v826, 1.0
  %v828 = vrcp.pop %v827
  %v829 = vmul.f32 1.0, %v828
  %v830 = vtanh.pop %v793
  %832 = vrot.lane.b32.xlu0 %v823, 32
  %v833 = vpop.permute.xlu0 %832
  %v835 = vmul.f32 %v829, %v833
  %837 = vrot.lane.b32.xlu0 %v830, 64
  %v838 = vpop.permute.xlu0 %837
  %v840 = vmul.f32 %v829, %v838
  %842 = vrot.lane.b32.xlu0 %v840, 32
  %v843 = vpop.permute.xlu0 %842
  %v845 = vadd.f32 %v835, %v843
  %v846 = vtanh.pop %v845
  %848 = vrot.lane.b32.xlu0 %v846, 64
  %v849 = vpop.permute.xlu0 %848
  %v851 = vmul.f32 %v829, %v849
  %853 = vrot.lane.b32.xlu0 %v822, 32
  %v854 = vpop.permute.xlu0 %853
  %856 = vst.msk [vmem:[#allocation2] sm:$0xff] %vm15, %v854
  %858 = vrot.lane.b32.xlu0 %v816, 96
  %v859 = vpop.permute.xlu0 %858
  %861 = vst.msk [vmem:[#allocation4] sm:$0xff] %vm15, %v859
  %863 = vrot.lane.b32.xlu0 %v851, 32
  %v864 = vpop.permute.xlu0 %863
  %866 = vst.msk [vmem:[#allocation3] sm:$0xff] %vm15, %v864
  %868 = vrot.lane.b32.xlu0 %v845, 96
  %v869 = vpop.permute.xlu0 %868
  %871 = vst.msk [vmem:[#allocation5] sm:$0xff] %vm15, %v869
  %s872 = scalar_lea.vmem %s3, 24
  %873 = vst.msk [vmem:[%s872] sm:$0xff] %vm15, %v854
  %874 = vrot.lane.b32.xlu0 %v851, 64
  %v875 = vpop.permute.xlu0 %874
  %s877 = scalar_lea.vmem %s3, 32
  %878 = vst.msk [vmem:[%s877] sm:$0xff] %vm232, %v875
  %v879 = vld [vmem:[#allocation2] sm:$0xff]
  %v880 = vpack.c.bf16 %v879, %v879
  %v881 = vld [vmem:[%s1] sm:$0xf]
  %v882 = vld [vmem:[%s1 + $0x4] sm:$0xf]
  %v883 = vld [vmem:[%s1 + $0x8] sm:$0xf]
  %v884 = vld [vmem:[%s1 + $0xc] sm:$0xf]
  %v889 = vunpack.c.l.b16 %v881
  %v890 = vunpack.c.l.b16 %v882
  %v891 = vunpack.c.l.b16 %v883
  %v892 = vunpack.c.l.b16 %v884
  %v893 = vpack.c.b16 %v890, %v889
  %v894 = vpack.c.b16 %v892, %v891
  %v898 = vsel %vm15, %v880, 0
  %900 = vmatprep.subr.bf16.mxu0 0
  %901 = vmatpush1.bf16.msra.mxu0 %v893
  %902 = vmatprep.subr.bf16.mxu0 0
  %903 = vmatpush1.bf16.msra.mxu0 %v894
  %904 = vmatprep.subr.bf16.mxu0 0
  %905 = vmatpush1.bf16.msra.mxu0 0
  %906 = vmatprep.subr.bf16.mxu0 0
  %907 = vmatpush1.bf16.msra.mxu0 0
  %908 = vmatprep.subr.bf16.mxu0 0
  %909 = vmatpush1.bf16.msra.mxu0 0
  %910 = vmatprep.subr.bf16.mxu0 0
  %911 = vmatpush1.bf16.msra.mxu0 0
  %912 = vmatprep.subr.bf16.mxu0 0
  %913 = vmatpush1.bf16.msra.mxu0 0
  %914 = vmatprep.subr.bf16.mxu0 0
  %915 = vmatpush1.bf16.msra.mxu0 0
  %916 = vmatprep.subr.bf16.mxu0 0
  %917 = vmatpush1.bf16.msra.mxu0 0
  %918 = vmatprep.subr.bf16.mxu0 0
  %919 = vmatpush1.bf16.msra.mxu0 0
  %920 = vmatprep.subr.bf16.mxu0 0
  %921 = vmatpush1.bf16.msra.mxu0 0
  %922 = vmatprep.subr.bf16.mxu0 0
  %923 = vmatpush1.bf16.msra.mxu0 0
  %924 = vmatprep.subr.bf16.mxu0 0
  %925 = vmatpush1.bf16.msra.mxu0 0
  %926 = vmatprep.subr.bf16.mxu0 0
  %927 = vmatpush1.bf16.msra.mxu0 0
  %928 = vmatprep.subr.bf16.mxu0 0
  %929 = vmatpush1.bf16.msra.mxu0 0
  %930 = vmatprep.subr.bf16.mxu0 0
  %931 = vmatpush1.bf16.msra.mxu0 0
  %932 = vmatprep.mubr.bf16.mxu0 0
  %933 = vmatmul.mubr.bf16.gmra.mrb[0].mxu0 %v898
  %v934 = vpop.f32.mrb[0].mxu0
  %v935 = vadd.f32 0.0, %v934
  %v936 = vpop.f32.mrb[0].mxu0
  %v937 = vpop.f32.mrb[0].mxu0
  %v938 = vpop.f32.mrb[0].mxu0
  %939 = vdwg.mxu0
  %v940 = vld [vmem:[#allocation3] sm:$0xff]
  %v941 = vpack.c.bf16 %v940, %v940
  %v942 = vld [vmem:[%s2] sm:$0xf]
  %v943 = vld [vmem:[%s2 + $0x4] sm:$0xf]
  %v944 = vld [vmem:[%s2 + $0x8] sm:$0xf]
  %v945 = vld [vmem:[%s2 + $0xc] sm:$0xf]
  %v950 = vunpack.c.l.b16 %v942
  %v951 = vunpack.c.l.b16 %v943
  %v952 = vunpack.c.l.b16 %v944
  %v953 = vunpack.c.l.b16 %v945
  %v954 = vpack.c.b16 %v951, %v950
  %v955 = vpack.c.b16 %v953, %v952
  %v959 = vsel %vm15, %v941, 0
  %961 = vmatprep.subr.bf16.mxu0 0
  %962 = vmatpush1.bf16.msra.mxu0 %v954
  %963 = vmatprep.subr.bf16.mxu0 0
  %964 = vmatpush1.bf16.msra.mxu0 %v955
  %965 = vmatprep.subr.bf16.mxu0 0
  %966 = vmatpush1.bf16.msra.mxu0 0
  %967 = vmatprep.subr.bf16.mxu0 0
  %968 = vmatpush1.bf16.msra.mxu0 0
  %969 = vmatprep.subr.bf16.mxu0 0
  %970 = vmatpush1.bf16.msra.mxu0 0
  %971 = vmatprep.subr.bf16.mxu0 0
  %972 = vmatpush1.bf16.msra.mxu0 0
  %973 = vmatprep.subr.bf16.mxu0 0
  %974 = vmatpush1.bf16.msra.mxu0 0
  %975 = vmatprep.subr.bf16.mxu0 0
  %976 = vmatpush1.bf16.msra.mxu0 0
  %977 = vmatprep.subr.bf16.mxu0 0
  %978 = vmatpush1.bf16.msra.mxu0 0
  %979 = vmatprep.subr.bf16.mxu0 0
  %980 = vmatpush1.bf16.msra.mxu0 0
  %981 = vmatprep.subr.bf16.mxu0 0
  %982 = vmatpush1.bf16.msra.mxu0 0
  %983 = vmatprep.subr.bf16.mxu0 0
  %984 = vmatpush1.bf16.msra.mxu0 0
  %985 = vmatprep.subr.bf16.mxu0 0
  %986 = vmatpush1.bf16.msra.mxu0 0
  %987 = vmatprep.subr.bf16.mxu0 0
  %988 = vmatpush1.bf16.msra.mxu0 0
  %989 = vmatprep.subr.bf16.mxu0 0
  %990 = vmatpush1.bf16.msra.mxu0 0
  %991 = vmatprep.subr.bf16.mxu0 0
  %992 = vmatpush1.bf16.msra.mxu0 0
  %993 = vmatprep.mubr.bf16.mxu0 0
  %994 = vmatmul.mubr.bf16.gmra.mrb[0].mxu0 %v959
  %v995 = vpop.f32.mrb[0].mxu0
  %v996 = vadd.f32 0.0, %v995
  %v997 = vpop.f32.mrb[0].mxu0
  %v998 = vpop.f32.mrb[0].mxu0
  %v999 = vpop.f32.mrb[0].mxu0
  %1000 = vdwg.mxu0
  %v1001 = vld [vmem:[%s790] sm:$0xf]
  %v1002 = vunpack.c.l.bf16 %v1001
  %v1003 = vadd.f32 %v1002, %v935
  %v1004 = vld [vmem:[%s786 + $0x4] sm:$0xf]
  %v1005 = vunpack.c.l.bf16 %v1004
  %v1006 = vadd.f32 %v1005, %v996
  %v1007 = vld [vmem:[#allocation4] sm:$0xff]
  %v1008 = vxor.u32 %v1003, 2147483648
  %v1009 = vmul.f32 %v1008, 1.442695
  %v1010 = vpow.pop %v1009
  %v1011 = vadd.f32 %v1010, 1.0
  %v1012 = vrcp.pop %v1011
  %v1013 = vmul.f32 1.0, %v1012
  %v1014 = vtanh.pop %v1003
  %1016 = vrot.lane.b32.xlu0 %v1007, 32
  %v1017 = vpop.permute.xlu0 %1016
  %v1019 = vmul.f32 %v1013, %v1017
  %1021 = vrot.lane.b32.xlu0 %v1014, 64
  %v1022 = vpop.permute.xlu0 %1021
  %v1024 = vmul.f32 %v1013, %v1022
  %1026 = vrot.lane.b32.xlu0 %v1024, 32
  %v1027 = vpop.permute.xlu0 %1026
  %v1029 = vadd.f32 %v1019, %v1027
  %v1030 = vtanh.pop %v1029
  %1032 = vrot.lane.b32.xlu0 %v1030, 64
  %v1033 = vpop.permute.xlu0 %1032
  %v1035 = vmul.f32 %v1013, %v1033
  %v1036 = vld [vmem:[#allocation5] sm:$0xff]
  %v1037 = vxor.u32 %v1006, 2147483648
  %v1038 = vmul.f32 %v1037, 1.442695
  %v1039 = vpow.pop %v1038
  %v1040 = vadd.f32 %v1039, 1.0
  %v1041 = vrcp.pop %v1040
  %v1042 = vmul.f32 1.0, %v1041
  %v1043 = vtanh.pop %v1006
  %1045 = vrot.lane.b32.xlu0 %v1036, 32
  %v1046 = vpop.permute.xlu0 %1045
  %v1048 = vmul.f32 %v1042, %v1046
  %1050 = vrot.lane.b32.xlu0 %v1043, 64
  %v1051 = vpop.permute.xlu0 %1050
  %v1053 = vmul.f32 %v1042, %v1051
  %1055 = vrot.lane.b32.xlu0 %v1053, 32
  %v1056 = vpop.permute.xlu0 %1055
  %v1058 = vadd.f32 %v1048, %v1056
  %v1059 = vtanh.pop %v1058
  %1061 = vrot.lane.b32.xlu0 %v1059, 64
  %v1062 = vpop.permute.xlu0 %1061
  %v1064 = vmul.f32 %v1042, %v1062
  %1066 = vrot.lane.b32.xlu0 %v1035, 32
  %v1067 = vpop.permute.xlu0 %1066
  %1069 = vst.msk [vmem:[#allocation2] sm:$0xff] %vm15, %v1067
  %1071 = vrot.lane.b32.xlu0 %v1029, 96
  %v1072 = vpop.permute.xlu0 %1071
  %1074 = vst.msk [vmem:[#allocation4] sm:$0xff] %vm15, %v1072
  %1076 = vrot.lane.b32.xlu0 %v1064, 32
  %v1077 = vpop.permute.xlu0 %1076
  %1079 = vst.msk [vmem:[#allocation3] sm:$0xff] %vm15, %v1077
  %1081 = vrot.lane.b32.xlu0 %v1058, 96
  %v1082 = vpop.permute.xlu0 %1081
  %1084 = vst.msk [vmem:[#allocation5] sm:$0xff] %vm15, %v1082
  %1085 = vst.msk [vmem:[%s877] sm:$0xff] %vm15, %v1067
  %1086 = vrot.lane.b32.xlu0 %v1064, 64
  %v1087 = vpop.permute.xlu0 %1086
  %1089 = vst.msk [vmem:[%s872] sm:$0xff] %vm232, %v1087
  %v1090 = vld [vmem:[#allocation2] sm:$0xff]
  %v1091 = vpack.c.bf16 %v1090, %v1090
  %v1092 = vld [vmem:[%s1] sm:$0xf]
  %v1093 = vld [vmem:[%s1 + $0x4] sm:$0xf]
  %v1094 = vld [vmem:[%s1 + $0x8] sm:$0xf]
  %v1095 = vld [vmem:[%s1 + $0xc] sm:$0xf]
  %v1100 = vunpack.c.l.b16 %v1092
  %v1101 = vunpack.c.l.b16 %v1093
  %v1102 = vunpack.c.l.b16 %v1094
  %v1103 = vunpack.c.l.b16 %v1095
  %v1104 = vpack.c.b16 %v1101, %v1100
  %v1105 = vpack.c.b16 %v1103, %v1102
  %v1109 = vsel %vm15, %v1091, 0
  %1111 = vmatprep.subr.bf16.mxu0 0
  %1112 = vmatpush1.bf16.msra.mxu0 %v1104
  %1113 = vmatprep.subr.bf16.mxu0 0
  %1114 = vmatpush1.bf16.msra.mxu0 %v1105
  %1115 = vmatprep.subr.bf16.mxu0 0
  %1116 = vmatpush1.bf16.msra.mxu0 0
  %1117 = vmatprep.subr.bf16.mxu0 0
  %1118 = vmatpush1.bf16.msra.mxu0 0
  %1119 = vmatprep.subr.bf16.mxu0 0
  %1120 = vmatpush1.bf16.msra.mxu0 0
  %1121 = vmatprep.subr.bf16.mxu0 0
  %1122 = vmatpush1.bf16.msra.mxu0 0
  %1123 = vmatprep.subr.bf16.mxu0 0
  %1124 = vmatpush1.bf16.msra.mxu0 0
  %1125 = vmatprep.subr.bf16.mxu0 0
  %1126 = vmatpush1.bf16.msra.mxu0 0
  %1127 = vmatprep.subr.bf16.mxu0 0
  %1128 = vmatpush1.bf16.msra.mxu0 0
  %1129 = vmatprep.subr.bf16.mxu0 0
  %1130 = vmatpush1.bf16.msra.mxu0 0
  %1131 = vmatprep.subr.bf16.mxu0 0
  %1132 = vmatpush1.bf16.msra.mxu0 0
  %1133 = vmatprep.subr.bf16.mxu0 0
  %1134 = vmatpush1.bf16.msra.mxu0 0
  %1135 = vmatprep.subr.bf16.mxu0 0
  %1136 = vmatpush1.bf16.msra.mxu0 0
  %1137 = vmatprep.subr.bf16.mxu0 0
  %1138 = vmatpush1.bf16.msra.mxu0 0
  %1139 = vmatprep.subr.bf16.mxu0 0
  %1140 = vmatpush1.bf16.msra.mxu0 0
  %1141 = vmatprep.subr.bf16.mxu0 0
  %1142 = vmatpush1.bf16.msra.mxu0 0
  %1143 = vmatprep.mubr.bf16.mxu0 0
  %1144 = vmatmul.mubr.bf16.gmra.mrb[0].mxu0 %v1109
  %v1145 = vpop.f32.mrb[0].mxu0
  %v1146 = vadd.f32 0.0, %v1145
  %v1147 = vpop.f32.mrb[0].mxu0
  %v1148 = vpop.f32.mrb[0].mxu0
  %v1149 = vpop.f32.mrb[0].mxu0
  %1150 = vdwg.mxu0
  %v1151 = vld [vmem:[#allocation3] sm:$0xff]
  %v1152 = vpack.c.bf16 %v1151, %v1151
  %v1153 = vld [vmem:[%s2] sm:$0xf]
  %v1154 = vld [vmem:[%s2 + $0x4] sm:$0xf]
  %v1155 = vld [vmem:[%s2 + $0x8] sm:$0xf]
  %v1156 = vld [vmem:[%s2 + $0xc] sm:$0xf]
  %v1161 = vunpack.c.l.b16 %v1153
  %v1162 = vunpack.c.l.b16 %v1154
  %v1163 = vunpack.c.l.b16 %v1155
  %v1164 = vunpack.c.l.b16 %v1156
  %v1165 = vpack.c.b16 %v1162, %v1161
  %v1166 = vpack.c.b16 %v1164, %v1163
  %v1170 = vsel %vm15, %v1152, 0
  %1172 = vmatprep.subr.bf16.mxu0 0
  %1173 = vmatpush1.bf16.msra.mxu0 %v1165
  %1174 = vmatprep.subr.bf16.mxu0 0
  %1175 = vmatpush1.bf16.msra.mxu0 %v1166
  %1176 = vmatprep.subr.bf16.mxu0 0
  %1177 = vmatpush1.bf16.msra.mxu0 0
  %1178 = vmatprep.subr.bf16.mxu0 0
  %1179 = vmatpush1.bf16.msra.mxu0 0
  %1180 = vmatprep.subr.bf16.mxu0 0
  %1181 = vmatpush1.bf16.msra.mxu0 0
  %1182 = vmatprep.subr.bf16.mxu0 0
  %1183 = vmatpush1.bf16.msra.mxu0 0
  %1184 = vmatprep.subr.bf16.mxu0 0
  %1185 = vmatpush1.bf16.msra.mxu0 0
  %1186 = vmatprep.subr.bf16.mxu0 0
  %1187 = vmatpush1.bf16.msra.mxu0 0
  %1188 = vmatprep.subr.bf16.mxu0 0
  %1189 = vmatpush1.bf16.msra.mxu0 0
  %1190 = vmatprep.subr.bf16.mxu0 0
  %1191 = vmatpush1.bf16.msra.mxu0 0
  %1192 = vmatprep.subr.bf16.mxu0 0
  %1193 = vmatpush1.bf16.msra.mxu0 0
  %1194 = vmatprep.subr.bf16.mxu0 0
  %1195 = vmatpush1.bf16.msra.mxu0 0
  %1196 = vmatprep.subr.bf16.mxu0 0
  %1197 = vmatpush1.bf16.msra.mxu0 0
  %1198 = vmatprep.subr.bf16.mxu0 0
  %1199 = vmatpush1.bf16.msra.mxu0 0
  %1200 = vmatprep.subr.bf16.mxu0 0
  %1201 = vmatpush1.bf16.msra.mxu0 0
  %1202 = vmatprep.subr.bf16.mxu0 0
  %1203 = vmatpush1.bf16.msra.mxu0 0
  %1204 = vmatprep.mubr.bf16.mxu0 0
  %1205 = vmatmul.mubr.bf16.gmra.mrb[0].mxu0 %v1170
  %v1206 = vpop.f32.mrb[0].mxu0
  %v1207 = vadd.f32 0.0, %v1206
  %v1208 = vpop.f32.mrb[0].mxu0
  %v1209 = vpop.f32.mrb[0].mxu0
  %v1210 = vpop.f32.mrb[0].mxu0
  %1211 = vdwg.mxu0
  %v1212 = vld [vmem:[%s575] sm:$0xf]
  %v1213 = vunpack.c.l.bf16 %v1212
  %v1214 = vadd.f32 %v1213, %v1146
  %v1215 = vld [vmem:[%s571 + $0x4] sm:$0xf]
  %v1216 = vunpack.c.l.bf16 %v1215
  %v1217 = vadd.f32 %v1216, %v1207
  %v1218 = vld [vmem:[#allocation4] sm:$0xff]
  %v1219 = vxor.u32 %v1214, 2147483648
  %v1220 = vmul.f32 %v1219, 1.442695
  %v1221 = vpow.pop %v1220
  %v1222 = vadd.f32 %v1221, 1.0
  %v1223 = vrcp.pop %v1222
  %v1224 = vmul.f32 1.0, %v1223
  %v1225 = vtanh.pop %v1214
  %1227 = vrot.lane.b32.xlu0 %v1218, 32
  %v1228 = vpop.permute.xlu0 %1227
  %v1230 = vmul.f32 %v1224, %v1228
  %1232 = vrot.lane.b32.xlu0 %v1225, 64
  %v1233 = vpop.permute.xlu0 %1232
  %v1235 = vmul.f32 %v1224, %v1233
  %1237 = vrot.lane.b32.xlu0 %v1235, 32
  %v1238 = vpop.permute.xlu0 %1237
  %v1240 = vadd.f32 %v1230, %v1238
  %v1241 = vtanh.pop %v1240
  %1243 = vrot.lane.b32.xlu0 %v1241, 64
  %v1244 = vpop.permute.xlu0 %1243
  %v1246 = vmul.f32 %v1224, %v1244
  %v1247 = vld [vmem:[#allocation5] sm:$0xff]
  %v1248 = vxor.u32 %v1217, 2147483648
  %v1249 = vmul.f32 %v1248, 1.442695
  %v1250 = vpow.pop %v1249
  %v1251 = vadd.f32 %v1250, 1.0
  %v1252 = vrcp.pop %v1251
  %v1253 = vmul.f32 1.0, %v1252
  %v1254 = vtanh.pop %v1217
  %1256 = vrot.lane.b32.xlu0 %v1247, 32
  %v1257 = vpop.permute.xlu0 %1256
  %v1259 = vmul.f32 %v1253, %v1257
  %1261 = vrot.lane.b32.xlu0 %v1254, 64
  %v1262 = vpop.permute.xlu0 %1261
  %v1264 = vmul.f32 %v1253, %v1262
  %1266 = vrot.lane.b32.xlu0 %v1264, 32
  %v1267 = vpop.permute.xlu0 %1266
  %v1269 = vadd.f32 %v1259, %v1267
  %v1270 = vtanh.pop %v1269
  %1272 = vrot.lane.b32.xlu0 %v1270, 64
  %v1273 = vpop.permute.xlu0 %1272
  %v1275 = vmul.f32 %v1253, %v1273
  %1277 = vrot.lane.b32.xlu0 %v1246, 32
  %v1278 = vpop.permute.xlu0 %1277
  %1280 = vst.msk [vmem:[#allocation2] sm:$0xff] %vm15, %v1278
  %1282 = vrot.lane.b32.xlu0 %v1240, 96
  %v1283 = vpop.permute.xlu0 %1282
  %1285 = vst.msk [vmem:[#allocation4] sm:$0xff] %vm15, %v1283
  %1287 = vrot.lane.b32.xlu0 %v1275, 32
  %v1288 = vpop.permute.xlu0 %1287
  %1290 = vst.msk [vmem:[#allocation3] sm:$0xff] %vm15, %v1288
  %1292 = vrot.lane.b32.xlu0 %v1269, 96
  %v1293 = vpop.permute.xlu0 %1292
  %1295 = vst.msk [vmem:[#allocation5] sm:$0xff] %vm15, %v1293
  %1296 = vst.msk [vmem:[%s662] sm:$0xff] %vm15, %v1278
  %1297 = vrot.lane.b32.xlu0 %v1275, 64
  %v1298 = vpop.permute.xlu0 %1297
  %1300 = vst.msk [vmem:[%s657] sm:$0xff] %vm232, %v1298
  %v1301 = vld [vmem:[#allocation2] sm:$0xff]
  %v1302 = vpack.c.bf16 %v1301, %v1301
  %v1303 = vld [vmem:[%s1] sm:$0xf]
  %v1304 = vld [vmem:[%s1 + $0x4] sm:$0xf]
  %v1305 = vld [vmem:[%s1 + $0x8] sm:$0xf]
  %v1306 = vld [vmem:[%s1 + $0xc] sm:$0xf]
  %v1311 = vunpack.c.l.b16 %v1303
  %v1312 = vunpack.c.l.b16 %v1304
  %v1313 = vunpack.c.l.b16 %v1305
  %v1314 = vunpack.c.l.b16 %v1306
  %v1315 = vpack.c.b16 %v1312, %v1311
  %v1316 = vpack.c.b16 %v1314, %v1313
  %v1320 = vsel %vm15, %v1302, 0
  %1322 = vmatprep.subr.bf16.mxu0 0
  %1323 = vmatpush1.bf16.msra.mxu0 %v1315
  %1324 = vmatprep.subr.bf16.mxu0 0
  %1325 = vmatpush1.bf16.msra.mxu0 %v1316
  %1326 = vmatprep.subr.bf16.mxu0 0
  %1327 = vmatpush1.bf16.msra.mxu0 0
  %1328 = vmatprep.subr.bf16.mxu0 0
  %1329 = vmatpush1.bf16.msra.mxu0 0
  %1330 = vmatprep.subr.bf16.mxu0 0
  %1331 = vmatpush1.bf16.msra.mxu0 0
  %1332 = vmatprep.subr.bf16.mxu0 0
  %1333 = vmatpush1.bf16.msra.mxu0 0
  %1334 = vmatprep.subr.bf16.mxu0 0
  %1335 = vmatpush1.bf16.msra.mxu0 0
  %1336 = vmatprep.subr.bf16.mxu0 0
  %1337 = vmatpush1.bf16.msra.mxu0 0
  %1338 = vmatprep.subr.bf16.mxu0 0
  %1339 = vmatpush1.bf16.msra.mxu0 0
  %1340 = vmatprep.subr.bf16.mxu0 0
  %1341 = vmatpush1.bf16.msra.mxu0 0
  %1342 = vmatprep.subr.bf16.mxu0 0
  %1343 = vmatpush1.bf16.msra.mxu0 0
  %1344 = vmatprep.subr.bf16.mxu0 0
  %1345 = vmatpush1.bf16.msra.mxu0 0
  %1346 = vmatprep.subr.bf16.mxu0 0
  %1347 = vmatpush1.bf16.msra.mxu0 0
  %1348 = vmatprep.subr.bf16.mxu0 0
  %1349 = vmatpush1.bf16.msra.mxu0 0
  %1350 = vmatprep.subr.bf16.mxu0 0
  %1351 = vmatpush1.bf16.msra.mxu0 0
  %1352 = vmatprep.subr.bf16.mxu0 0
  %1353 = vmatpush1.bf16.msra.mxu0 0
  %1354 = vmatprep.mubr.bf16.mxu0 0
  %1355 = vmatmul.mubr.bf16.gmra.mrb[0].mxu0 %v1320
  %v1356 = vpop.f32.mrb[0].mxu0
  %v1357 = vadd.f32 0.0, %v1356
  %v1358 = vpop.f32.mrb[0].mxu0
  %v1359 = vpop.f32.mrb[0].mxu0
  %v1360 = vpop.f32.mrb[0].mxu0
  %1361 = vdwg.mxu0
  %v1362 = vld [vmem:[#allocation3] sm:$0xff]
  %v1363 = vpack.c.bf16 %v1362, %v1362
  %v1364 = vld [vmem:[%s2] sm:$0xf]
  %v1365 = vld [vmem:[%s2 + $0x4] sm:$0xf]
  %v1366 = vld [vmem:[%s2 + $0x8] sm:$0xf]
  %v1367 = vld [vmem:[%s2 + $0xc] sm:$0xf]
  %v1372 = vunpack.c.l.b16 %v1364
  %v1373 = vunpack.c.l.b16 %v1365
  %v1374 = vunpack.c.l.b16 %v1366
  %v1375 = vunpack.c.l.b16 %v1367
  %v1376 = vpack.c.b16 %v1373, %v1372
  %v1377 = vpack.c.b16 %v1375, %v1374
  %v1381 = vsel %vm15, %v1363, 0
  %1383 = vmatprep.subr.bf16.mxu0 0
  %1384 = vmatpush1.bf16.msra.mxu0 %v1376
  %1385 = vmatprep.subr.bf16.mxu0 0
  %1386 = vmatpush1.bf16.msra.mxu0 %v1377
  %1387 = vmatprep.subr.bf16.mxu0 0
  %1388 = vmatpush1.bf16.msra.mxu0 0
  %1389 = vmatprep.subr.bf16.mxu0 0
  %1390 = vmatpush1.bf16.msra.mxu0 0
  %1391 = vmatprep.subr.bf16.mxu0 0
  %1392 = vmatpush1.bf16.msra.mxu0 0
  %1393 = vmatprep.subr.bf16.mxu0 0
  %1394 = vmatpush1.bf16.msra.mxu0 0
  %1395 = vmatprep.subr.bf16.mxu0 0
  %1396 = vmatpush1.bf16.msra.mxu0 0
  %1397 = vmatprep.subr.bf16.mxu0 0
  %1398 = vmatpush1.bf16.msra.mxu0 0
  %1399 = vmatprep.subr.bf16.mxu0 0
  %1400 = vmatpush1.bf16.msra.mxu0 0
  %1401 = vmatprep.subr.bf16.mxu0 0
  %1402 = vmatpush1.bf16.msra.mxu0 0
  %1403 = vmatprep.subr.bf16.mxu0 0
  %1404 = vmatpush1.bf16.msra.mxu0 0
  %1405 = vmatprep.subr.bf16.mxu0 0
  %1406 = vmatpush1.bf16.msra.mxu0 0
  %1407 = vmatprep.subr.bf16.mxu0 0
  %1408 = vmatpush1.bf16.msra.mxu0 0
  %1409 = vmatprep.subr.bf16.mxu0 0
  %1410 = vmatpush1.bf16.msra.mxu0 0
  %1411 = vmatprep.subr.bf16.mxu0 0
  %1412 = vmatpush1.bf16.msra.mxu0 0
  %1413 = vmatprep.subr.bf16.mxu0 0
  %1414 = vmatpush1.bf16.msra.mxu0 0
  %1415 = vmatprep.mubr.bf16.mxu0 0
  %1416 = vmatmul.mubr.bf16.gmra.mrb[0].mxu0 %v1381
  %v1417 = vpop.f32.mrb[0].mxu0
  %v1418 = vadd.f32 0.0, %v1417
  %v1419 = vpop.f32.mrb[0].mxu0
  %v1420 = vpop.f32.mrb[0].mxu0
  %v1421 = vpop.f32.mrb[0].mxu0
  %1422 = vdwg.mxu0
  %v1423 = vld [vmem:[%s360] sm:$0xf]
  %v1424 = vunpack.c.l.bf16 %v1423
  %v1425 = vadd.f32 %v1424, %v1357
  %v1426 = vld [vmem:[%s356 + $0x4] sm:$0xf]
  %v1427 = vunpack.c.l.bf16 %v1426
  %v1428 = vadd.f32 %v1427, %v1418
  %v1429 = vld [vmem:[#allocation4] sm:$0xff]
  %v1430 = vxor.u32 %v1425, 2147483648
  %v1431 = vmul.f32 %v1430, 1.442695
  %v1432 = vpow.pop %v1431
  %v1433 = vadd.f32 %v1432, 1.0
  %v1434 = vrcp.pop %v1433
  %v1435 = vmul.f32 1.0, %v1434
  %v1436 = vtanh.pop %v1425
  %1438 = vrot.lane.b32.xlu0 %v1429, 32
  %v1439 = vpop.permute.xlu0 %1438
  %v1441 = vmul.f32 %v1435, %v1439
  %1443 = vrot.lane.b32.xlu0 %v1436, 64
  %v1444 = vpop.permute.xlu0 %1443
  %v1446 = vmul.f32 %v1435, %v1444
  %1448 = vrot.lane.b32.xlu0 %v1446, 32
  %v1449 = vpop.permute.xlu0 %1448
  %v1451 = vadd.f32 %v1441, %v1449
  %v1452 = vtanh.pop %v1451
  %1454 = vrot.lane.b32.xlu0 %v1452, 64
  %v1455 = vpop.permute.xlu0 %1454
  %v1457 = vmul.f32 %v1435, %v1455
  %v1458 = vld [vmem:[#allocation5] sm:$0xff]
  %v1459 = vxor.u32 %v1428, 2147483648
  %v1460 = vmul.f32 %v1459, 1.442695
  %v1461 = vpow.pop %v1460
  %v1462 = vadd.f32 %v1461, 1.0
  %v1463 = vrcp.pop %v1462
  %v1464 = vmul.f32 1.0, %v1463
  %v1465 = vtanh.pop %v1428
  %1467 = vrot.lane.b32.xlu0 %v1458, 32
  %v1468 = vpop.permute.xlu0 %1467
  %v1470 = vmul.f32 %v1464, %v1468
  %1472 = vrot.lane.b32.xlu0 %v1465, 64
  %v1473 = vpop.permute.xlu0 %1472
  %v1475 = vmul.f32 %v1464, %v1473
  %1477 = vrot.lane.b32.xlu0 %v1475, 32
  %v1478 = vpop.permute.xlu0 %1477
  %v1480 = vadd.f32 %v1470, %v1478
  %v1481 = vtanh.pop %v1480
  %1483 = vrot.lane.b32.xlu0 %v1481, 64
  %v1484 = vpop.permute.xlu0 %1483
  %v1486 = vmul.f32 %v1464, %v1484
  %1488 = vrot.lane.b32.xlu0 %v1457, 32
  %v1489 = vpop.permute.xlu0 %1488
  %1491 = vst.msk [vmem:[#allocation2] sm:$0xff] %vm15, %v1489
  %1493 = vrot.lane.b32.xlu0 %v1451, 96
  %v1494 = vpop.permute.xlu0 %1493
  %1496 = vst.msk [vmem:[#allocation4] sm:$0xff] %vm15, %v1494
  %1498 = vrot.lane.b32.xlu0 %v1486, 32
  %v1499 = vpop.permute.xlu0 %1498
  %1501 = vst.msk [vmem:[#allocation3] sm:$0xff] %vm15, %v1499
  %1503 = vrot.lane.b32.xlu0 %v1480, 96
  %v1504 = vpop.permute.xlu0 %1503
  %1506 = vst.msk [vmem:[#allocation5] sm:$0xff] %vm15, %v1504
  %1507 = vst.msk [vmem:[%s447] sm:$0xff] %vm15, %v1489
  %1508 = vrot.lane.b32.xlu0 %v1486, 64
  %v1509 = vpop.permute.xlu0 %1508
  %1511 = vst.msk [vmem:[%s442] sm:$0xff] %vm232, %v1509
  %v1512 = vld [vmem:[#allocation2] sm:$0xff]
  %v1513 = vpack.c.bf16 %v1512, %v1512
  %v1514 = vld [vmem:[%s1] sm:$0xf]
  %v1515 = vld [vmem:[%s1 + $0x4] sm:$0xf]
  %v1516 = vld [vmem:[%s1 + $0x8] sm:$0xf]
  %v1517 = vld [vmem:[%s1 + $0xc] sm:$0xf]
  %v1522 = vunpack.c.l.b16 %v1514
  %v1523 = vunpack.c.l.b16 %v1515
  %v1524 = vunpack.c.l.b16 %v1516
  %v1525 = vunpack.c.l.b16 %v1517
  %v1526 = vpack.c.b16 %v1523, %v1522
  %v1527 = vpack.c.b16 %v1525, %v1524
  %v1531 = vsel %vm15, %v1513, 0
  %1533 = vmatprep.subr.bf16.mxu0 0
  %1534 = vmatpush1.bf16.msra.mxu0 %v1526
  %1535 = vmatprep.subr.bf16.mxu0 0
  %1536 = vmatpush1.bf16.msra.mxu0 %v1527
  %1537 = vmatprep.subr.bf16.mxu0 0
  %1538 = vmatpush1.bf16.msra.mxu0 0
  %1539 = vmatprep.subr.bf16.mxu0 0
  %1540 = vmatpush1.bf16.msra.mxu0 0
  %1541 = vmatprep.subr.bf16.mxu0 0
  %1542 = vmatpush1.bf16.msra.mxu0 0
  %1543 = vmatprep.subr.bf16.mxu0 0
  %1544 = vmatpush1.bf16.msra.mxu0 0
  %1545 = vmatprep.subr.bf16.mxu0 0
  %1546 = vmatpush1.bf16.msra.mxu0 0
  %1547 = vmatprep.subr.bf16.mxu0 0
  %1548 = vmatpush1.bf16.msra.mxu0 0
  %1549 = vmatprep.subr.bf16.mxu0 0
  %1550 = vmatpush1.bf16.msra.mxu0 0
  %1551 = vmatprep.subr.bf16.mxu0 0
  %1552 = vmatpush1.bf16.msra.mxu0 0
  %1553 = vmatprep.subr.bf16.mxu0 0
  %1554 = vmatpush1.bf16.msra.mxu0 0
  %1555 = vmatprep.subr.bf16.mxu0 0
  %1556 = vmatpush1.bf16.msra.mxu0 0
  %1557 = vmatprep.subr.bf16.mxu0 0
  %1558 = vmatpush1.bf16.msra.mxu0 0
  %1559 = vmatprep.subr.bf16.mxu0 0
  %1560 = vmatpush1.bf16.msra.mxu0 0
  %1561 = vmatprep.subr.bf16.mxu0 0
  %1562 = vmatpush1.bf16.msra.mxu0 0
  %1563 = vmatprep.subr.bf16.mxu0 0
  %1564 = vmatpush1.bf16.msra.mxu0 0
  %1565 = vmatprep.mubr.bf16.mxu0 0
  %1566 = vmatmul.mubr.bf16.gmra.mrb[0].mxu0 %v1531
  %v1567 = vpop.f32.mrb[0].mxu0
  %v1568 = vadd.f32 0.0, %v1567
  %v1569 = vpop.f32.mrb[0].mxu0
  %v1570 = vpop.f32.mrb[0].mxu0
  %v1571 = vpop.f32.mrb[0].mxu0
  %1572 = vdwg.mxu0
  %v1573 = vld [vmem:[#allocation3] sm:$0xff]
  %v1574 = vpack.c.bf16 %v1573, %v1573
  %v1575 = vld [vmem:[%s2] sm:$0xf]
  %v1576 = vld [vmem:[%s2 + $0x4] sm:$0xf]
  %v1577 = vld [vmem:[%s2 + $0x8] sm:$0xf]
  %v1578 = vld [vmem:[%s2 + $0xc] sm:$0xf]
  %v1583 = vunpack.c.l.b16 %v1575
  %v1584 = vunpack.c.l.b16 %v1576
  %v1585 = vunpack.c.l.b16 %v1577
  %v1586 = vunpack.c.l.b16 %v1578
  %v1587 = vpack.c.b16 %v1584, %v1583
  %v1588 = vpack.c.b16 %v1586, %v1585
  %v1592 = vsel %vm15, %v1574, 0
  %1594 = vmatprep.subr.bf16.mxu0 0
  %1595 = vmatpush1.bf16.msra.mxu0 %v1587
  %1596 = vmatprep.subr.bf16.mxu0 0
  %1597 = vmatpush1.bf16.msra.mxu0 %v1588
  %1598 = vmatprep.subr.bf16.mxu0 0
  %1599 = vmatpush1.bf16.msra.mxu0 0
  %1600 = vmatprep.subr.bf16.mxu0 0
  %1601 = vmatpush1.bf16.msra.mxu0 0
  %1602 = vmatprep.subr.bf16.mxu0 0
  %1603 = vmatpush1.bf16.msra.mxu0 0
  %1604 = vmatprep.subr.bf16.mxu0 0
  %1605 = vmatpush1.bf16.msra.mxu0 0
  %1606 = vmatprep.subr.bf16.mxu0 0
  %1607 = vmatpush1.bf16.msra.mxu0 0
  %1608 = vmatprep.subr.bf16.mxu0 0
  %1609 = vmatpush1.bf16.msra.mxu0 0
  %1610 = vmatprep.subr.bf16.mxu0 0
  %1611 = vmatpush1.bf16.msra.mxu0 0
  %1612 = vmatprep.subr.bf16.mxu0 0
  %1613 = vmatpush1.bf16.msra.mxu0 0
  %1614 = vmatprep.subr.bf16.mxu0 0
  %1615 = vmatpush1.bf16.msra.mxu0 0
  %1616 = vmatprep.subr.bf16.mxu0 0
  %1617 = vmatpush1.bf16.msra.mxu0 0
  %1618 = vmatprep.subr.bf16.mxu0 0
  %1619 = vmatpush1.bf16.msra.mxu0 0
  %1620 = vmatprep.subr.bf16.mxu0 0
  %1621 = vmatpush1.bf16.msra.mxu0 0
  %1622 = vmatprep.subr.bf16.mxu0 0
  %1623 = vmatpush1.bf16.msra.mxu0 0
  %1624 = vmatprep.subr.bf16.mxu0 0
  %1625 = vmatpush1.bf16.msra.mxu0 0
  %1626 = vmatprep.mubr.bf16.mxu0 0
  %1627 = vmatmul.mubr.bf16.gmra.mrb[0].mxu0 %v1592
  %v1628 = vpop.f32.mrb[0].mxu0
  %v1629 = vadd.f32 0.0, %v1628
  %v1630 = vpop.f32.mrb[0].mxu0
  %v1631 = vpop.f32.mrb[0].mxu0
  %v1632 = vpop.f32.mrb[0].mxu0
  %1633 = vdwg.mxu0
  %v1634 = vld [vmem:[%s145] sm:$0xf]
  %v1635 = vunpack.c.l.bf16 %v1634
  %v1636 = vadd.f32 %v1635, %v1568
  %v1637 = vld [vmem:[%s0 + $0x4] sm:$0xf]
  %v1638 = vunpack.c.l.bf16 %v1637
  %v1639 = vadd.f32 %v1638, %v1629
  %v1640 = vld [vmem:[#allocation4] sm:$0xff]
  %v1641 = vxor.u32 %v1636, 2147483648
  %v1642 = vmul.f32 %v1641, 1.442695
  %v1643 = vpow.pop %v1642
  %v1644 = vadd.f32 %v1643, 1.0
  %v1645 = vrcp.pop %v1644
  %v1646 = vmul.f32 1.0, %v1645
  %v1647 = vtanh.pop %v1636
  %1649 = vrot.lane.b32.xlu0 %v1640, 32
  %v1650 = vpop.permute.xlu0 %1649
  %v1652 = vmul.f32 %v1646, %v1650
  %1654 = vrot.lane.b32.xlu0 %v1647, 64
  %v1655 = vpop.permute.xlu0 %1654
  %v1657 = vmul.f32 %v1646, %v1655
  %1659 = vrot.lane.b32.xlu0 %v1657, 32
  %v1660 = vpop.permute.xlu0 %1659
  %v1662 = vadd.f32 %v1652, %v1660
  %v1663 = vtanh.pop %v1662
  %1665 = vrot.lane.b32.xlu0 %v1663, 64
  %v1666 = vpop.permute.xlu0 %1665
  %v1668 = vmul.f32 %v1646, %v1666
  %v1669 = vld [vmem:[#allocation5] sm:$0xff]
  %v1670 = vxor.u32 %v1639, 2147483648
  %v1671 = vmul.f32 %v1670, 1.442695
  %v1672 = vpow.pop %v1671
  %v1673 = vadd.f32 %v1672, 1.0
  %v1674 = vrcp.pop %v1673
  %v1675 = vmul.f32 1.0, %v1674
  %v1676 = vtanh.pop %v1639
  %1678 = vrot.lane.b32.xlu0 %v1669, 32
  %v1679 = vpop.permute.xlu0 %1678
  %v1681 = vmul.f32 %v1675, %v1679
  %1683 = vrot.lane.b32.xlu0 %v1676, 64
  %v1684 = vpop.permute.xlu0 %1683
  %v1686 = vmul.f32 %v1675, %v1684
  %1688 = vrot.lane.b32.xlu0 %v1686, 32
  %v1689 = vpop.permute.xlu0 %1688
  %v1691 = vadd.f32 %v1681, %v1689
  %v1692 = vtanh.pop %v1691
  %1694 = vrot.lane.b32.xlu0 %v1692, 64
  %v1695 = vpop.permute.xlu0 %1694
  %v1697 = vmul.f32 %v1675, %v1695
  %1699 = vrot.lane.b32.xlu0 %v1668, 32
  %v1700 = vpop.permute.xlu0 %1699
  %1702 = vst.msk [vmem:[#allocation2] sm:$0xff] %vm15, %v1700
  %1704 = vrot.lane.b32.xlu0 %v1662, 96
  %v1705 = vpop.permute.xlu0 %1704
  %1707 = vst.msk [vmem:[#allocation4] sm:$0xff] %vm15, %v1705
  %1709 = vrot.lane.b32.xlu0 %v1697, 32
  %v1710 = vpop.permute.xlu0 %1709
  %1712 = vst.msk [vmem:[#allocation3] sm:$0xff] %vm15, %v1710
  %1714 = vrot.lane.b32.xlu0 %v1691, 96
  %v1715 = vpop.permute.xlu0 %1714
  %1717 = vst.msk [vmem:[#allocation5] sm:$0xff] %vm15, %v1715
  %1718 = vst.msk [vmem:[%s231] sm:$0xff] %vm15, %v1700
  %1719 = vrot.lane.b32.xlu0 %v1697, 64
  %v1720 = vpop.permute.xlu0 %1719
  %1722 = vst.msk [vmem:[%s3] sm:$0xff] %vm232, %v1720
  // Predicated region
  $region14: #{_lambda_.7} parent=0 // pred_check
    _
  $region15: #{_lambda_.7} parent=0 // pred_check_branch
    %1724 = sbr.rel (0) target = $region17
  $region16: #{_lambda_.7} parent=0 // pred_region
    _
  $region17: #{_lambda_.7} parent=0 // pred_fallthru
    _
  // Predicated region
  $region18: #{_lambda_.7} parent=0 // pred_check
    _
  $region19: #{_lambda_.7} parent=0 // pred_check_branch
    %1726 = sbr.rel (0) target = $region21
  $region20: #{_lambda_.7} parent=0 // pred_region
    _
  $region21: #{_lambda_.7} parent=0 // pred_fallthru
    _

// kernel: _lambda_.11
$region0: #{_lambda_.11}
  #allocation0 [shape = 'u32[]', space=smem, size = 0x4, offset = 0x4, fixed_abs, tag = 'smem constant byte address 0x4 - core index']
  #allocation1 [shape = 'u32[144,128]{1,0:T(1,128)}', space=vmem, size = 0x12000, scoped, tag = 'internal scratch']
  %s0 = inlined_call_operand.vmem [shape: f32[2,8,512], index: 0, kind: input, shape index: {}]
  %s1 = inlined_call_operand.vmem [shape: f32[8,512], index: 1, kind: input, shape index: {}]
  %s2 = inlined_call_operand.vmem [shape: f32[8,512], index: 2, kind: input, shape index: {}]
  %s3 = inlined_call_operand.vmem [shape: f32[8,512], index: 3, kind: input, shape index: {}]
  %s4 = inlined_call_operand.vmem [shape: f32[8,8], index: 4, kind: input, shape index: {}]
  %s5 = inlined_call_operand.vmem [shape: f32[2,8,1], index: 5, kind: input, shape index: {}]
  %s6 = inlined_call_operand.vmem [shape: f32[2,1,8], index: 6, kind: input, shape index: {}]
  %s7 = inlined_call_operand.hbm [shape: f32[2,4,8,8], index: 7, kind: output, shape index: {}]
  %s8 = sld [smem:[#allocation0]]
  $region61: #{_lambda_.11} parent=0
    _
  %s10 = ssub.s32 1, %s8
  %s11 = scalar_select 0, %s10, %s8
  $region1: #{_lambda_.11} parent=0
    #allocation2 [shape = 'u8[32768]{0}', space=vmem, size = 0x8000, scoped, tag = 'output window, operand 0']
    #allocation3 [shape = 's32[2]{0}', space=sflag, size = 0x8, scoped, tag = 'scoped memory for _lambda_.11']
    %12 = vsyncpa [#allocation3], 0
    %s13 = scalar_lea.sflag [#allocation3], 1
    %14 = vsyncpa %s13, 0
    loop: start=0, step=1, limit=4
    $region2: #{_lambda_.11} parent=1 // loop_pre_header
      _
    $region3: #{_lambda_.11} parent=1 // loop_header
      %s16 = sphi 0, %s20
      %p17 = scmp.ge.s32.totalorder %s16, 4
      %s26 = sphi 0, %s28
      %s29 = sphi 0, %s26
      %s30 = sphi 0, %s29
      %s46 = sphi 0, %s30
      %s50 = sphi 0, %s50
      %s52 = sphi 0, %s50
      %s53 = sphi 0, %s52
      %s67 = sphi 0, %s53
      %s71 = sphi 0, %s71
      %s73 = sphi 0, %s71
      %s74 = sphi 0, %s73
      %s88 = sphi 0, %s74
      %s92 = sphi 0, %s92
      %s94 = sphi 0, %s92
      %s95 = sphi 0, %s94
      %s109 = sphi 0, %s95
      %s113 = sphi 0, %s113
      %s115 = sphi 0, %s113
      %s116 = sphi 0, %s115
      %s130 = sphi 0, %s116
      %s136 = sphi 0, %s138
      %s139 = sphi 0, %s136
      %s140 = sphi 0, %s139
      %s156 = sphi 0, %s140
      %s162 = sphi 0, %s164
      %s165 = sphi 0, %s162
      %s166 = sphi 0, %s165
      %s182 = sphi 0, %s166
      %s188 = sphi 0, %s190
      %s191 = sphi 0, %s188
      %s192 = sphi 0, %s191
      %s208 = sphi 0, %s192
    $region4: #{_lambda_.11} parent=1 // loop_header_branch
      %19 = sbr.rel (%p17) target = $region8
    $region5: #{_lambda_.11} parent=1 // loop_body
      %s21 = ssub.s32 %s16, 1
      %s22 = ssub.s32 %s16, 2
      %s23 = sadd.s32 %s16, 1
      %s24 = ssub.s32 %s16, %s23
      %p25 = scmp.eq.s32.totalorder %s24, 0
      %s27 = sadd.s32 %s26, 1
      %s28 = scalar_select %p25, %s26, %s27
      %p31 = pneg %p25
      %p32 = scmp.eq.s32.totalorder %s16, 1
      %p33 = por %p31, %p32
      %p34 = scmp.ne.s32.totalorder %s26, %s29
      %p35 = scmp.eq.s32.totalorder %s16, 0
      %p36 = por %p34, %p35
      %p37 = scmp.ne.s32.totalorder %s26, %s29
      %p38 = scmp.eq.s32.totalorder %s21, 1
      %p39 = por %p37, %p38
      %p40 = scmp.ne.s32.totalorder %s29, %s30
      %p41 = scmp.eq.s32.totalorder %s21, 0
      %p42 = por %p40, %p41
      %p43 = scmp.ne.s32.totalorder %s29, %s30
      %p44 = scmp.eq.s32.totalorder %s22, 1
      %p45 = por %p43, %p44
      %p47 = scmp.ne.s32.totalorder %s30, %s46
      %p48 = scmp.eq.s32.totalorder %s22, 0
      %p49 = por %p47, %p48
      %s51 = sadd.s32 %s50, 1
      %p54 = scmp.eq.s32.totalorder %s16, 1
      %p55 = scmp.ne.s32.totalorder %s50, %s52
      %p56 = scmp.eq.s32.totalorder %s16, 0
      %p57 = por %p55, %p56
      %p58 = scmp.ne.s32.totalorder %s50, %s52
      %p59 = scmp.eq.s32.totalorder %s21, 1
      %p60 = por %p58, %p59
      %p61 = scmp.ne.s32.totalorder %s52, %s53
      %p62 = scmp.eq.s32.totalorder %s21, 0
      %p63 = por %p61, %p62
      %p64 = scmp.ne.s32.totalorder %s52, %s53
      %p65 = scmp.eq.s32.totalorder %s22, 1
      %p66 = por %p64, %p65
      %p68 = scmp.ne.s32.totalorder %s53, %s67
      %p69 = scmp.eq.s32.totalorder %s22, 0
      %p70 = por %p68, %p69
      %s72 = sadd.s32 %s71, 1
      %p75 = scmp.eq.s32.totalorder %s16, 1
      %p76 = scmp.ne.s32.totalorder %s71, %s73
      %p77 = scmp.eq.s32.totalorder %s16, 0
      %p78 = por %p76, %p77
      %p79 = scmp.ne.s32.totalorder %s71, %s73
      %p80 = scmp.eq.s32.totalorder %s21, 1
      %p81 = por %p79, %p80
      %p82 = scmp.ne.s32.totalorder %s73, %s74
      %p83 = scmp.eq.s32.totalorder %s21, 0
      %p84 = por %p82, %p83
      %p85 = scmp.ne.s32.totalorder %s73, %s74
      %p86 = scmp.eq.s32.totalorder %s22, 1
      %p87 = por %p85, %p86
      %p89 = scmp.ne.s32.totalorder %s74, %s88
      %p90 = scmp.eq.s32.totalorder %s22, 0
      %p91 = por %p89, %p90
      %s93 = sadd.s32 %s92, 1
      %p96 = scmp.eq.s32.totalorder %s16, 1
      %p97 = scmp.ne.s32.totalorder %s92, %s94
      %p98 = scmp.eq.s32.totalorder %s16, 0
      %p99 = por %p97, %p98
      %p100 = scmp.ne.s32.totalorder %s92, %s94
      %p101 = scmp.eq.s32.totalorder %s21, 1
      %p102 = por %p100, %p101
      %p103 = scmp.ne.s32.totalorder %s94, %s95
      %p104 = scmp.eq.s32.totalorder %s21, 0
      %p105 = por %p103, %p104
      %p106 = scmp.ne.s32.totalorder %s94, %s95
      %p107 = scmp.eq.s32.totalorder %s22, 1
      %p108 = por %p106, %p107
      %p110 = scmp.ne.s32.totalorder %s95, %s109
      %p111 = scmp.eq.s32.totalorder %s22, 0
      %p112 = por %p110, %p111
      %s114 = sadd.s32 %s113, 1
      %p117 = scmp.eq.s32.totalorder %s16, 1
      %p118 = scmp.ne.s32.totalorder %s113, %s115
      %p119 = scmp.eq.s32.totalorder %s16, 0
      %p120 = por %p118, %p119
      %p121 = scmp.ne.s32.totalorder %s113, %s115
      %p122 = scmp.eq.s32.totalorder %s21, 1
      %p123 = por %p121, %p122
      %p124 = scmp.ne.s32.totalorder %s115, %s116
      %p125 = scmp.eq.s32.totalorder %s21, 0
      %p126 = por %p124, %p125
      %p127 = scmp.ne.s32.totalorder %s115, %s116
      %p128 = scmp.eq.s32.totalorder %s22, 1
      %p129 = por %p127, %p128
      %p131 = scmp.ne.s32.totalorder %s116, %s130
      %p132 = scmp.eq.s32.totalorder %s22, 0
      %p133 = por %p131, %p132
      %s134 = ssub.s32 %s16, %s23
      %p135 = scmp.eq.s32.totalorder %s134, 0
      %s137 = sadd.s32 %s136, 1
      %s138 = scalar_select %p135, %s136, %s137
      %p141 = pneg %p135
      %p142 = scmp.eq.s32.totalorder %s16, 1
      %p143 = por %p141, %p142
      %p144 = scmp.ne.s32.totalorder %s136, %s139
      %p145 = scmp.eq.s32.totalorder %s16, 0
      %p146 = por %p144, %p145
      %p147 = scmp.ne.s32.totalorder %s136, %s139
      %p148 = scmp.eq.s32.totalorder %s21, 1
      %p149 = por %p147, %p148
      %p150 = scmp.ne.s32.totalorder %s139, %s140
      %p151 = scmp.eq.s32.totalorder %s21, 0
      %p152 = por %p150, %p151
      %p153 = scmp.ne.s32.totalorder %s139, %s140
      %p154 = scmp.eq.s32.totalorder %s22, 1
      %p155 = por %p153, %p154
      %p157 = scmp.ne.s32.totalorder %s140, %s156
      %p158 = scmp.eq.s32.totalorder %s22, 0
      %p159 = por %p157, %p158
      %s160 = ssub.s32 %s16, %s23
      %p161 = scmp.eq.s32.totalorder %s160, 0
      %s163 = sadd.s32 %s162, 1
      %s164 = scalar_select %p161, %s162, %s163
      %p167 = pneg %p161
      %p168 = scmp.eq.s32.totalorder %s16, 1
      %p169 = por %p167, %p168
      %p170 = scmp.ne.s32.totalorder %s162, %s165
      %p171 = scmp.eq.s32.totalorder %s16, 0
      %p172 = por %p170, %p171
      %p173 = scmp.ne.s32.totalorder %s162, %s165
      %p174 = scmp.eq.s32.totalorder %s21, 1
      %p175 = por %p173, %p174
      %p176 = scmp.ne.s32.totalorder %s165, %s166
      %p177 = scmp.eq.s32.totalorder %s21, 0
      %p178 = por %p176, %p177
      %p179 = scmp.ne.s32.totalorder %s165, %s166
      %p180 = scmp.eq.s32.totalorder %s22, 1
      %p181 = por %p179, %p180
      %p183 = scmp.ne.s32.totalorder %s166, %s182
      %p184 = scmp.eq.s32.totalorder %s22, 0
      %p185 = por %p183, %p184
      %s186 = ssub.s32 %s16, %s23
      %p187 = scmp.eq.s32.totalorder %s186, 0
      %s189 = sadd.s32 %s188, 1
      %s190 = scalar_select %p187, %s188, %s189
      %p193 = pneg %p187
      %p194 = scmp.eq.s32.totalorder %s16, 1
      %p195 = por %p193, %p194
      %p196 = scmp.ne.s32.totalorder %s188, %s191
      %p197 = scmp.eq.s32.totalorder %s16, 0
      %p198 = por %p196, %p197
      %p199 = scmp.ne.s32.totalorder %s188, %s191
      %p200 = scmp.eq.s32.totalorder %s21, 1
      %p201 = por %p199, %p200
      %p202 = scmp.ne.s32.totalorder %s191, %s192
      %p203 = scmp.eq.s32.totalorder %s21, 0
      %p204 = por %p202, %p203
      %p205 = scmp.ne.s32.totalorder %s191, %s192
      %p206 = scmp.eq.s32.totalorder %s22, 1
      %p207 = por %p205, %p206
      %p209 = scmp.ne.s32.totalorder %s192, %s208
      %p210 = scmp.eq.s32.totalorder %s22, 0
      %p211 = por %p209, %p210
      %p212 = scmp.le.s32.totalorder 1, %s16
      %p213 = scmp.lt.s32.totalorder %s16, 3
      %p214 = pnand %p212, %p213
      %p215 = pneg %p214
      // Predicated region
      $region9: #{_lambda_.11} parent=5 // pred_check
        _
      $region10: #{_lambda_.11} parent=5 // pred_check_branch
        %217 = sbr.rel (%p214) target = $region12
      $region11: #{_lambda_.11} parent=5 // pred_region
        %s218 = ssub.s32 %s16, 1
        // Predicated region
        $region13: #{_lambda_.11} parent=11 // pred_check
          %p219 = pneg %p63
        $region14: #{_lambda_.11} parent=11 // pred_check_branch
          %221 = sbr.rel (%p219) target = $region16
        $region15: #{_lambda_.11} parent=11 // pred_region
          _
        $region16: #{_lambda_.11} parent=11 // pred_fallthru
          _
        // Predicated region
        $region17: #{_lambda_.11} parent=11 // pred_check
          %p222 = pneg %p84
        $region18: #{_lambda_.11} parent=11 // pred_check_branch
          %224 = sbr.rel (%p222) target = $region20
        $region19: #{_lambda_.11} parent=11 // pred_region
          _
        $region20: #{_lambda_.11} parent=11 // pred_fallthru
          _
        // Predicated region
        $region21: #{_lambda_.11} parent=11 // pred_check
          %p225 = pneg %p105
        $region22: #{_lambda_.11} parent=11 // pred_check_branch
          %227 = sbr.rel (%p225) target = $region24
        $region23: #{_lambda_.11} parent=11 // pred_region
          _
        $region24: #{_lambda_.11} parent=11 // pred_fallthru
          _
        // Predicated region
        $region25: #{_lambda_.11} parent=11 // pred_check
          %p228 = pneg %p126
        $region26: #{_lambda_.11} parent=11 // pred_check_branch
          %230 = sbr.rel (%p228) target = $region28
        $region27: #{_lambda_.11} parent=11 // pred_region
          _
        $region28: #{_lambda_.11} parent=11 // pred_fallthru
          _
      $region12: #{_lambda_.11} parent=5 // pred_fallthru
        _
      %p231 = scmp.lt.s32.totalorder %s16, 2
      // Predicated region
      $region29: #{_lambda_.11} parent=5 // pred_check
        %p232 = pneg %p231
      $region30: #{_lambda_.11} parent=5 // pred_check_branch
        %234 = sbr.rel (%p232) target = $region32
      $region31: #{_lambda_.11} parent=5 // pred_region
        // Predicated region
        $region33: #{_lambda_.11} parent=31 // pred_check
          %p235 = pneg %p36
        $region34: #{_lambda_.11} parent=31 // pred_check_branch
          %237 = sbr.rel (%p235) target = $region36
        $region35: #{_lambda_.11} parent=31 // pred_region
          %p238 = scmp.lt.s32.totalorder %s16, 1
          %s239 = scalar_select %p238, %s16, 1
          %s240 = smul.addr %s239, 4
          %s241 = smul.addr %s240, 8
          %s242 = scalar_lea.vmem %s0, %s241
        $region36: #{_lambda_.11} parent=31 // pred_fallthru
          _
        // Predicated region
        $region37: #{_lambda_.11} parent=31 // pred_check
          %p243 = pneg %p146
        $region38: #{_lambda_.11} parent=31 // pred_check_branch
          %245 = sbr.rel (%p243) target = $region40
        $region39: #{_lambda_.11} parent=31 // pred_region
          %p246 = scmp.lt.s32.totalorder %s16, 1
          %s247 = scalar_select %p246, %s16, 1
          %s248 = smul.addr %s247, 8
          %s249 = scalar_lea.vmem %s5, %s248
        $region40: #{_lambda_.11} parent=31 // pred_fallthru
          _
        // Predicated region
        $region41: #{_lambda_.11} parent=31 // pred_check
          %p250 = pneg %p172
        $region42: #{_lambda_.11} parent=31 // pred_check_branch
          %252 = sbr.rel (%p250) target = $region44
        $region43: #{_lambda_.11} parent=31 // pred_region
          %p253 = scmp.lt.s32.totalorder %s16, 1
          %s254 = scalar_select %p253, %s16, 1
          %s255 = scalar_lea.vmem %s6, %s254
        $region44: #{_lambda_.11} parent=31 // pred_fallthru
          _
      $region32: #{_lambda_.11} parent=5 // pred_fallthru
        _
      %p256 = scmp.le.s32.totalorder 1, %s16
      %p257 = scmp.lt.s32.totalorder %s16, 3
      %p258 = pnand %p256, %p257
      %p259 = pneg %p258
      // Predicated region
      $region45: #{_lambda_.11} parent=5 // pred_check
        _
      $region46: #{_lambda_.11} parent=5 // pred_check_branch
        %261 = sbr.rel (%p258) target = $region48
      $region47: #{_lambda_.11} parent=5 // pred_region
        %s262 = ssub.s32 %s16, 1
        %p263 = scmp.lt.s32.totalorder %s21, 1
        %s264 = scalar_select %p263, %s21, 1
        %s265 = smul.addr %s264, 4
        %s266 = smul.addr %s265, 8
        %s267 = scalar_lea.vmem %s0, %s266
        %p268 = pneg %p42
        %p269 = pneg %p39
        %p270 = pneg %p63
        %p271 = pneg %p60
        %p272 = pneg %p84
        %p273 = pneg %p81
        %p274 = pneg %p105
        %p275 = pneg %p102
        %p276 = pneg %p126
        %p277 = pneg %p123
        %p278 = scmp.lt.s32.totalorder %s21, 1
        %s279 = scalar_select %p278, %s21, 1
        %s280 = smul.addr %s279, 8
        %s281 = scalar_lea.vmem %s5, %s280
        %p282 = pneg %p152
        %p283 = pneg %p149
        %p284 = scmp.lt.s32.totalorder %s21, 1
        %s285 = scalar_select %p284, %s21, 1
        %s286 = scalar_lea.vmem %s6, %s285
        %p287 = pneg %p178
        %p288 = pneg %p175
        %p289 = pneg %p204
        %p290 = pneg %p201
        %s291 = sand.u32 %s191, 1
        %s292 = scalar_lea.sflag [#allocation3], %s291
        %s293 = sand.u32 %s191, 1
        %s294 = smul.addr %s293, 32
        %s295 = scalar_lea.vmem [#allocation2], %s294
        %p296 = scmp.lt.s32.totalorder %s21, 1
        %s297 = scalar_select %p296, %s21, 1
        %s298 = smul.addr %s297, 4
        %s299 = smul.addr %s298, 8
        %s300 = scalar_lea.vmem %s0, %s299
        %p301 = scmp.lt.s32.totalorder %s21, 1
        %s302 = scalar_select %p301, %s21, 1
        %s303 = smul.addr %s302, 8
        %s304 = scalar_lea.vmem %s5, %s303
        %p305 = scmp.lt.s32.totalorder %s21, 1
        %s306 = scalar_select %p305, %s21, 1
        %s307 = scalar_lea.vmem %s6, %s306
        %v309 = vld [vmem:[%s300] sm:$0xff]
        %v310 = vld [vmem:[%s300 + $0x8] sm:$0xff]
        %v311 = vld [vmem:[%s300 + $0x10] sm:$0xff]
        %v312 = vld [vmem:[%s300 + $0x18] sm:$0xff]
        %313 = vrot.lane.b32.xlu0 %v309, 127
        %v314 = vpop.permute.xlu0 %313
        %315 = vrot.lane.b32.xlu0 %v310, 127
        %v316 = vpop.permute.xlu0 %315
        %317 = vrot.lane.b32.xlu0 %v311, 127
        %v318 = vpop.permute.xlu0 %317
        %319 = vrot.lane.b32.xlu0 %v312, 127
        %v320 = vpop.permute.xlu0 %319
        %v321 = vlaneseq
        %v322 = vand.u32 %v321, 127
        %vm323 = vcmp.lt.s32.totalorder %v322, 127
        %v324 = vsel %vm323, %v318, %v320
        %v325 = vsel %vm323, %v316, %v318
        %v326 = vsel %vm323, %v314, %v316
        %v327 = vsel %vm323, %v320, %v314
        %328 = vrot.lane.b32.xlu0 %v309, 1
        %v329 = vpop.permute.xlu0 %328
        %330 = vrot.lane.b32.xlu0 %v310, 1
        %v331 = vpop.permute.xlu0 %330
        %332 = vrot.lane.b32.xlu0 %v311, 1
        %v333 = vpop.permute.xlu0 %332
        %334 = vrot.lane.b32.xlu0 %v312, 1
        %v335 = vpop.permute.xlu0 %334
        %vm336 = vcmp.lt.s32.totalorder %v322, 1
        %v337 = vsel %vm336, %v333, %v335
        %v338 = vsel %vm336, %v331, %v333
        %v339 = vsel %vm336, %v329, %v331
        %v340 = vsel %vm336, %v335, %v329
        %v341 = vld [vmem:[%s1] sm:$0xff]
        %v342 = vld [vmem:[%s1 + $0x8] sm:$0xff]
        %v343 = vld [vmem:[%s1 + $0x10] sm:$0xff]
        %v344 = vld [vmem:[%s1 + $0x18] sm:$0xff]
        %v345 = vmul.f32 %v309, %v341
        %v346 = vmul.f32 %v310, %v342
        %v347 = vmul.f32 %v311, %v343
        %v348 = vmul.f32 %v312, %v344
        %v349 = vld [vmem:[%s2] sm:$0xff]
        %v350 = vld [vmem:[%s2 + $0x8] sm:$0xff]
        %v351 = vld [vmem:[%s2 + $0x10] sm:$0xff]
        %v352 = vld [vmem:[%s2 + $0x18] sm:$0xff]
        %v353 = vmul.f32 %v326, %v349
        %v354 = vmul.f32 %v325, %v350
        %v355 = vmul.f32 %v324, %v351
        %v356 = vmul.f32 %v327, %v352
        %v357 = vadd.f32 %v345, %v353
        %v358 = vadd.f32 %v346, %v354
        %v359 = vadd.f32 %v347, %v355
        %v360 = vadd.f32 %v348, %v356
        %v361 = vld [vmem:[%s3] sm:$0xff]
        %v362 = vld [vmem:[%s3 + $0x8] sm:$0xff]
        %v363 = vld [vmem:[%s3 + $0x10] sm:$0xff]
        %v364 = vld [vmem:[%s3 + $0x18] sm:$0xff]
        %v365 = vmul.f32 %v340, %v361
        %v366 = vmul.f32 %v339, %v362
        %v367 = vmul.f32 %v338, %v363
        %v368 = vmul.f32 %v337, %v364
        %v369 = vadd.f32 %v357, %v365
        %v370 = vadd.f32 %v358, %v366
        %v371 = vadd.f32 %v359, %v367
        %v372 = vadd.f32 %v360, %v368
        %v373 = vld [vmem:[%s304] sm:$0xff]
        %375 = vset.pattern.permute.xlu0 0
        %376 = vperm.xlu0 %375, %v373
        %v377 = vpop.permute.xlu0 %376
        %v379 = vmul.f32 %v369, %v377
        %v380 = vmul.f32 %v370, %v377
        %v381 = vmul.f32 %v371, %v377
        %v382 = vmul.f32 %v372, %v377
        %v383 = vld [vmem:[%s307] sm:$0x1]
        %v385 = vlaneseq
        %v386 = vshrl.u32 %v385, 7
        %v387 = vsub.s32 0, %v386
        %v388 = vrot.slane %v383, %v387
        %v390 = vmul.f32 %v377, %v388
        %v391 = vmul.f32 %v390, 1.25e+11
        %v392 = vld [vmem:[%s4] sm:$0xff]
        %v393 = vadd.f32 %v391, %v392
        %v394 = vpack.c.bf16 %v379, %v379
        %396 = vrot.lane.b32.xlu0 %v394, 64
        %v397 = vpop.permute.xlu0 %396
        %vm398 = vcmask 523264
        %v400 = vsel %vm398, %v394, 0
        %v403 = vsel %vm398, %v397, 0
        %405 = vmatprep.subr.bf16.mxu0 0
        %406 = vmatpush1.bf16.xpose.msra.mxu0 %v403
        %407 = vmatprep.subr.bf16.mxu0 0
        %408 = vmatpush1.bf16.xpose.msra.mxu0 0
        %409 = vmatprep.subr.bf16.mxu0 0
        %410 = vmatpush1.bf16.xpose.msra.mxu0 0
        %411 = vmatprep.subr.bf16.mxu0 0
        %412 = vmatpush1.bf16.xpose.msra.mxu0 0
        %413 = vmatprep.subr.bf16.mxu0 0
        %414 = vmatpush1.bf16.xpose.msra.mxu0 0
        %415 = vmatprep.subr.bf16.mxu0 0
        %416 = vmatpush1.bf16.xpose.msra.mxu0 0
        %417 = vmatprep.subr.bf16.mxu0 0
        %418 = vmatpush1.bf16.xpose.msra.mxu0 0
        %419 = vmatprep.subr.bf16.mxu0 0
        %420 = vmatpush1.bf16.xpose.msra.mxu0 0
        %421 = vmatprep.subr.bf16.mxu0 0
        %422 = vmatpush1.bf16.xpose.msra.mxu0 0
        %423 = vmatprep.subr.bf16.mxu0 0
        %424 = vmatpush1.bf16.xpose.msra.mxu0 0
        %425 = vmatprep.subr.bf16.mxu0 0
        %426 = vmatpush1.bf16.xpose.msra.mxu0 0
        %427 = vmatprep.subr.bf16.mxu0 0
        %428 = vmatpush1.bf16.xpose.msra.mxu0 0
        %429 = vmatprep.subr.bf16.mxu0 0
        %430 = vmatpush1.bf16.xpose.msra.mxu0 0
        %431 = vmatprep.subr.bf16.mxu0 0
        %432 = vmatpush1.bf16.xpose.msra.mxu0 0
        %433 = vmatprep.subr.bf16.mxu0 0
        %434 = vmatpush1.bf16.xpose.msra.mxu0 0
        %435 = vmatprep.subr.bf16.mxu0 0
        %436 = vmatpush1.bf16.xpose.msra.mxu0 0
        %437 = vmatprep.mubr.bf16.mxu0 0
        %438 = vmatmul.mubr.bf16.gmra.mrb[0].mxu0 %v400
        %v439 = vpop.f32.mrb[0].mxu0
        %v440 = vadd.f32 %v393, %v439
        %v441 = vpop.f32.mrb[0].mxu0
        %v442 = vpop.f32.mrb[0].mxu0
        %v443 = vpop.f32.mrb[0].mxu0
        %444 = vdwg.mxu0
        %v445 = vpack.c.bf16 %v380, %v380
        %447 = vrot.lane.b32.xlu0 %v445, 64
        %v448 = vpop.permute.xlu0 %447
        %v450 = vsel %vm398, %v445, 0
        %v453 = vsel %vm398, %v448, 0
        %455 = vmatprep.subr.bf16.mxu0 0
        %456 = vmatpush1.bf16.xpose.msra.mxu0 %v453
        %457 = vmatprep.subr.bf16.mxu0 0
        %458 = vmatpush1.bf16.xpose.msra.mxu0 0
        %459 = vmatprep.subr.bf16.mxu0 0
        %460 = vmatpush1.bf16.xpose.msra.mxu0 0
        %461 = vmatprep.subr.bf16.mxu0 0
        %462 = vmatpush1.bf16.xpose.msra.mxu0 0
        %463 = vmatprep.subr.bf16.mxu0 0
        %464 = vmatpush1.bf16.xpose.msra.mxu0 0
        %465 = vmatprep.subr.bf16.mxu0 0
        %466 = vmatpush1.bf16.xpose.msra.mxu0 0
        %467 = vmatprep.subr.bf16.mxu0 0
        %468 = vmatpush1.bf16.xpose.msra.mxu0 0
        %469 = vmatprep.subr.bf16.mxu0 0
        %470 = vmatpush1.bf16.xpose.msra.mxu0 0
        %471 = vmatprep.subr.bf16.mxu0 0
        %472 = vmatpush1.bf16.xpose.msra.mxu0 0
        %473 = vmatprep.subr.bf16.mxu0 0
        %474 = vmatpush1.bf16.xpose.msra.mxu0 0
        %475 = vmatprep.subr.bf16.mxu0 0
        %476 = vmatpush1.bf16.xpose.msra.mxu0 0
        %477 = vmatprep.subr.bf16.mxu0 0
        %478 = vmatpush1.bf16.xpose.msra.mxu0 0
        %479 = vmatprep.subr.bf16.mxu0 0
        %480 = vmatpush1.bf16.xpose.msra.mxu0 0
        %481 = vmatprep.subr.bf16.mxu0 0
        %482 = vmatpush1.bf16.xpose.msra.mxu0 0
        %483 = vmatprep.subr.bf16.mxu0 0
        %484 = vmatpush1.bf16.xpose.msra.mxu0 0
        %485 = vmatprep.subr.bf16.mxu0 0
        %486 = vmatpush1.bf16.xpose.msra.mxu0 0
        %487 = vmatprep.mubr.bf16.mxu0 0
        %488 = vmatmul.mubr.bf16.gmra.mrb[0].mxu0 %v450
        %v489 = vpop.f32.mrb[0].mxu0
        %v490 = vadd.f32 %v393, %v489
        %v491 = vpop.f32.mrb[0].mxu0
        %v492 = vpop.f32.mrb[0].mxu0
        %v493 = vpop.f32.mrb[0].mxu0
        %494 = vdwg.mxu0
        %v495 = vpack.c.bf16 %v381, %v381
        %497 = vrot.lane.b32.xlu0 %v495, 64
        %v498 = vpop.permute.xlu0 %497
        %v500 = vsel %vm398, %v495, 0
        %v503 = vsel %vm398, %v498, 0
        %505 = vmatprep.subr.bf16.mxu0 0
        %506 = vmatpush1.bf16.xpose.msra.mxu0 %v503
        %507 = vmatprep.subr.bf16.mxu0 0
        %508 = vmatpush1.bf16.xpose.msra.mxu0 0
        %509 = vmatprep.subr.bf16.mxu0 0
        %510 = vmatpush1.bf16.xpose.msra.mxu0 0
        %511 = vmatprep.subr.bf16.mxu0 0
        %512 = vmatpush1.bf16.xpose.msra.mxu0 0
        %513 = vmatprep.subr.bf16.mxu0 0
        %514 = vmatpush1.bf16.xpose.msra.mxu0 0
        %515 = vmatprep.subr.bf16.mxu0 0
        %516 = vmatpush1.bf16.xpose.msra.mxu0 0
        %517 = vmatprep.subr.bf16.mxu0 0
        %518 = vmatpush1.bf16.xpose.msra.mxu0 0
        %519 = vmatprep.subr.bf16.mxu0 0
        %520 = vmatpush1.bf16.xpose.msra.mxu0 0
        %521 = vmatprep.subr.bf16.mxu0 0
        %522 = vmatpush1.bf16.xpose.msra.mxu0 0
        %523 = vmatprep.subr.bf16.mxu0 0
        %524 = vmatpush1.bf16.xpose.msra.mxu0 0
        %525 = vmatprep.subr.bf16.mxu0 0
        %526 = vmatpush1.bf16.xpose.msra.mxu0 0
        %527 = vmatprep.subr.bf16.mxu0 0
        %528 = vmatpush1.bf16.xpose.msra.mxu0 0
        %529 = vmatprep.subr.bf16.mxu0 0
        %530 = vmatpush1.bf16.xpose.msra.mxu0 0
        %531 = vmatprep.subr.bf16.mxu0 0
        %532 = vmatpush1.bf16.xpose.msra.mxu0 0
        %533 = vmatprep.subr.bf16.mxu0 0
        %534 = vmatpush1.bf16.xpose.msra.mxu0 0
        %535 = vmatprep.subr.bf16.mxu0 0
        %536 = vmatpush1.bf16.xpose.msra.mxu0 0
        %537 = vmatprep.mubr.bf16.mxu0 0
        %538 = vmatmul.mubr.bf16.gmra.mrb[0].mxu0 %v500
        %v539 = vpop.f32.mrb[0].mxu0
        %v540 = vadd.f32 %v393, %v539
        %v541 = vpop.f32.mrb[0].mxu0
        %v542 = vpop.f32.mrb[0].mxu0
        %v543 = vpop.f32.mrb[0].mxu0
        %544 = vdwg.mxu0
        %v545 = vpack.c.bf16 %v382, %v382
        %547 = vrot.lane.b32.xlu0 %v545, 64
        %v548 = vpop.permute.xlu0 %547
        %v550 = vsel %vm398, %v545, 0
        %v553 = vsel %vm398, %v548, 0
        %555 = vmatprep.subr.bf16.mxu0 0
        %556 = vmatpush1.bf16.xpose.msra.mxu0 %v553
        %557 = vmatprep.subr.bf16.mxu0 0
        %558 = vmatpush1.bf16.xpose.msra.mxu0 0
        %559 = vmatprep.subr.bf16.mxu0 0
        %560 = vmatpush1.bf16.xpose.msra.mxu0 0
        %561 = vmatprep.subr.bf16.mxu0 0
        %562 = vmatpush1.bf16.xpose.msra.mxu0 0
        %563 = vmatprep.subr.bf16.mxu0 0
        %564 = vmatpush1.bf16.xpose.msra.mxu0 0
        %565 = vmatprep.subr.bf16.mxu0 0
        %566 = vmatpush1.bf16.xpose.msra.mxu0 0
        %567 = vmatprep.subr.bf16.mxu0 0
        %568 = vmatpush1.bf16.xpose.msra.mxu0 0
        %569 = vmatprep.subr.bf16.mxu0 0
        %570 = vmatpush1.bf16.xpose.msra.mxu0 0
        %571 = vmatprep.subr.bf16.mxu0 0
        %572 = vmatpush1.bf16.xpose.msra.mxu0 0
        %573 = vmatprep.subr.bf16.mxu0 0
        %574 = vmatpush1.bf16.xpose.msra.mxu0 0
        %575 = vmatprep.subr.bf16.mxu0 0
        %576 = vmatpush1.bf16.xpose.msra.mxu0 0
        %577 = vmatprep.subr.bf16.mxu0 0
        %578 = vmatpush1.bf16.xpose.msra.mxu0 0
        %579 = vmatprep.subr.bf16.mxu0 0
        %580 = vmatpush1.bf16.xpose.msra.mxu0 0
        %581 = vmatprep.subr.bf16.mxu0 0
        %582 = vmatpush1.bf16.xpose.msra.mxu0 0
        %583 = vmatprep.subr.bf16.mxu0 0
        %584 = vmatpush1.bf16.xpose.msra.mxu0 0
        %585 = vmatprep.subr.bf16.mxu0 0
        %586 = vmatpush1.bf16.xpose.msra.mxu0 0
        %587 = vmatprep.mubr.bf16.mxu0 0
        %588 = vmatmul.mubr.bf16.gmra.mrb[0].mxu0 %v550
        %v589 = vpop.f32.mrb[0].mxu0
        %v590 = vadd.f32 %v393, %v589
        %v591 = vpop.f32.mrb[0].mxu0
        %v592 = vpop.f32.mrb[0].mxu0
        %v593 = vpop.f32.mrb[0].mxu0
        %594 = vdwg.mxu0
        %vm595 = vcmask 64512
        %596 = vst.msk [vmem:[%s295] sm:$0xff] %vm595, %v440
        %597 = vst.msk [vmem:[%s295 + $0x8] sm:$0xff] %vm595, %v490
        %598 = vst.msk [vmem:[%s295 + $0x10] sm:$0xff] %vm595, %v540
        %599 = vst.msk [vmem:[%s295 + $0x18] sm:$0xff] %vm595, %v590
        %s600 = sand.u32 %s191, 1
        %s601 = scalar_lea.sflag [#allocation3], %s600
        %s602 = sand.u32 %s191, 1
        %s603 = smul.addr %s602, 32
        %s604 = scalar_lea.vmem [#allocation2], %s603
        // Predicated region
        $region49: #{_lambda_.11} parent=47 // pred_check
          %p605 = pneg %p201
        $region50: #{_lambda_.11} parent=47 // pred_check_branch
          %607 = sbr.rel (%p605) target = $region52
        $region51: #{_lambda_.11} parent=47 // pred_region
          %s609 = ssub.s32 512, 512
          %610 = vsyncadd %s601, %s609
          %s611 = smul.addr %s21, 4
          %s612 = smul.addr %s611, 128
          %s613 = scalar_lea.hbm %s7, %s612
          %s614 = sshll.u32 %s604, 4
          %s615 = int_to_ptr.vmem [resolvable:$true] %s614
          %620 = dma.vmem_to_hbm [thread:$0]  %s615, 512, %s613, %s601, 128, 128, 8
        $region52: #{_lambda_.11} parent=47 // pred_fallthru
          _
      $region48: #{_lambda_.11} parent=5 // pred_fallthru
        _
      %p621 = scmp.le.s32.totalorder 2, %s16
      // Predicated region
      $region53: #{_lambda_.11} parent=5 // pred_check
        %p622 = pneg %p621
      $region54: #{_lambda_.11} parent=5 // pred_check_branch
        %624 = sbr.rel (%p622) target = $region56
      $region55: #{_lambda_.11} parent=5 // pred_region
        %s625 = ssub.s32 %s16, 2
        // Predicated region
        $region57: #{_lambda_.11} parent=55 // pred_check
          %p626 = pneg %p207
        $region58: #{_lambda_.11} parent=55 // pred_check_branch
          %628 = sbr.rel (%p626) target = $region60
        $region59: #{_lambda_.11} parent=55 // pred_region
          %s629 = sand.u32 %s192, 1
          %s630 = scalar_lea.sflag [#allocation3], %s629
          %s631 = sand.u32 %s192, 1
          %s632 = smul.addr %s631, 32
          %s633 = scalar_lea.vmem [#allocation2], %s632
          %634 = dma.done %s630, 512
        $region60: #{_lambda_.11} parent=55 // pred_fallthru
          _
      $region56: #{_lambda_.11} parent=5 // pred_fallthru
        _
    $region6: #{_lambda_.11} parent=1 // loop_footer
      %s20 = sadd.s32 1, %s16
    $region7: #{_lambda_.11} parent=1 // loop_footer_branch
      %15 = sbr.rel target = $region3
    $region8: #{_lambda_.11} parent=1 // loop_exit
      _
    %635 = vsyncpa [#allocation3], 1
    %s636 = scalar_lea.sflag [#allocation3], 1
    %637 = vsyncpa %s636, 1

</llo_original>
